<compile_context>
chip_gen: v7x
topology: tpu7x:2x2x1
jax: 0.10.0
libtpu: 0.0.40
codegen_flags: <defaults>
</compile_context>

<pallas_src>
import functools

import jax
import jax.numpy as jnp
import numpy as np
from jax.experimental import pallas as pl
from jax.experimental.pallas import tpu as pltpu

C_IN = 512
C_OUT = 64
K = 3
STRIDE = 2
H_IN = 8
W_IN = 8
H_OUT = H_IN // STRIDE          # 4
W_OUT = W_IN // STRIDE          # 4
N_POS = H_OUT * W_OUT           # 16 output positions
N_TAPS = K * K                  # 9
LANES = 128


def _make_gather_matrix():
    """[N_TAPS*N_POS, H_IN*W_IN] 0/1 matrix.

    Row (t*16 + p) selects the input pixel feeding conv tap t at output
    position p; an all-zero row reproduces the conv's zero padding.
    """
    sel = np.zeros((N_TAPS * N_POS, H_IN * W_IN), np.float32)
    for kh in range(K):
        for kw in range(K):
            t = kh * K + kw
            for oh in range(H_OUT):
                for ow in range(W_OUT):
                    ih = STRIDE * oh + kh - 1        # padding = 1
                    iw = STRIDE * ow + kw - 1
                    if 0 <= ih < H_IN and 0 <= iw < W_IN:
                        sel[t * N_POS + oh * W_OUT + ow, ih * W_IN + iw] = 1.0
    return sel


def _head_kernel(x_ref, sel_ref, wtap_ref, bconv_ref, wlin_ref, blin_ref, out_ref):
    # x_ref:     (1, 64, 512) bf16  flattened-spatial feature map, one sample
    # sel_ref:   (144, 64)    bf16  constant im2col gather matrix
    # wtap_ref:  (9, 512, 64) bf16  conv weight, one [C_in, C_out] slab per tap
    # bconv_ref: (1, 64)      f32   conv bias
    # wlin_ref:  (16, 64)     f32   linear head weight, (position, channel) order
    # blin_ref:  (1, 1)       f32   linear head bias (SMEM scalar)
    # out_ref:   (1, 128)     f32   lane-dense logit slab for this sample
    x = x_ref[0]                                               # [64, 512] bf16

    # In-kernel im2col: one MXU matmul gathers all 9 taps' patches into VMEM.
    patches = jnp.dot(sel_ref[...], x,
                      preferred_element_type=jnp.float32)      # [144, 512]
    patches = patches.astype(jnp.bfloat16)                     # exact (0/1 gather)

    # conv1 as 9 accumulated tap matmuls on the MXU, f32 accumulation.
    conv = jnp.zeros((N_POS, C_OUT), jnp.float32)
    for t in range(N_TAPS):
        conv = conv + jnp.dot(patches[t * N_POS:(t + 1) * N_POS, :],
                              wtap_ref[t],
                              preferred_element_type=jnp.float32)   # [16, 64]

    conv = jnp.maximum(conv + bconv_ref[...], 0.0)             # bias + ReLU (VPU)
    # TODO(synk): nn.Dropout(p=0.5) is the identity in eval mode; training-mode
    # stochastic masking (pltpu.prng_*) is not implemented here.

    # Linear(1024, 1): single vectorized reduction (no per-sample Python loop).
    prod = conv * wlin_ref[...]                                # [16, 64]
    logit = jnp.sum(prod, axis=1, keepdims=True)               # [16, 1]  lane reduce
    logit = jnp.sum(logit, axis=0, keepdims=True)              # [1, 1]   sublane reduce
    logit = logit + blin_ref[0, 0]

    # Sigmoid + one lane-dense 128-wide store (wrapper slices column 0).
    out_ref[...] = jnp.broadcast_to(jax.nn.sigmoid(logit), (1, LANES))


def prepare_params(wconv, bconv, wlin, blin):
    """One-time reformat of PyTorch-layout weights into kernel layout."""
    # torch conv weight [O, I, kh, kw] -> per-tap [I, O], tap-major stacking.
    wtap = jnp.transpose(wconv, (2, 3, 1, 0)).reshape(N_TAPS, C_IN, C_OUT)
    wtap = wtap.astype(jnp.bfloat16)
    bconv_k = bconv.reshape(1, C_OUT).astype(jnp.float32)
    # torch flatten order of [B, 64, 4, 4] is (c, h, w) -> reorder to (h*W+w, c).
    wlin_k = jnp.transpose(wlin.reshape(C_OUT, H_OUT, W_OUT), (1, 2, 0))
    wlin_k = wlin_k.reshape(N_POS, C_OUT).astype(jnp.float32)
    blin_k = blin.reshape(1, 1).astype(jnp.float32)
    sel = jnp.asarray(_make_gather_matrix(), jnp.bfloat16)     # [144, 64]
    return sel, wtap, bconv_k, wlin_k, blin_k


@jax.jit
def res18crop_head(x_feat, sel, wtap, bconv_k, wlin_k, blin_k):
    """x_feat: [B, 512, 8, 8] NCHW backbone features (float32)."""
    B = x_feat.shape[0]
    # Layout plumbing only: NCHW -> (B, H*W, C) with channels on the lane axis,
    # cast to bf16 so the DMA'd bytes (and MXU inputs) are halved.
    x = jnp.transpose(x_feat.astype(jnp.bfloat16), (0, 2, 3, 1))
    x = x.reshape(B, H_IN * W_IN, C_IN)

    def const(shape):
        nd = len(shape)
        return pl.BlockSpec(shape, lambda b, _nd=nd: (0,) * _nd)

    out_flat = pl.pallas_call(
        _head_kernel,
        out_shape=jax.ShapeDtypeStruct((1, B * LANES), jnp.float32),
        grid=(B,),
        in_specs=[
            pl.BlockSpec((1, H_IN * W_IN, C_IN), lambda b: (b, 0, 0)),  # per sample
            const(sel.shape),                                           # resident
            const(wtap.shape),                                          # resident
            const(bconv_k.shape),
            const(wlin_k.shape),
            pl.BlockSpec(memory_space=pltpu.MemorySpace.SMEM),          # scalar bias
        ],
        out_specs=pl.BlockSpec((1, LANES), lambda b: (0, b)),           # lane-dense
        compiler_params=pltpu.CompilerParams(
            dimension_semantics=("parallel",)),
    )(x, sel, wtap, bconv_k, wlin_k, blin_k)

    # Each grid step wrote one 128-wide slab filled with its sigmoid(logit).
    return out_flat.reshape(B, LANES)[:, :1]


if __name__ == "__main__":
    key = jax.random.PRNGKey(0)
    k1, k2, k3, k4, k5 = jax.random.split(key, 5)

    B = 2
    # TODO(synk): the ResNet-18 backbone is an external module injected via
    # __init__; `x` here stands in for its [B, 512, 8, 8] feature map.
    x = jax.random.normal(k1, (B, C_IN, H_IN, W_IN), jnp.float32)
    wconv = jax.random.normal(k2, (C_OUT, C_IN, K, K), jnp.float32) * 0.02
    bconv = jax.random.normal(k3, (C_OUT,), jnp.float32) * 0.02
    wlin = jax.random.normal(k4, (1, C_OUT * H_OUT * W_OUT), jnp.float32) * 0.01
    blin = jax.random.normal(k5, (1,), jnp.float32) * 0.01

    params = prepare_params(wconv, bconv, wlin, blin)
    out = jax.block_until_ready(res18crop_head(x, *params))

    # pure-JAX f32 reference of the same (eval-mode) forward pass
    y = jax.lax.conv_general_dilated(
        x, wconv, window_strides=(STRIDE, STRIDE), padding=((1, 1), (1, 1)),
        dimension_numbers=("NCHW", "OIHW", "NCHW"))
    y = jnp.maximum(y + bconv.reshape(1, C_OUT, 1, 1), 0.0)
    ref = jax.nn.sigmoid(y.reshape(B, -1) @ wlin.T + blin)

    np.testing.assert_allclose(np.asarray(out), np.asarray(ref), atol=1e-2, rtol=1e-2)
    print("KERNEL_OK")
</pallas_src>

<mosaic_0001>
module attributes {stable_mosaic.version = 11 : i64} {
  func.func @_head_kernel(%arg0: i32, %arg1: memref<1x64x512xbf16, #tpu.memory_space<vmem>>, %arg2: memref<144x64xbf16, #tpu.memory_space<vmem>>, %arg3: memref<9x512x64xbf16, #tpu.memory_space<vmem>>, %arg4: memref<1x64xf32, #tpu.memory_space<vmem>>, %arg5: memref<16x64xf32, #tpu.memory_space<vmem>>, %arg6: memref<1x1xf32, #tpu.memory_space<smem>>, %arg7: memref<1x128xf32, #tpu.memory_space<vmem>>) attributes {dimension_semantics = [#tpu.dimension_semantics<parallel>], iteration_bounds = array<i64: 2>, scalar_prefetch = 0 : i64, scratch_operands = 0 : i64, tpu.core_type = #tpu.core_type<tc>, window_params = [{transform_indices = @transform_0, window_bounds = array<i64: 1, 64, 512>}, {pipeline_mode = #tpu.pipeline_mode<synchronous>, transform_indices = @transform_1, window_bounds = array<i64: 144, 64>}, {pipeline_mode = #tpu.pipeline_mode<synchronous>, transform_indices = @transform_2, window_bounds = array<i64: 9, 512, 64>}, {pipeline_mode = #tpu.pipeline_mode<synchronous>, transform_indices = @transform_3, window_bounds = array<i64: 1, 64>}, {pipeline_mode = #tpu.pipeline_mode<synchronous>, transform_indices = @transform_4, window_bounds = array<i64: 16, 64>}, {transform_indices = @transform_5, window_bounds = array<i64: 1, 1>}, {transform_indices = @transform_6, window_bounds = array<i64: 1, 128>}]} {
    %c0 = arith.constant 0 : index
    %c0_0 = arith.constant 0 : index
    %c0_1 = arith.constant 0 : index
    %0 = vector.load %arg1[%c0, %c0_0, %c0_1] : memref<1x64x512xbf16, #tpu.memory_space<vmem>>, vector<1x64x512xbf16>
    %1 = vector.shape_cast %0 : vector<1x64x512xbf16> to vector<64x512xbf16>
    %c0_2 = arith.constant 0 : index
    %c0_3 = arith.constant 0 : index
    %2 = vector.load %arg2[%c0_2, %c0_3] : memref<144x64xbf16, #tpu.memory_space<vmem>>, vector<144x64xbf16>
    %cst = arith.constant dense<0.000000e+00> : vector<144x512xf32>
    %3 = tpu.matmul %2, %1, %cst {dimension_numbers = #tpu.dot_dimension_numbers<[1], [0], [0], [1], [0, 0, 1, 1], [], []>} : vector<144x64xbf16>, vector<64x512xbf16>, vector<144x512xf32> -> vector<144x512xf32>
    %4 = arith.truncf %3 : vector<144x512xf32> to vector<144x512xbf16>
    %cst_4 = arith.constant 0.000000e+00 : f32
    %5 = vector.broadcast %cst_4 : f32 to vector<16x64xf32>
    %6 = vector.extract_strided_slice %4 {offsets = [0, 0], sizes = [16, 512], strides = [1, 1]} : vector<144x512xbf16> to vector<16x512xbf16>
    %c0_5 = arith.constant 0 : index
    %c0_6 = arith.constant 0 : index
    %c0_7 = arith.constant 0 : index
    %7 = vector.load %arg3[%c0_5, %c0_6, %c0_7] : memref<9x512x64xbf16, #tpu.memory_space<vmem>>, vector<1x512x64xbf16>
    %8 = vector.shape_cast %7 : vector<1x512x64xbf16> to vector<512x64xbf16>
    %cst_8 = arith.constant dense<0.000000e+00> : vector<16x64xf32>
    %9 = tpu.matmul %6, %8, %cst_8 {dimension_numbers = #tpu.dot_dimension_numbers<[1], [0], [0], [1], [0, 0, 1, 1], [], []>} : vector<16x512xbf16>, vector<512x64xbf16>, vector<16x64xf32> -> vector<16x64xf32>
    %10 = arith.addf %5, %9 : vector<16x64xf32>
    %11 = vector.extract_strided_slice %4 {offsets = [16, 0], sizes = [16, 512], strides = [1, 1]} : vector<144x512xbf16> to vector<16x512xbf16>
    %c1 = arith.constant 1 : index
    %c0_9 = arith.constant 0 : index
    %c0_10 = arith.constant 0 : index
    %12 = vector.load %arg3[%c1, %c0_9, %c0_10] : memref<9x512x64xbf16, #tpu.memory_space<vmem>>, vector<1x512x64xbf16>
    %13 = vector.shape_cast %12 : vector<1x512x64xbf16> to vector<512x64xbf16>
    %cst_11 = arith.constant dense<0.000000e+00> : vector<16x64xf32>
    %14 = tpu.matmul %11, %13, %cst_11 {dimension_numbers = #tpu.dot_dimension_numbers<[1], [0], [0], [1], [0, 0, 1, 1], [], []>} : vector<16x512xbf16>, vector<512x64xbf16>, vector<16x64xf32> -> vector<16x64xf32>
    %15 = arith.addf %10, %14 : vector<16x64xf32>
    %16 = vector.extract_strided_slice %4 {offsets = [32, 0], sizes = [16, 512], strides = [1, 1]} : vector<144x512xbf16> to vector<16x512xbf16>
    %c2 = arith.constant 2 : index
    %c0_12 = arith.constant 0 : index
    %c0_13 = arith.constant 0 : index
    %17 = vector.load %arg3[%c2, %c0_12, %c0_13] : memref<9x512x64xbf16, #tpu.memory_space<vmem>>, vector<1x512x64xbf16>
    %18 = vector.shape_cast %17 : vector<1x512x64xbf16> to vector<512x64xbf16>
    %cst_14 = arith.constant dense<0.000000e+00> : vector<16x64xf32>
    %19 = tpu.matmul %16, %18, %cst_14 {dimension_numbers = #tpu.dot_dimension_numbers<[1], [0], [0], [1], [0, 0, 1, 1], [], []>} : vector<16x512xbf16>, vector<512x64xbf16>, vector<16x64xf32> -> vector<16x64xf32>
    %20 = arith.addf %15, %19 : vector<16x64xf32>
    %21 = vector.extract_strided_slice %4 {offsets = [48, 0], sizes = [16, 512], strides = [1, 1]} : vector<144x512xbf16> to vector<16x512xbf16>
    %c3 = arith.constant 3 : index
    %c0_15 = arith.constant 0 : index
    %c0_16 = arith.constant 0 : index
    %22 = vector.load %arg3[%c3, %c0_15, %c0_16] : memref<9x512x64xbf16, #tpu.memory_space<vmem>>, vector<1x512x64xbf16>
    %23 = vector.shape_cast %22 : vector<1x512x64xbf16> to vector<512x64xbf16>
    %cst_17 = arith.constant dense<0.000000e+00> : vector<16x64xf32>
    %24 = tpu.matmul %21, %23, %cst_17 {dimension_numbers = #tpu.dot_dimension_numbers<[1], [0], [0], [1], [0, 0, 1, 1], [], []>} : vector<16x512xbf16>, vector<512x64xbf16>, vector<16x64xf32> -> vector<16x64xf32>
    %25 = arith.addf %20, %24 : vector<16x64xf32>
    %26 = vector.extract_strided_slice %4 {offsets = [64, 0], sizes = [16, 512], strides = [1, 1]} : vector<144x512xbf16> to vector<16x512xbf16>
    %c4 = arith.constant 4 : index
    %c0_18 = arith.constant 0 : index
    %c0_19 = arith.constant 0 : index
    %27 = vector.load %arg3[%c4, %c0_18, %c0_19] : memref<9x512x64xbf16, #tpu.memory_space<vmem>>, vector<1x512x64xbf16>
    %28 = vector.shape_cast %27 : vector<1x512x64xbf16> to vector<512x64xbf16>
    %cst_20 = arith.constant dense<0.000000e+00> : vector<16x64xf32>
    %29 = tpu.matmul %26, %28, %cst_20 {dimension_numbers = #tpu.dot_dimension_numbers<[1], [0], [0], [1], [0, 0, 1, 1], [], []>} : vector<16x512xbf16>, vector<512x64xbf16>, vector<16x64xf32> -> vector<16x64xf32>
    %30 = arith.addf %25, %29 : vector<16x64xf32>
    %31 = vector.extract_strided_slice %4 {offsets = [80, 0], sizes = [16, 512], strides = [1, 1]} : vector<144x512xbf16> to vector<16x512xbf16>
    %c5 = arith.constant 5 : index
    %c0_21 = arith.constant 0 : index
    %c0_22 = arith.constant 0 : index
    %32 = vector.load %arg3[%c5, %c0_21, %c0_22] : memref<9x512x64xbf16, #tpu.memory_space<vmem>>, vector<1x512x64xbf16>
    %33 = vector.shape_cast %32 : vector<1x512x64xbf16> to vector<512x64xbf16>
    %cst_23 = arith.constant dense<0.000000e+00> : vector<16x64xf32>
    %34 = tpu.matmul %31, %33, %cst_23 {dimension_numbers = #tpu.dot_dimension_numbers<[1], [0], [0], [1], [0, 0, 1, 1], [], []>} : vector<16x512xbf16>, vector<512x64xbf16>, vector<16x64xf32> -> vector<16x64xf32>
    %35 = arith.addf %30, %34 : vector<16x64xf32>
    %36 = vector.extract_strided_slice %4 {offsets = [96, 0], sizes = [16, 512], strides = [1, 1]} : vector<144x512xbf16> to vector<16x512xbf16>
    %c6 = arith.constant 6 : index
    %c0_24 = arith.constant 0 : index
    %c0_25 = arith.constant 0 : index
    %37 = vector.load %arg3[%c6, %c0_24, %c0_25] : memref<9x512x64xbf16, #tpu.memory_space<vmem>>, vector<1x512x64xbf16>
    %38 = vector.shape_cast %37 : vector<1x512x64xbf16> to vector<512x64xbf16>
    %cst_26 = arith.constant dense<0.000000e+00> : vector<16x64xf32>
    %39 = tpu.matmul %36, %38, %cst_26 {dimension_numbers = #tpu.dot_dimension_numbers<[1], [0], [0], [1], [0, 0, 1, 1], [], []>} : vector<16x512xbf16>, vector<512x64xbf16>, vector<16x64xf32> -> vector<16x64xf32>
    %40 = arith.addf %35, %39 : vector<16x64xf32>
    %41 = vector.extract_strided_slice %4 {offsets = [112, 0], sizes = [16, 512], strides = [1, 1]} : vector<144x512xbf16> to vector<16x512xbf16>
    %c7 = arith.constant 7 : index
    %c0_27 = arith.constant 0 : index
    %c0_28 = arith.constant 0 : index
    %42 = vector.load %arg3[%c7, %c0_27, %c0_28] : memref<9x512x64xbf16, #tpu.memory_space<vmem>>, vector<1x512x64xbf16>
    %43 = vector.shape_cast %42 : vector<1x512x64xbf16> to vector<512x64xbf16>
    %cst_29 = arith.constant dense<0.000000e+00> : vector<16x64xf32>
    %44 = tpu.matmul %41, %43, %cst_29 {dimension_numbers = #tpu.dot_dimension_numbers<[1], [0], [0], [1], [0, 0, 1, 1], [], []>} : vector<16x512xbf16>, vector<512x64xbf16>, vector<16x64xf32> -> vector<16x64xf32>
    %45 = arith.addf %40, %44 : vector<16x64xf32>
    %46 = vector.extract_strided_slice %4 {offsets = [128, 0], sizes = [16, 512], strides = [1, 1]} : vector<144x512xbf16> to vector<16x512xbf16>
    %c8 = arith.constant 8 : index
    %c0_30 = arith.constant 0 : index
    %c0_31 = arith.constant 0 : index
    %47 = vector.load %arg3[%c8, %c0_30, %c0_31] : memref<9x512x64xbf16, #tpu.memory_space<vmem>>, vector<1x512x64xbf16>
    %48 = vector.shape_cast %47 : vector<1x512x64xbf16> to vector<512x64xbf16>
    %cst_32 = arith.constant dense<0.000000e+00> : vector<16x64xf32>
    %49 = tpu.matmul %46, %48, %cst_32 {dimension_numbers = #tpu.dot_dimension_numbers<[1], [0], [0], [1], [0, 0, 1, 1], [], []>} : vector<16x512xbf16>, vector<512x64xbf16>, vector<16x64xf32> -> vector<16x64xf32>
    %50 = arith.addf %45, %49 : vector<16x64xf32>
    %c0_33 = arith.constant 0 : index
    %c0_34 = arith.constant 0 : index
    %51 = vector.load %arg4[%c0_33, %c0_34] : memref<1x64xf32, #tpu.memory_space<vmem>>, vector<1x64xf32>
    %52 = vector.broadcast %51 : vector<1x64xf32> to vector<16x64xf32>
    %53 = arith.addf %50, %52 : vector<16x64xf32>
    %cst_35 = arith.constant 0.000000e+00 : f32
    %54 = vector.broadcast %cst_35 : f32 to vector<16x64xf32>
    %55 = arith.maximumf %53, %54 : vector<16x64xf32>
    %c0_36 = arith.constant 0 : index
    %c0_37 = arith.constant 0 : index
    %56 = vector.load %arg5[%c0_36, %c0_37] : memref<16x64xf32, #tpu.memory_space<vmem>>, vector<16x64xf32>
    %57 = arith.mulf %55, %56 : vector<16x64xf32>
    %cst_38 = arith.constant dense<0.000000e+00> : vector<16xf32>
    %58 = vector.multi_reduction <add>, %57, %cst_38 [1] : vector<16x64xf32> to vector<16xf32>
    %59 = vector.shape_cast %58 : vector<16xf32> to vector<16x1xf32>
    %cst_39 = arith.constant dense<0.000000e+00> : vector<1xf32>
    %60 = vector.multi_reduction <add>, %59, %cst_39 [0] : vector<16x1xf32> to vector<1xf32>
    %61 = vector.shape_cast %60 : vector<1xf32> to vector<1x1xf32>
    %c0_40 = arith.constant 0 : index
    %c0_41 = arith.constant 0 : index
    %62 = memref.load %arg6[%c0_40, %c0_41] : memref<1x1xf32, #tpu.memory_space<smem>>
    %63 = vector.broadcast %62 : f32 to vector<1x1xf32>
    %64 = arith.addf %61, %63 : vector<1x1xf32>
    %65 = arith.negf %64 : vector<1x1xf32>
    %66 = math.exp %65 : vector<1x1xf32>
    %cst_42 = arith.constant 1.000000e+00 : f32
    %67 = vector.broadcast %cst_42 : f32 to vector<1x1xf32>
    %68 = arith.addf %67, %66 : vector<1x1xf32>
    %69 = arith.divf %67, %68 : vector<1x1xf32>
    %70 = vector.shape_cast %69 : vector<1x1xf32> to vector<1x1xf32>
    %71 = vector.broadcast %70 : vector<1x1xf32> to vector<1x128xf32>
    %c0_43 = arith.constant 0 : index
    %c0_44 = arith.constant 0 : index
    %72 = vector.load %arg7[%c0_43, %c0_44] : memref<1x128xf32, #tpu.memory_space<vmem>>, vector<1x128xf32>
    tpu.vector_store %arg7[%c0_43, %c0_44], %71 {strides = array<i32>} : memref<1x128xf32, #tpu.memory_space<vmem>>, vector<1x128xf32>,
    return
  }
  func.func @transform_0(%arg0: i32) -> (i32, i32, i32) {
    %c0_i32 = arith.constant 0 : i32
    %c0_i32_0 = arith.constant 0 : i32
    %c0_i32_1 = arith.constant 0 : i32
    return %arg0, %c0_i32, %c0_i32_0 : i32, i32, i32
  }
  func.func @transform_1(%arg0: i32) -> (i32, i32) {
    %c0_i32 = arith.constant 0 : i32
    %c0_i32_0 = arith.constant 0 : i32
    %c0_i32_1 = arith.constant 0 : i32
    return %c0_i32, %c0_i32_0 : i32, i32
  }
  func.func @transform_2(%arg0: i32) -> (i32, i32, i32) {
    %c0_i32 = arith.constant 0 : i32
    %c0_i32_0 = arith.constant 0 : i32
    %c0_i32_1 = arith.constant 0 : i32
    %c0_i32_2 = arith.constant 0 : i32
    return %c0_i32, %c0_i32_0, %c0_i32_1 : i32, i32, i32
  }
  func.func @transform_3(%arg0: i32) -> (i32, i32) {
    %c0_i32 = arith.constant 0 : i32
    %c0_i32_0 = arith.constant 0 : i32
    %c0_i32_1 = arith.constant 0 : i32
    return %c0_i32, %c0_i32_0 : i32, i32
  }
  func.func @transform_4(%arg0: i32) -> (i32, i32) {
    %c0_i32 = arith.constant 0 : i32
    %c0_i32_0 = arith.constant 0 : i32
    %c0_i32_1 = arith.constant 0 : i32
    return %c0_i32, %c0_i32_0 : i32, i32
  }
  func.func @transform_5(%arg0: i32) -> (i32, i32) {
    %c0_i32 = arith.constant 0 : i32
    %c0_i32_0 = arith.constant 0 : i32
    %c0_i32_1 = arith.constant 0 : i32
    return %c0_i32, %c0_i32_0 : i32, i32
  }
  func.func @transform_6(%arg0: i32) -> (i32, i32) {
    %c0_i32 = arith.constant 0 : i32
    %c0_i32_0 = arith.constant 0 : i32
    return %c0_i32, %arg0 : i32, i32
  }
}

</mosaic_0001>

<llo_original>
// kernel: res18crop_head.1
$region0: #{res18crop_head.1}
  #allocation0 [shape = 'u32[]', space=smem, size = 0x4, offset = 0x4, fixed_abs, tag = 'smem constant byte address 0x4 - core index']
  #allocation1 [shape = 'u32[144,128]{1,0:T(1,128)}', space=vmem, size = 0x12000, scoped, tag = 'internal scratch']
  #allocation2 [shape = 'f32[1,1]{1,0:T(1,128)S(6)}', space=smem, size = 0x200, scoped, tag = 'scoped memory for res18crop_head.1']
  %s0 = inlined_call_operand.vmem [shape: bf16[2,64,512], index: 0, kind: input, shape index: {}]
  %s1 = inlined_call_operand.vmem [shape: bf16[144,64], index: 1, kind: input, shape index: {}]
  %s2 = inlined_call_operand.vmem [shape: bf16[9,512,64], index: 2, kind: input, shape index: {}]
  %s3 = inlined_call_operand.vmem [shape: f32[1,64], index: 3, kind: input, shape index: {}]
  %s4 = inlined_call_operand.vmem [shape: f32[16,64], index: 4, kind: input, shape index: {}]
  %s5 = inlined_call_operand.<no memory space> [shape: f32[1,1], index: 5, kind: input, shape index: {}]
  %s6 = inlined_call_operand.vmem [shape: f32[1,256], index: 6, kind: output, shape index: {}]
  %s7 = sld [smem:[#allocation0]]
  $region57: #{res18crop_head.1} parent=0
    _
  %s9 = ssub.s32 1, %s7
  %s10 = scalar_select 0, %s9, %s7
  %11 = sst [smem:[#allocation2]] %s5
  loop: start=0, step=1, limit=4
  $region2: #{res18crop_head.1} parent=0 // loop_pre_header
    _
  $region3: #{res18crop_head.1} parent=0 // loop_header
    %s13 = sphi 0, %s17
    %p14 = scmp.ge.s32.totalorder %s13, 4
    %s23 = sphi 0, %s25
    %s26 = sphi 0, %s23
    %s27 = sphi 0, %s26
    %s43 = sphi 0, %s27
    %s47 = sphi 0, %s47
    %s49 = sphi 0, %s47
    %s50 = sphi 0, %s49
    %s64 = sphi 0, %s50
    %s68 = sphi 0, %s68
    %s70 = sphi 0, %s68
    %s71 = sphi 0, %s70
    %s85 = sphi 0, %s71
    %s89 = sphi 0, %s89
    %s91 = sphi 0, %s89
    %s92 = sphi 0, %s91
    %s106 = sphi 0, %s92
    %s110 = sphi 0, %s110
    %s112 = sphi 0, %s110
    %s113 = sphi 0, %s112
    %s127 = sphi 0, %s113
    %s131 = sphi 0, %s131
    %s133 = sphi 0, %s131
    %s134 = sphi 0, %s133
    %s148 = sphi 0, %s134
    %s154 = sphi 0, %s156
    %s157 = sphi 0, %s154
    %s158 = sphi 0, %s157
    %s174 = sphi 0, %s158
  $region4: #{res18crop_head.1} parent=0 // loop_header_branch
    %16 = sbr.rel (%p14) target = $region8
  $region5: #{res18crop_head.1} parent=0 // loop_body
    %s18 = ssub.s32 %s13, 1
    %s19 = ssub.s32 %s13, 2
    %s20 = sadd.s32 %s13, 1
    %s21 = ssub.s32 %s13, %s20
    %p22 = scmp.eq.s32.totalorder %s21, 0
    %s24 = sadd.s32 %s23, 1
    %s25 = scalar_select %p22, %s23, %s24
    %p28 = pneg %p22
    %p29 = scmp.eq.s32.totalorder %s13, 1
    %p30 = por %p28, %p29
    %p31 = scmp.ne.s32.totalorder %s23, %s26
    %p32 = scmp.eq.s32.totalorder %s13, 0
    %p33 = por %p31, %p32
    %p34 = scmp.ne.s32.totalorder %s23, %s26
    %p35 = scmp.eq.s32.totalorder %s18, 1
    %p36 = por %p34, %p35
    %p37 = scmp.ne.s32.totalorder %s26, %s27
    %p38 = scmp.eq.s32.totalorder %s18, 0
    %p39 = por %p37, %p38
    %p40 = scmp.ne.s32.totalorder %s26, %s27
    %p41 = scmp.eq.s32.totalorder %s19, 1
    %p42 = por %p40, %p41
    %p44 = scmp.ne.s32.totalorder %s27, %s43
    %p45 = scmp.eq.s32.totalorder %s19, 0
    %p46 = por %p44, %p45
    %s48 = sadd.s32 %s47, 1
    %p51 = scmp.eq.s32.totalorder %s13, 1
    %p52 = scmp.ne.s32.totalorder %s47, %s49
    %p53 = scmp.eq.s32.totalorder %s13, 0
    %p54 = por %p52, %p53
    %p55 = scmp.ne.s32.totalorder %s47, %s49
    %p56 = scmp.eq.s32.totalorder %s18, 1
    %p57 = por %p55, %p56
    %p58 = scmp.ne.s32.totalorder %s49, %s50
    %p59 = scmp.eq.s32.totalorder %s18, 0
    %p60 = por %p58, %p59
    %p61 = scmp.ne.s32.totalorder %s49, %s50
    %p62 = scmp.eq.s32.totalorder %s19, 1
    %p63 = por %p61, %p62
    %p65 = scmp.ne.s32.totalorder %s50, %s64
    %p66 = scmp.eq.s32.totalorder %s19, 0
    %p67 = por %p65, %p66
    %s69 = sadd.s32 %s68, 1
    %p72 = scmp.eq.s32.totalorder %s13, 1
    %p73 = scmp.ne.s32.totalorder %s68, %s70
    %p74 = scmp.eq.s32.totalorder %s13, 0
    %p75 = por %p73, %p74
    %p76 = scmp.ne.s32.totalorder %s68, %s70
    %p77 = scmp.eq.s32.totalorder %s18, 1
    %p78 = por %p76, %p77
    %p79 = scmp.ne.s32.totalorder %s70, %s71
    %p80 = scmp.eq.s32.totalorder %s18, 0
    %p81 = por %p79, %p80
    %p82 = scmp.ne.s32.totalorder %s70, %s71
    %p83 = scmp.eq.s32.totalorder %s19, 1
    %p84 = por %p82, %p83
    %p86 = scmp.ne.s32.totalorder %s71, %s85
    %p87 = scmp.eq.s32.totalorder %s19, 0
    %p88 = por %p86, %p87
    %s90 = sadd.s32 %s89, 1
    %p93 = scmp.eq.s32.totalorder %s13, 1
    %p94 = scmp.ne.s32.totalorder %s89, %s91
    %p95 = scmp.eq.s32.totalorder %s13, 0
    %p96 = por %p94, %p95
    %p97 = scmp.ne.s32.totalorder %s89, %s91
    %p98 = scmp.eq.s32.totalorder %s18, 1
    %p99 = por %p97, %p98
    %p100 = scmp.ne.s32.totalorder %s91, %s92
    %p101 = scmp.eq.s32.totalorder %s18, 0
    %p102 = por %p100, %p101
    %p103 = scmp.ne.s32.totalorder %s91, %s92
    %p104 = scmp.eq.s32.totalorder %s19, 1
    %p105 = por %p103, %p104
    %p107 = scmp.ne.s32.totalorder %s92, %s106
    %p108 = scmp.eq.s32.totalorder %s19, 0
    %p109 = por %p107, %p108
    %s111 = sadd.s32 %s110, 1
    %p114 = scmp.eq.s32.totalorder %s13, 1
    %p115 = scmp.ne.s32.totalorder %s110, %s112
    %p116 = scmp.eq.s32.totalorder %s13, 0
    %p117 = por %p115, %p116
    %p118 = scmp.ne.s32.totalorder %s110, %s112
    %p119 = scmp.eq.s32.totalorder %s18, 1
    %p120 = por %p118, %p119
    %p121 = scmp.ne.s32.totalorder %s112, %s113
    %p122 = scmp.eq.s32.totalorder %s18, 0
    %p123 = por %p121, %p122
    %p124 = scmp.ne.s32.totalorder %s112, %s113
    %p125 = scmp.eq.s32.totalorder %s19, 1
    %p126 = por %p124, %p125
    %p128 = scmp.ne.s32.totalorder %s113, %s127
    %p129 = scmp.eq.s32.totalorder %s19, 0
    %p130 = por %p128, %p129
    %s132 = sadd.s32 %s131, 1
    %p135 = scmp.eq.s32.totalorder %s13, 1
    %p136 = scmp.ne.s32.totalorder %s131, %s133
    %p137 = scmp.eq.s32.totalorder %s13, 0
    %p138 = por %p136, %p137
    %p139 = scmp.ne.s32.totalorder %s131, %s133
    %p140 = scmp.eq.s32.totalorder %s18, 1
    %p141 = por %p139, %p140
    %p142 = scmp.ne.s32.totalorder %s133, %s134
    %p143 = scmp.eq.s32.totalorder %s18, 0
    %p144 = por %p142, %p143
    %p145 = scmp.ne.s32.totalorder %s133, %s134
    %p146 = scmp.eq.s32.totalorder %s19, 1
    %p147 = por %p145, %p146
    %p149 = scmp.ne.s32.totalorder %s134, %s148
    %p150 = scmp.eq.s32.totalorder %s19, 0
    %p151 = por %p149, %p150
    %s152 = ssub.s32 %s13, %s20
    %p153 = scmp.eq.s32.totalorder %s152, 0
    %s155 = sadd.s32 %s154, 1
    %s156 = scalar_select %p153, %s154, %s155
    %p159 = pneg %p153
    %p160 = scmp.eq.s32.totalorder %s13, 1
    %p161 = por %p159, %p160
    %p162 = scmp.ne.s32.totalorder %s154, %s157
    %p163 = scmp.eq.s32.totalorder %s13, 0
    %p164 = por %p162, %p163
    %p165 = scmp.ne.s32.totalorder %s154, %s157
    %p166 = scmp.eq.s32.totalorder %s18, 1
    %p167 = por %p165, %p166
    %p168 = scmp.ne.s32.totalorder %s157, %s158
    %p169 = scmp.eq.s32.totalorder %s18, 0
    %p170 = por %p168, %p169
    %p171 = scmp.ne.s32.totalorder %s157, %s158
    %p172 = scmp.eq.s32.totalorder %s19, 1
    %p173 = por %p171, %p172
    %p175 = scmp.ne.s32.totalorder %s158, %s174
    %p176 = scmp.eq.s32.totalorder %s19, 0
    %p177 = por %p175, %p176
    %p178 = scmp.le.s32.totalorder 1, %s13
    %p179 = scmp.lt.s32.totalorder %s13, 3
    %p180 = pnand %p178, %p179
    %p181 = pneg %p180
    // Predicated region
    $region9: #{res18crop_head.1} parent=5 // pred_check
      _
    $region10: #{res18crop_head.1} parent=5 // pred_check_branch
      %183 = sbr.rel (%p180) target = $region12
    $region11: #{res18crop_head.1} parent=5 // pred_region
      %s184 = ssub.s32 %s13, 1
      // Predicated region
      $region13: #{res18crop_head.1} parent=11 // pred_check
        %p185 = pneg %p60
      $region14: #{res18crop_head.1} parent=11 // pred_check_branch
        %187 = sbr.rel (%p185) target = $region16
      $region15: #{res18crop_head.1} parent=11 // pred_region
        _
      $region16: #{res18crop_head.1} parent=11 // pred_fallthru
        _
      // Predicated region
      $region17: #{res18crop_head.1} parent=11 // pred_check
        %p188 = pneg %p81
      $region18: #{res18crop_head.1} parent=11 // pred_check_branch
        %190 = sbr.rel (%p188) target = $region20
      $region19: #{res18crop_head.1} parent=11 // pred_region
        _
      $region20: #{res18crop_head.1} parent=11 // pred_fallthru
        _
      // Predicated region
      $region21: #{res18crop_head.1} parent=11 // pred_check
        %p191 = pneg %p102
      $region22: #{res18crop_head.1} parent=11 // pred_check_branch
        %193 = sbr.rel (%p191) target = $region24
      $region23: #{res18crop_head.1} parent=11 // pred_region
        _
      $region24: #{res18crop_head.1} parent=11 // pred_fallthru
        _
      // Predicated region
      $region25: #{res18crop_head.1} parent=11 // pred_check
        %p194 = pneg %p123
      $region26: #{res18crop_head.1} parent=11 // pred_check_branch
        %196 = sbr.rel (%p194) target = $region28
      $region27: #{res18crop_head.1} parent=11 // pred_region
        _
      $region28: #{res18crop_head.1} parent=11 // pred_fallthru
        _
      // Predicated region
      $region29: #{res18crop_head.1} parent=11 // pred_check
        %p197 = pneg %p144
      $region30: #{res18crop_head.1} parent=11 // pred_check_branch
        %199 = sbr.rel (%p197) target = $region32
      $region31: #{res18crop_head.1} parent=11 // pred_region
        _
      $region32: #{res18crop_head.1} parent=11 // pred_fallthru
        _
    $region12: #{res18crop_head.1} parent=5 // pred_fallthru
      _
    %p200 = scmp.lt.s32.totalorder %s13, 2
    // Predicated region
    $region33: #{res18crop_head.1} parent=5 // pred_check
      %p201 = pneg %p200
    $region34: #{res18crop_head.1} parent=5 // pred_check_branch
      %203 = sbr.rel (%p201) target = $region36
    $region35: #{res18crop_head.1} parent=5 // pred_region
      // Predicated region
      $region37: #{res18crop_head.1} parent=35 // pred_check
        %p204 = pneg %p33
      $region38: #{res18crop_head.1} parent=35 // pred_check_branch
        %206 = sbr.rel (%p204) target = $region40
      $region39: #{res18crop_head.1} parent=35 // pred_region
        %p207 = scmp.lt.s32.totalorder %s13, 1
        %s208 = scalar_select %p207, %s13, 1
        %s209 = smul.addr %s208, 32
        %s210 = smul.addr %s209, 4
        %s211 = scalar_lea.vmem %s0, %s210
      $region40: #{res18crop_head.1} parent=35 // pred_fallthru
        _
    $region36: #{res18crop_head.1} parent=5 // pred_fallthru
      _
    %p212 = scmp.le.s32.totalorder 1, %s13
    %p213 = scmp.lt.s32.totalorder %s13, 3
    %p214 = pnand %p212, %p213
    %p215 = pneg %p214
    // Predicated region
    $region41: #{res18crop_head.1} parent=5 // pred_check
      _
    $region42: #{res18crop_head.1} parent=5 // pred_check_branch
      %217 = sbr.rel (%p214) target = $region44
    $region43: #{res18crop_head.1} parent=5 // pred_region
      %s218 = ssub.s32 %s13, 1
      %p219 = scmp.lt.s32.totalorder %s18, 1
      %s220 = scalar_select %p219, %s18, 1
      %s221 = smul.addr %s220, 32
      %s222 = smul.addr %s221, 4
      %s223 = scalar_lea.vmem %s0, %s222
      %p224 = pneg %p39
      %p225 = pneg %p36
      %p226 = pneg %p60
      %p227 = pneg %p57
      %p228 = pneg %p81
      %p229 = pneg %p78
      %p230 = pneg %p102
      %p231 = pneg %p99
      %p232 = pneg %p123
      %p233 = pneg %p120
      %p234 = pneg %p144
      %p235 = pneg %p141
      %p236 = pneg %p170
      %p237 = pneg %p167
      %p238 = scmp.lt.s32.totalorder %s18, 1
      %s239 = scalar_select %p238, %s18, 1
      %s240 = scalar_lea.vmem %s6, %s239
      %p241 = scmp.lt.s32.totalorder %s18, 1
      %s242 = scalar_select %p241, %s18, 1
      %s243 = smul.addr %s242, 32
      %s244 = smul.addr %s243, 4
      %s245 = scalar_lea.vmem %s0, %s244
      %p246 = scmp.lt.s32.totalorder %s18, 1
      %s247 = scalar_select %p246, %s18, 1
      %s248 = scalar_lea.vmem %s6, %s247
      %v250 = vld [vmem:[%s245] sm:$0xff]
      %v251 = vld [vmem:[%s245 + $0x8] sm:$0xff]
      %v252 = vld [vmem:[%s245 + $0x10] sm:$0xff]
      %v253 = vld [vmem:[%s245 + $0x18] sm:$0xff]
      %v254 = vld [vmem:[%s245 + $0x20] sm:$0xff]
      %v255 = vld [vmem:[%s245 + $0x28] sm:$0xff]
      %v256 = vld [vmem:[%s245 + $0x30] sm:$0xff]
      %v257 = vld [vmem:[%s245 + $0x38] sm:$0xff]
      %v258 = vld [vmem:[%s245 + $0x40] sm:$0xff]
      %v259 = vld [vmem:[%s245 + $0x48] sm:$0xff]
      %v260 = vld [vmem:[%s245 + $0x50] sm:$0xff]
      %v261 = vld [vmem:[%s245 + $0x58] sm:$0xff]
      %v262 = vld [vmem:[%s245 + $0x60] sm:$0xff]
      %v263 = vld [vmem:[%s245 + $0x68] sm:$0xff]
      %v264 = vld [vmem:[%s245 + $0x70] sm:$0xff]
      %v265 = vld [vmem:[%s245 + $0x78] sm:$0xff]
      %v266 = vld [vmem:[%s1] sm:$0xf]
      %v267 = vld [vmem:[%s1 + $0x4] sm:$0xf]
      %v268 = vld [vmem:[%s1 + $0x8] sm:$0xf]
      %v269 = vld [vmem:[%s1 + $0xc] sm:$0xf]
      %v270 = vld [vmem:[%s1 + $0x10] sm:$0xf]
      %v271 = vld [vmem:[%s1 + $0x14] sm:$0xf]
      %v272 = vld [vmem:[%s1 + $0x18] sm:$0xf]
      %v273 = vld [vmem:[%s1 + $0x1c] sm:$0xf]
      %v274 = vld [vmem:[%s1 + $0x20] sm:$0xf]
      %v275 = vld [vmem:[%s1 + $0x24] sm:$0xf]
      %v276 = vld [vmem:[%s1 + $0x28] sm:$0xf]
      %v277 = vld [vmem:[%s1 + $0x2c] sm:$0xf]
      %v278 = vld [vmem:[%s1 + $0x30] sm:$0xf]
      %v279 = vld [vmem:[%s1 + $0x34] sm:$0xf]
      %v280 = vld [vmem:[%s1 + $0x38] sm:$0xf]
      %v281 = vld [vmem:[%s1 + $0x3c] sm:$0xf]
      %v282 = vld [vmem:[%s1 + $0x40] sm:$0xf]
      %v283 = vld [vmem:[%s1 + $0x44] sm:$0xf]
      %v302 = vunpack.c.l.b16 %v266
      %v303 = vunpack.c.l.b16 %v267
      %v304 = vunpack.c.l.b16 %v268
      %v305 = vunpack.c.l.b16 %v269
      %v306 = vunpack.c.l.b16 %v270
      %v307 = vunpack.c.l.b16 %v271
      %v308 = vunpack.c.l.b16 %v272
      %v309 = vunpack.c.l.b16 %v273
      %v310 = vunpack.c.l.b16 %v274
      %v311 = vunpack.c.l.b16 %v275
      %v312 = vunpack.c.l.b16 %v276
      %v313 = vunpack.c.l.b16 %v277
      %v314 = vunpack.c.l.b16 %v278
      %v315 = vunpack.c.l.b16 %v279
      %v316 = vunpack.c.l.b16 %v280
      %v317 = vunpack.c.l.b16 %v281
      %v318 = vunpack.c.l.b16 %v282
      %v319 = vunpack.c.l.b16 %v283
      %v320 = vpack.c.b16 %v303, %v302
      %v321 = vpack.c.b16 %v305, %v304
      %v322 = vpack.c.b16 %v307, %v306
      %v323 = vpack.c.b16 %v309, %v308
      %v324 = vpack.c.b16 %v311, %v310
      %v325 = vpack.c.b16 %v313, %v312
      %v326 = vpack.c.b16 %v315, %v314
      %v327 = vpack.c.b16 %v317, %v316
      %v328 = vpack.c.b16 %v319, %v318
      %v345 = vunpack.c.l.b16 %v250
      %v346 = vunpack.c.h.b16 %v250
      %v347 = vunpack.c.l.b16 %v251
      %v348 = vunpack.c.h.b16 %v251
      %v349 = vunpack.c.l.b16 %v252
      %v350 = vunpack.c.h.b16 %v252
      %v351 = vunpack.c.l.b16 %v253
      %v352 = vunpack.c.h.b16 %v253
      %v353 = vunpack.c.l.b16 %v254
      %v354 = vunpack.c.h.b16 %v254
      %v355 = vunpack.c.l.b16 %v255
      %v356 = vunpack.c.h.b16 %v255
      %v357 = vunpack.c.l.b16 %v256
      %v358 = vunpack.c.h.b16 %v256
      %v359 = vunpack.c.l.b16 %v257
      %v360 = vunpack.c.h.b16 %v257
      %v361 = vunpack.c.l.b16 %v258
      %v362 = vunpack.c.h.b16 %v258
      %v363 = vunpack.c.l.b16 %v259
      %v364 = vunpack.c.h.b16 %v259
      %v365 = vunpack.c.l.b16 %v260
      %v366 = vunpack.c.h.b16 %v260
      %v367 = vunpack.c.l.b16 %v261
      %v368 = vunpack.c.h.b16 %v261
      %v369 = vunpack.c.l.b16 %v262
      %v370 = vunpack.c.h.b16 %v262
      %v371 = vunpack.c.l.b16 %v263
      %v372 = vunpack.c.h.b16 %v263
      %v373 = vunpack.c.l.b16 %v264
      %v374 = vunpack.c.h.b16 %v264
      %v375 = vunpack.c.l.b16 %v265
      %v376 = vunpack.c.h.b16 %v265
      %v377 = vpack.c.b16 %v349, %v345
      %v378 = vpack.c.b16 %v350, %v346
      %v379 = vpack.c.b16 %v351, %v347
      %v380 = vpack.c.b16 %v352, %v348
      %v381 = vpack.c.b16 %v357, %v353
      %v382 = vpack.c.b16 %v358, %v354
      %v383 = vpack.c.b16 %v359, %v355
      %v384 = vpack.c.b16 %v360, %v356
      %v385 = vpack.c.b16 %v365, %v361
      %v386 = vpack.c.b16 %v366, %v362
      %v387 = vpack.c.b16 %v367, %v363
      %v388 = vpack.c.b16 %v368, %v364
      %v389 = vpack.c.b16 %v373, %v369
      %v390 = vpack.c.b16 %v374, %v370
      %v391 = vpack.c.b16 %v375, %v371
      %v392 = vpack.c.b16 %v376, %v372
      %vm409 = vcmask 523264
      %v411 = vsel %vm409, %v320, 0
      %v414 = vsel %vm409, %v321, 0
      %v417 = vsel %vm409, %v322, 0
      %v420 = vsel %vm409, %v323, 0
      %v423 = vsel %vm409, %v324, 0
      %v426 = vsel %vm409, %v325, 0
      %v429 = vsel %vm409, %v326, 0
      %v432 = vsel %vm409, %v327, 0
      %v435 = vsel %vm409, %v328, 0
      %437 = vmatprep.subr.bf16.mxu0 %v378
      %438 = vmatpush1.bf16.msra.mxu0 %v377
      %439 = vmatprep.subr.bf16.mxu0 %v382
      %440 = vmatpush1.bf16.msra.mxu0 %v381
      %441 = vmatprep.subr.bf16.mxu0 %v386
      %442 = vmatpush1.bf16.msra.mxu0 %v385
      %443 = vmatprep.subr.bf16.mxu0 %v390
      %444 = vmatpush1.bf16.msra.mxu0 %v389
      %445 = vmatprep.subr.bf16.mxu0 0
      %446 = vmatpush1.bf16.msra.mxu0 0
      %447 = vmatprep.subr.bf16.mxu0 0
      %448 = vmatpush1.bf16.msra.mxu0 0
      %449 = vmatprep.subr.bf16.mxu0 0
      %450 = vmatpush1.bf16.msra.mxu0 0
      %451 = vmatprep.subr.bf16.mxu0 0
      %452 = vmatpush1.bf16.msra.mxu0 0
      %453 = vmatprep.subr.bf16.mxu0 0
      %454 = vmatpush1.bf16.msra.mxu0 0
      %455 = vmatprep.subr.bf16.mxu0 0
      %456 = vmatpush1.bf16.msra.mxu0 0
      %457 = vmatprep.subr.bf16.mxu0 0
      %458 = vmatpush1.bf16.msra.mxu0 0
      %459 = vmatprep.subr.bf16.mxu0 0
      %460 = vmatpush1.bf16.msra.mxu0 0
      %461 = vmatprep.subr.bf16.mxu0 0
      %462 = vmatpush1.bf16.msra.mxu0 0
      %463 = vmatprep.subr.bf16.mxu0 0
      %464 = vmatpush1.bf16.msra.mxu0 0
      %465 = vmatprep.subr.bf16.mxu0 0
      %466 = vmatpush1.bf16.msra.mxu0 0
      %467 = vmatprep.subr.bf16.mxu0 0
      %468 = vmatpush1.bf16.msra.mxu0 0
      %469 = vmatprep.mubr.bf16.mxu0 0
      %470 = vmatmul.mubr.bf16.gmra.mrb[0].mxu0 %v411
      %v471 = vpop.f32.mrb[0].mxu0
      %v472 = vadd.f32 0.0, %v471
      %v473 = vpop.f32.mrb[0].mxu0
      %v474 = vadd.f32 0.0, %v473
      %v475 = vpop.f32.mrb[0].mxu0
      %v476 = vadd.f32 0.0, %v475
      %v477 = vpop.f32.mrb[0].mxu0
      %v478 = vadd.f32 0.0, %v477
      %479 = vmatprep.mubr.bf16.mxu0 0
      %480 = vmatmul.mubr.bf16.gmra.mrb[0].mxu0 %v414
      %v481 = vpop.f32.mrb[0].mxu0
      %v482 = vadd.f32 0.0, %v481
      %v483 = vpop.f32.mrb[0].mxu0
      %v484 = vadd.f32 0.0, %v483
      %v485 = vpop.f32.mrb[0].mxu0
      %v486 = vadd.f32 0.0, %v485
      %v487 = vpop.f32.mrb[0].mxu0
      %v488 = vadd.f32 0.0, %v487
      %489 = vmatprep.mubr.bf16.mxu0 0
      %490 = vmatmul.mubr.bf16.gmra.mrb[0].mxu0 %v417
      %v491 = vpop.f32.mrb[0].mxu0
      %v492 = vadd.f32 0.0, %v491
      %v493 = vpop.f32.mrb[0].mxu0
      %v494 = vadd.f32 0.0, %v493
      %v495 = vpop.f32.mrb[0].mxu0
      %v496 = vadd.f32 0.0, %v495
      %v497 = vpop.f32.mrb[0].mxu0
      %v498 = vadd.f32 0.0, %v497
      %499 = vmatprep.mubr.bf16.mxu0 0
      %500 = vmatmul.mubr.bf16.gmra.mrb[0].mxu0 %v420
      %v501 = vpop.f32.mrb[0].mxu0
      %v502 = vadd.f32 0.0, %v501
      %v503 = vpop.f32.mrb[0].mxu0
      %v504 = vadd.f32 0.0, %v503
      %v505 = vpop.f32.mrb[0].mxu0
      %v506 = vadd.f32 0.0, %v505
      %v507 = vpop.f32.mrb[0].mxu0
      %v508 = vadd.f32 0.0, %v507
      %509 = vmatprep.mubr.bf16.mxu0 0
      %510 = vmatmul.mubr.bf16.gmra.mrb[0].mxu0 %v423
      %v511 = vpop.f32.mrb[0].mxu0
      %v512 = vadd.f32 0.0, %v511
      %v513 = vpop.f32.mrb[0].mxu0
      %v514 = vadd.f32 0.0, %v513
      %v515 = vpop.f32.mrb[0].mxu0
      %v516 = vadd.f32 0.0, %v515
      %v517 = vpop.f32.mrb[0].mxu0
      %v518 = vadd.f32 0.0, %v517
      %519 = vmatprep.mubr.bf16.mxu0 0
      %520 = vmatmul.mubr.bf16.gmra.mrb[0].mxu0 %v426
      %v521 = vpop.f32.mrb[0].mxu0
      %v522 = vadd.f32 0.0, %v521
      %v523 = vpop.f32.mrb[0].mxu0
      %v524 = vadd.f32 0.0, %v523
      %v525 = vpop.f32.mrb[0].mxu0
      %v526 = vadd.f32 0.0, %v525
      %v527 = vpop.f32.mrb[0].mxu0
      %v528 = vadd.f32 0.0, %v527
      %529 = vmatprep.mubr.bf16.mxu0 0
      %530 = vmatmul.mubr.bf16.gmra.mrb[0].mxu0 %v429
      %v531 = vpop.f32.mrb[0].mxu0
      %v532 = vadd.f32 0.0, %v531
      %v533 = vpop.f32.mrb[0].mxu0
      %v534 = vadd.f32 0.0, %v533
      %v535 = vpop.f32.mrb[0].mxu0
      %v536 = vadd.f32 0.0, %v535
      %v537 = vpop.f32.mrb[0].mxu0
      %v538 = vadd.f32 0.0, %v537
      %539 = vmatprep.mubr.bf16.mxu0 0
      %540 = vmatmul.mubr.bf16.gmra.mrb[0].mxu0 %v432
      %v541 = vpop.f32.mrb[0].mxu0
      %v542 = vadd.f32 0.0, %v541
      %v543 = vpop.f32.mrb[0].mxu0
      %v544 = vadd.f32 0.0, %v543
      %v545 = vpop.f32.mrb[0].mxu0
      %v546 = vadd.f32 0.0, %v545
      %v547 = vpop.f32.mrb[0].mxu0
      %v548 = vadd.f32 0.0, %v547
      %549 = vmatprep.mubr.bf16.mxu0 0
      %550 = vmatmul.mubr.bf16.gmra.mrb[0].mxu0 %v435
      %v551 = vpop.f32.mrb[0].mxu0
      %v552 = vadd.f32 0.0, %v551
      %v553 = vpop.f32.mrb[0].mxu0
      %v554 = vadd.f32 0.0, %v553
      %v555 = vpop.f32.mrb[0].mxu0
      %v556 = vadd.f32 0.0, %v555
      %v557 = vpop.f32.mrb[0].mxu0
      %v558 = vadd.f32 0.0, %v557
      %559 = vdwg.mxu0
      %560 = vmatprep.subr.bf16.mxu0 %v380
      %561 = vmatpush1.bf16.msra.mxu0 %v379
      %562 = vmatprep.subr.bf16.mxu0 %v384
      %563 = vmatpush1.bf16.msra.mxu0 %v383
      %564 = vmatprep.subr.bf16.mxu0 %v388
      %565 = vmatpush1.bf16.msra.mxu0 %v387
      %566 = vmatprep.subr.bf16.mxu0 %v392
      %567 = vmatpush1.bf16.msra.mxu0 %v391
      %568 = vmatprep.subr.bf16.mxu0 0
      %569 = vmatpush1.bf16.msra.mxu0 0
      %570 = vmatprep.subr.bf16.mxu0 0
      %571 = vmatpush1.bf16.msra.mxu0 0
      %572 = vmatprep.subr.bf16.mxu0 0
      %573 = vmatpush1.bf16.msra.mxu0 0
      %574 = vmatprep.subr.bf16.mxu0 0
      %575 = vmatpush1.bf16.msra.mxu0 0
      %576 = vmatprep.subr.bf16.mxu0 0
      %577 = vmatpush1.bf16.msra.mxu0 0
      %578 = vmatprep.subr.bf16.mxu0 0
      %579 = vmatpush1.bf16.msra.mxu0 0
      %580 = vmatprep.subr.bf16.mxu0 0
      %581 = vmatpush1.bf16.msra.mxu0 0
      %582 = vmatprep.subr.bf16.mxu0 0
      %583 = vmatpush1.bf16.msra.mxu0 0
      %584 = vmatprep.subr.bf16.mxu0 0
      %585 = vmatpush1.bf16.msra.mxu0 0
      %586 = vmatprep.subr.bf16.mxu0 0
      %587 = vmatpush1.bf16.msra.mxu0 0
      %588 = vmatprep.subr.bf16.mxu0 0
      %589 = vmatpush1.bf16.msra.mxu0 0
      %590 = vmatprep.subr.bf16.mxu0 0
      %591 = vmatpush1.bf16.msra.mxu0 0
      %592 = vmatprep.mubr.bf16.mxu0 0
      %593 = vmatmul.mubr.bf16.gmra.mrb[0].mxu0 %v411
      %v594 = vpop.f32.mrb[0].mxu0
      %v595 = vadd.f32 0.0, %v594
      %v596 = vpop.f32.mrb[0].mxu0
      %v597 = vadd.f32 0.0, %v596
      %v598 = vpop.f32.mrb[0].mxu0
      %v599 = vadd.f32 0.0, %v598
      %v600 = vpop.f32.mrb[0].mxu0
      %v601 = vadd.f32 0.0, %v600
      %602 = vmatprep.mubr.bf16.mxu0 0
      %603 = vmatmul.mubr.bf16.gmra.mrb[0].mxu0 %v414
      %v604 = vpop.f32.mrb[0].mxu0
      %v605 = vadd.f32 0.0, %v604
      %v606 = vpop.f32.mrb[0].mxu0
      %v607 = vadd.f32 0.0, %v606
      %v608 = vpop.f32.mrb[0].mxu0
      %v609 = vadd.f32 0.0, %v608
      %v610 = vpop.f32.mrb[0].mxu0
      %v611 = vadd.f32 0.0, %v610
      %612 = vmatprep.mubr.bf16.mxu0 0
      %613 = vmatmul.mubr.bf16.gmra.mrb[0].mxu0 %v417
      %v614 = vpop.f32.mrb[0].mxu0
      %v615 = vadd.f32 0.0, %v614
      %v616 = vpop.f32.mrb[0].mxu0
      %v617 = vadd.f32 0.0, %v616
      %v618 = vpop.f32.mrb[0].mxu0
      %v619 = vadd.f32 0.0, %v618
      %v620 = vpop.f32.mrb[0].mxu0
      %v621 = vadd.f32 0.0, %v620
      %622 = vmatprep.mubr.bf16.mxu0 0
      %623 = vmatmul.mubr.bf16.gmra.mrb[0].mxu0 %v420
      %v624 = vpop.f32.mrb[0].mxu0
      %v625 = vadd.f32 0.0, %v624
      %v626 = vpop.f32.mrb[0].mxu0
      %v627 = vadd.f32 0.0, %v626
      %v628 = vpop.f32.mrb[0].mxu0
      %v629 = vadd.f32 0.0, %v628
      %v630 = vpop.f32.mrb[0].mxu0
      %v631 = vadd.f32 0.0, %v630
      %632 = vmatprep.mubr.bf16.mxu0 0
      %633 = vmatmul.mubr.bf16.gmra.mrb[0].mxu0 %v423
      %v634 = vpop.f32.mrb[0].mxu0
      %v635 = vadd.f32 0.0, %v634
      %v636 = vpop.f32.mrb[0].mxu0
      %v637 = vadd.f32 0.0, %v636
      %v638 = vpop.f32.mrb[0].mxu0
      %v639 = vadd.f32 0.0, %v638
      %v640 = vpop.f32.mrb[0].mxu0
      %v641 = vadd.f32 0.0, %v640
      %642 = vmatprep.mubr.bf16.mxu0 0
      %643 = vmatmul.mubr.bf16.gmra.mrb[0].mxu0 %v426
      %v644 = vpop.f32.mrb[0].mxu0
      %v645 = vadd.f32 0.0, %v644
      %v646 = vpop.f32.mrb[0].mxu0
      %v647 = vadd.f32 0.0, %v646
      %v648 = vpop.f32.mrb[0].mxu0
      %v649 = vadd.f32 0.0, %v648
      %v650 = vpop.f32.mrb[0].mxu0
      %v651 = vadd.f32 0.0, %v650
      %652 = vmatprep.mubr.bf16.mxu0 0
      %653 = vmatmul.mubr.bf16.gmra.mrb[0].mxu0 %v429
      %v654 = vpop.f32.mrb[0].mxu0
      %v655 = vadd.f32 0.0, %v654
      %v656 = vpop.f32.mrb[0].mxu0
      %v657 = vadd.f32 0.0, %v656
      %v658 = vpop.f32.mrb[0].mxu0
      %v659 = vadd.f32 0.0, %v658
      %v660 = vpop.f32.mrb[0].mxu0
      %v661 = vadd.f32 0.0, %v660
      %662 = vmatprep.mubr.bf16.mxu0 0
      %663 = vmatmul.mubr.bf16.gmra.mrb[0].mxu0 %v432
      %v664 = vpop.f32.mrb[0].mxu0
      %v665 = vadd.f32 0.0, %v664
      %v666 = vpop.f32.mrb[0].mxu0
      %v667 = vadd.f32 0.0, %v666
      %v668 = vpop.f32.mrb[0].mxu0
      %v669 = vadd.f32 0.0, %v668
      %v670 = vpop.f32.mrb[0].mxu0
      %v671 = vadd.f32 0.0, %v670
      %672 = vmatprep.mubr.bf16.mxu0 0
      %673 = vmatmul.mubr.bf16.gmra.mrb[0].mxu0 %v435
      %v674 = vpop.f32.mrb[0].mxu0
      %v675 = vadd.f32 0.0, %v674
      %v676 = vpop.f32.mrb[0].mxu0
      %v677 = vadd.f32 0.0, %v676
      %v678 = vpop.f32.mrb[0].mxu0
      %v679 = vadd.f32 0.0, %v678
      %v680 = vpop.f32.mrb[0].mxu0
      %v681 = vadd.f32 0.0, %v680
      %682 = vdwg.mxu0
      %v683 = vpack.c.bf16 %v476, %v472
      %v684 = vpack.c.bf16 %v478, %v474
      %v685 = vpack.c.bf16 %v599, %v595
      %v686 = vpack.c.bf16 %v601, %v597
      %v687 = vpack.c.bf16 %v486, %v482
      %v688 = vpack.c.bf16 %v488, %v484
      %v689 = vpack.c.bf16 %v609, %v605
      %v690 = vpack.c.bf16 %v611, %v607
      %v691 = vpack.c.bf16 %v496, %v492
      %v692 = vpack.c.bf16 %v498, %v494
      %v693 = vpack.c.bf16 %v619, %v615
      %v694 = vpack.c.bf16 %v621, %v617
      %v695 = vpack.c.bf16 %v506, %v502
      %v696 = vpack.c.bf16 %v508, %v504
      %v697 = vpack.c.bf16 %v629, %v625
      %v698 = vpack.c.bf16 %v631, %v627
      %v699 = vpack.c.bf16 %v516, %v512
      %v700 = vpack.c.bf16 %v518, %v514
      %v701 = vpack.c.bf16 %v639, %v635
      %v702 = vpack.c.bf16 %v641, %v637
      %v703 = vpack.c.bf16 %v526, %v522
      %v704 = vpack.c.bf16 %v528, %v524
      %v705 = vpack.c.bf16 %v649, %v645
      %v706 = vpack.c.bf16 %v651, %v647
      %v707 = vpack.c.bf16 %v536, %v532
      %v708 = vpack.c.bf16 %v538, %v534
      %v709 = vpack.c.bf16 %v659, %v655
      %v710 = vpack.c.bf16 %v661, %v657
      %v711 = vpack.c.bf16 %v546, %v542
      %v712 = vpack.c.bf16 %v548, %v544
      %v713 = vpack.c.bf16 %v669, %v665
      %v714 = vpack.c.bf16 %v671, %v667
      %v715 = vpack.c.bf16 %v556, %v552
      %v716 = vpack.c.bf16 %v558, %v554
      %v717 = vpack.c.bf16 %v679, %v675
      %v718 = vpack.c.bf16 %v681, %v677
      %v719 = vld [vmem:[%s2] sm:$0xf]
      %v720 = vld [vmem:[%s2 + $0x4] sm:$0xf]
      %v721 = vld [vmem:[%s2 + $0x8] sm:$0xf]
      %v722 = vld [vmem:[%s2 + $0xc] sm:$0xf]
      %v723 = vld [vmem:[%s2 + $0x10] sm:$0xf]
      %v724 = vld [vmem:[%s2 + $0x14] sm:$0xf]
      %v725 = vld [vmem:[%s2 + $0x18] sm:$0xf]
      %v726 = vld [vmem:[%s2 + $0x1c] sm:$0xf]
      %v727 = vld [vmem:[%s2 + $0x20] sm:$0xf]
      %v728 = vld [vmem:[%s2 + $0x24] sm:$0xf]
      %v729 = vld [vmem:[%s2 + $0x28] sm:$0xf]
      %v730 = vld [vmem:[%s2 + $0x2c] sm:$0xf]
      %v731 = vld [vmem:[%s2 + $0x30] sm:$0xf]
      %v732 = vld [vmem:[%s2 + $0x34] sm:$0xf]
      %v733 = vld [vmem:[%s2 + $0x38] sm:$0xf]
      %v734 = vld [vmem:[%s2 + $0x3c] sm:$0xf]
      %v735 = vld [vmem:[%s2 + $0x40] sm:$0xf]
      %v736 = vld [vmem:[%s2 + $0x44] sm:$0xf]
      %v737 = vld [vmem:[%s2 + $0x48] sm:$0xf]
      %v738 = vld [vmem:[%s2 + $0x4c] sm:$0xf]
      %v739 = vld [vmem:[%s2 + $0x50] sm:$0xf]
      %v740 = vld [vmem:[%s2 + $0x54] sm:$0xf]
      %v741 = vld [vmem:[%s2 + $0x58] sm:$0xf]
      %v742 = vld [vmem:[%s2 + $0x5c] sm:$0xf]
      %v743 = vld [vmem:[%s2 + $0x60] sm:$0xf]
      %v744 = vld [vmem:[%s2 + $0x64] sm:$0xf]
      %v745 = vld [vmem:[%s2 + $0x68] sm:$0xf]
      %v746 = vld [vmem:[%s2 + $0x6c] sm:$0xf]
      %v747 = vld [vmem:[%s2 + $0x70] sm:$0xf]
      %v748 = vld [vmem:[%s2 + $0x74] sm:$0xf]
      %v749 = vld [vmem:[%s2 + $0x78] sm:$0xf]
      %v750 = vld [vmem:[%s2 + $0x7c] sm:$0xf]
      %v751 = vld [vmem:[%s2 + $0x80] sm:$0xf]
      %v752 = vld [vmem:[%s2 + $0x84] sm:$0xf]
      %v753 = vld [vmem:[%s2 + $0x88] sm:$0xf]
      %v754 = vld [vmem:[%s2 + $0x8c] sm:$0xf]
      %v755 = vld [vmem:[%s2 + $0x90] sm:$0xf]
      %v756 = vld [vmem:[%s2 + $0x94] sm:$0xf]
      %v757 = vld [vmem:[%s2 + $0x98] sm:$0xf]
      %v758 = vld [vmem:[%s2 + $0x9c] sm:$0xf]
      %v759 = vld [vmem:[%s2 + $0xa0] sm:$0xf]
      %v760 = vld [vmem:[%s2 + $0xa4] sm:$0xf]
      %v761 = vld [vmem:[%s2 + $0xa8] sm:$0xf]
      %v762 = vld [vmem:[%s2 + $0xac] sm:$0xf]
      %v763 = vld [vmem:[%s2 + $0xb0] sm:$0xf]
      %v764 = vld [vmem:[%s2 + $0xb4] sm:$0xf]
      %v765 = vld [vmem:[%s2 + $0xb8] sm:$0xf]
      %v766 = vld [vmem:[%s2 + $0xbc] sm:$0xf]
      %v767 = vld [vmem:[%s2 + $0xc0] sm:$0xf]
      %v768 = vld [vmem:[%s2 + $0xc4] sm:$0xf]
      %v769 = vld [vmem:[%s2 + $0xc8] sm:$0xf]
      %v770 = vld [vmem:[%s2 + $0xcc] sm:$0xf]
      %v771 = vld [vmem:[%s2 + $0xd0] sm:$0xf]
      %v772 = vld [vmem:[%s2 + $0xd4] sm:$0xf]
      %v773 = vld [vmem:[%s2 + $0xd8] sm:$0xf]
      %v774 = vld [vmem:[%s2 + $0xdc] sm:$0xf]
      %v775 = vld [vmem:[%s2 + $0xe0] sm:$0xf]
      %v776 = vld [vmem:[%s2 + $0xe4] sm:$0xf]
      %v777 = vld [vmem:[%s2 + $0xe8] sm:$0xf]
      %v778 = vld [vmem:[%s2 + $0xec] sm:$0xf]
      %v779 = vld [vmem:[%s2 + $0xf0] sm:$0xf]
      %v780 = vld [vmem:[%s2 + $0xf4] sm:$0xf]
      %v781 = vld [vmem:[%s2 + $0xf8] sm:$0xf]
      %v782 = vld [vmem:[%s2 + $0xfc] sm:$0xf]
      %s783 = scalar_lea.vmem %s2, 256
      %v784 = vld [vmem:[%s783] sm:$0xf]
      %v785 = vld [vmem:[%s783 + $0x4] sm:$0xf]
      %v786 = vld [vmem:[%s783 + $0x8] sm:$0xf]
      %v787 = vld [vmem:[%s783 + $0xc] sm:$0xf]
      %v788 = vld [vmem:[%s783 + $0x10] sm:$0xf]
      %v789 = vld [vmem:[%s783 + $0x14] sm:$0xf]
      %v790 = vld [vmem:[%s783 + $0x18] sm:$0xf]
      %v791 = vld [vmem:[%s783 + $0x1c] sm:$0xf]
      %v792 = vld [vmem:[%s783 + $0x20] sm:$0xf]
      %v793 = vld [vmem:[%s783 + $0x24] sm:$0xf]
      %v794 = vld [vmem:[%s783 + $0x28] sm:$0xf]
      %v795 = vld [vmem:[%s783 + $0x2c] sm:$0xf]
      %v796 = vld [vmem:[%s783 + $0x30] sm:$0xf]
      %v797 = vld [vmem:[%s783 + $0x34] sm:$0xf]
      %v798 = vld [vmem:[%s783 + $0x38] sm:$0xf]
      %v799 = vld [vmem:[%s783 + $0x3c] sm:$0xf]
      %v800 = vld [vmem:[%s783 + $0x40] sm:$0xf]
      %v801 = vld [vmem:[%s783 + $0x44] sm:$0xf]
      %v802 = vld [vmem:[%s783 + $0x48] sm:$0xf]
      %v803 = vld [vmem:[%s783 + $0x4c] sm:$0xf]
      %v804 = vld [vmem:[%s783 + $0x50] sm:$0xf]
      %v805 = vld [vmem:[%s783 + $0x54] sm:$0xf]
      %v806 = vld [vmem:[%s783 + $0x58] sm:$0xf]
      %v807 = vld [vmem:[%s783 + $0x5c] sm:$0xf]
      %v808 = vld [vmem:[%s783 + $0x60] sm:$0xf]
      %v809 = vld [vmem:[%s783 + $0x64] sm:$0xf]
      %v810 = vld [vmem:[%s783 + $0x68] sm:$0xf]
      %v811 = vld [vmem:[%s783 + $0x6c] sm:$0xf]
      %v812 = vld [vmem:[%s783 + $0x70] sm:$0xf]
      %v813 = vld [vmem:[%s783 + $0x74] sm:$0xf]
      %v814 = vld [vmem:[%s783 + $0x78] sm:$0xf]
      %v815 = vld [vmem:[%s783 + $0x7c] sm:$0xf]
      %v816 = vld [vmem:[%s783 + $0x80] sm:$0xf]
      %v817 = vld [vmem:[%s783 + $0x84] sm:$0xf]
      %v818 = vld [vmem:[%s783 + $0x88] sm:$0xf]
      %v819 = vld [vmem:[%s783 + $0x8c] sm:$0xf]
      %v820 = vld [vmem:[%s783 + $0x90] sm:$0xf]
      %v821 = vld [vmem:[%s783 + $0x94] sm:$0xf]
      %v822 = vld [vmem:[%s783 + $0x98] sm:$0xf]
      %v823 = vld [vmem:[%s783 + $0x9c] sm:$0xf]
      %v824 = vld [vmem:[%s783 + $0xa0] sm:$0xf]
      %v825 = vld [vmem:[%s783 + $0xa4] sm:$0xf]
      %v826 = vld [vmem:[%s783 + $0xa8] sm:$0xf]
      %v827 = vld [vmem:[%s783 + $0xac] sm:$0xf]
      %v828 = vld [vmem:[%s783 + $0xb0] sm:$0xf]
      %v829 = vld [vmem:[%s783 + $0xb4] sm:$0xf]
      %v830 = vld [vmem:[%s783 + $0xb8] sm:$0xf]
      %v831 = vld [vmem:[%s783 + $0xbc] sm:$0xf]
      %v832 = vld [vmem:[%s783 + $0xc0] sm:$0xf]
      %v833 = vld [vmem:[%s783 + $0xc4] sm:$0xf]
      %v834 = vld [vmem:[%s783 + $0xc8] sm:$0xf]
      %v835 = vld [vmem:[%s783 + $0xcc] sm:$0xf]
      %v836 = vld [vmem:[%s783 + $0xd0] sm:$0xf]
      %v837 = vld [vmem:[%s783 + $0xd4] sm:$0xf]
      %v838 = vld [vmem:[%s783 + $0xd8] sm:$0xf]
      %v839 = vld [vmem:[%s783 + $0xdc] sm:$0xf]
      %v840 = vld [vmem:[%s783 + $0xe0] sm:$0xf]
      %v841 = vld [vmem:[%s783 + $0xe4] sm:$0xf]
      %v842 = vld [vmem:[%s783 + $0xe8] sm:$0xf]
      %v843 = vld [vmem:[%s783 + $0xec] sm:$0xf]
      %v844 = vld [vmem:[%s783 + $0xf0] sm:$0xf]
      %v845 = vld [vmem:[%s783 + $0xf4] sm:$0xf]
      %v846 = vld [vmem:[%s783 + $0xf8] sm:$0xf]
      %v847 = vld [vmem:[%s783 + $0xfc] sm:$0xf]
      %v912 = vunpack.c.l.b16 %v784
      %v913 = vunpack.c.l.b16 %v785
      %v914 = vunpack.c.l.b16 %v786
      %v915 = vunpack.c.l.b16 %v787
      %v916 = vunpack.c.l.b16 %v788
      %v917 = vunpack.c.l.b16 %v789
      %v918 = vunpack.c.l.b16 %v790
      %v919 = vunpack.c.l.b16 %v791
      %v920 = vunpack.c.l.b16 %v792
      %v921 = vunpack.c.l.b16 %v793
      %v922 = vunpack.c.l.b16 %v794
      %v923 = vunpack.c.l.b16 %v795
      %v924 = vunpack.c.l.b16 %v796
      %v925 = vunpack.c.l.b16 %v797
      %v926 = vunpack.c.l.b16 %v798
      %v927 = vunpack.c.l.b16 %v799
      %v928 = vunpack.c.l.b16 %v800
      %v929 = vunpack.c.l.b16 %v801
      %v930 = vunpack.c.l.b16 %v802
      %v931 = vunpack.c.l.b16 %v803
      %v932 = vunpack.c.l.b16 %v804
      %v933 = vunpack.c.l.b16 %v805
      %v934 = vunpack.c.l.b16 %v806
      %v935 = vunpack.c.l.b16 %v807
      %v936 = vunpack.c.l.b16 %v808
      %v937 = vunpack.c.l.b16 %v809
      %v938 = vunpack.c.l.b16 %v810
      %v939 = vunpack.c.l.b16 %v811
      %v940 = vunpack.c.l.b16 %v812
      %v941 = vunpack.c.l.b16 %v813
      %v942 = vunpack.c.l.b16 %v814
      %v943 = vunpack.c.l.b16 %v815
      %v944 = vunpack.c.l.b16 %v816
      %v945 = vunpack.c.l.b16 %v817
      %v946 = vunpack.c.l.b16 %v818
      %v947 = vunpack.c.l.b16 %v819
      %v948 = vunpack.c.l.b16 %v820
      %v949 = vunpack.c.l.b16 %v821
      %v950 = vunpack.c.l.b16 %v822
      %v951 = vunpack.c.l.b16 %v823
      %v952 = vunpack.c.l.b16 %v824
      %v953 = vunpack.c.l.b16 %v825
      %v954 = vunpack.c.l.b16 %v826
      %v955 = vunpack.c.l.b16 %v827
      %v956 = vunpack.c.l.b16 %v828
      %v957 = vunpack.c.l.b16 %v829
      %v958 = vunpack.c.l.b16 %v830
      %v959 = vunpack.c.l.b16 %v831
      %v960 = vunpack.c.l.b16 %v832
      %v961 = vunpack.c.l.b16 %v833
      %v962 = vunpack.c.l.b16 %v834
      %v963 = vunpack.c.l.b16 %v835
      %v964 = vunpack.c.l.b16 %v836
      %v965 = vunpack.c.l.b16 %v837
      %v966 = vunpack.c.l.b16 %v838
      %v967 = vunpack.c.l.b16 %v839
      %v968 = vunpack.c.l.b16 %v840
      %v969 = vunpack.c.l.b16 %v841
      %v970 = vunpack.c.l.b16 %v842
      %v971 = vunpack.c.l.b16 %v843
      %v972 = vunpack.c.l.b16 %v844
      %v973 = vunpack.c.l.b16 %v845
      %v974 = vunpack.c.l.b16 %v846
      %v975 = vunpack.c.l.b16 %v847
      %v976 = vpack.c.b16 %v913, %v912
      %v977 = vpack.c.b16 %v915, %v914
      %v978 = vpack.c.b16 %v917, %v916
      %v979 = vpack.c.b16 %v919, %v918
      %v980 = vpack.c.b16 %v921, %v920
      %v981 = vpack.c.b16 %v923, %v922
      %v982 = vpack.c.b16 %v925, %v924
      %v983 = vpack.c.b16 %v927, %v926
      %v984 = vpack.c.b16 %v929, %v928
      %v985 = vpack.c.b16 %v931, %v930
      %v986 = vpack.c.b16 %v933, %v932
      %v987 = vpack.c.b16 %v935, %v934
      %v988 = vpack.c.b16 %v937, %v936
      %v989 = vpack.c.b16 %v939, %v938
      %v990 = vpack.c.b16 %v941, %v940
      %v991 = vpack.c.b16 %v943, %v942
      %v992 = vpack.c.b16 %v945, %v944
      %v993 = vpack.c.b16 %v947, %v946
      %v994 = vpack.c.b16 %v949, %v948
      %v995 = vpack.c.b16 %v951, %v950
      %v996 = vpack.c.b16 %v953, %v952
      %v997 = vpack.c.b16 %v955, %v954
      %v998 = vpack.c.b16 %v957, %v956
      %v999 = vpack.c.b16 %v959, %v958
      %v1000 = vpack.c.b16 %v961, %v960
      %v1001 = vpack.c.b16 %v963, %v962
      %v1002 = vpack.c.b16 %v965, %v964
      %v1003 = vpack.c.b16 %v967, %v966
      %v1004 = vpack.c.b16 %v969, %v968
      %v1005 = vpack.c.b16 %v971, %v970
      %v1006 = vpack.c.b16 %v973, %v972
      %v1007 = vpack.c.b16 %v975, %v974
      %1040 = vmatprep.subr.bf16.mxu0 0
      %1041 = vmatpush1.bf16.msra.mxu0 %v976
      %1042 = vmatprep.subr.bf16.mxu0 0
      %1043 = vmatpush1.bf16.msra.mxu0 %v977
      %1044 = vmatprep.subr.bf16.mxu0 0
      %1045 = vmatpush1.bf16.msra.mxu0 %v978
      %1046 = vmatprep.subr.bf16.mxu0 0
      %1047 = vmatpush1.bf16.msra.mxu0 %v979
      %1048 = vmatprep.subr.bf16.mxu0 0
      %1049 = vmatpush1.bf16.msra.mxu0 %v980
      %1050 = vmatprep.subr.bf16.mxu0 0
      %1051 = vmatpush1.bf16.msra.mxu0 %v981
      %1052 = vmatprep.subr.bf16.mxu0 0
      %1053 = vmatpush1.bf16.msra.mxu0 %v982
      %1054 = vmatprep.subr.bf16.mxu0 0
      %1055 = vmatpush1.bf16.msra.mxu0 %v983
      %1056 = vmatprep.subr.bf16.mxu0 0
      %1057 = vmatpush1.bf16.msra.mxu0 %v984
      %1058 = vmatprep.subr.bf16.mxu0 0
      %1059 = vmatpush1.bf16.msra.mxu0 %v985
      %1060 = vmatprep.subr.bf16.mxu0 0
      %1061 = vmatpush1.bf16.msra.mxu0 %v986
      %1062 = vmatprep.subr.bf16.mxu0 0
      %1063 = vmatpush1.bf16.msra.mxu0 %v987
      %1064 = vmatprep.subr.bf16.mxu0 0
      %1065 = vmatpush1.bf16.msra.mxu0 %v988
      %1066 = vmatprep.subr.bf16.mxu0 0
      %1067 = vmatpush1.bf16.msra.mxu0 %v989
      %1068 = vmatprep.subr.bf16.mxu0 0
      %1069 = vmatpush1.bf16.msra.mxu0 %v990
      %1070 = vmatprep.subr.bf16.mxu0 0
      %1071 = vmatpush1.bf16.msra.mxu0 %v991
      %1072 = vmatprep.mubr.bf16.mxu0 %v688
      %1073 = vmatmul.mubr.bf16.gmra.mrb[0].mxu0 %v687
      %v1074 = vpop.f32.mrb[0].mxu0
      %v1075 = vadd.f32 0.0, %v1074
      %v1076 = vpop.f32.mrb[0].mxu0
      %v1077 = vpop.f32.mrb[0].mxu0
      %v1078 = vadd.f32 0.0, %v1077
      %v1079 = vpop.f32.mrb[0].mxu0
      %1080 = vdwg.mxu0
      %1081 = vmatprep.subr.bf16.mxu0 0
      %1082 = vmatpush1.bf16.msra.mxu0 %v992
      %1083 = vmatprep.subr.bf16.mxu0 0
      %1084 = vmatpush1.bf16.msra.mxu0 %v993
      %1085 = vmatprep.subr.bf16.mxu0 0
      %1086 = vmatpush1.bf16.msra.mxu0 %v994
      %1087 = vmatprep.subr.bf16.mxu0 0
      %1088 = vmatpush1.bf16.msra.mxu0 %v995
      %1089 = vmatprep.subr.bf16.mxu0 0
      %1090 = vmatpush1.bf16.msra.mxu0 %v996
      %1091 = vmatprep.subr.bf16.mxu0 0
      %1092 = vmatpush1.bf16.msra.mxu0 %v997
      %1093 = vmatprep.subr.bf16.mxu0 0
      %1094 = vmatpush1.bf16.msra.mxu0 %v998
      %1095 = vmatprep.subr.bf16.mxu0 0
      %1096 = vmatpush1.bf16.msra.mxu0 %v999
      %1097 = vmatprep.subr.bf16.mxu0 0
      %1098 = vmatpush1.bf16.msra.mxu0 %v1000
      %1099 = vmatprep.subr.bf16.mxu0 0
      %1100 = vmatpush1.bf16.msra.mxu0 %v1001
      %1101 = vmatprep.subr.bf16.mxu0 0
      %1102 = vmatpush1.bf16.msra.mxu0 %v1002
      %1103 = vmatprep.subr.bf16.mxu0 0
      %1104 = vmatpush1.bf16.msra.mxu0 %v1003
      %1105 = vmatprep.subr.bf16.mxu0 0
      %1106 = vmatpush1.bf16.msra.mxu0 %v1004
      %1107 = vmatprep.subr.bf16.mxu0 0
      %1108 = vmatpush1.bf16.msra.mxu0 %v1005
      %1109 = vmatprep.subr.bf16.mxu0 0
      %1110 = vmatpush1.bf16.msra.mxu0 %v1006
      %1111 = vmatprep.subr.bf16.mxu0 0
      %1112 = vmatpush1.bf16.msra.mxu0 %v1007
      %1113 = vmatprep.mubr.bf16.mxu0 %v690
      %1114 = vmatmul.mubr.bf16.gmra.mrb[0].mxu0 %v689
      %v1115 = vpop.f32.mrb[0].mxu0
      %v1116 = vadd.f32 %v1075, %v1115
      %v1117 = vpop.f32.mrb[0].mxu0
      %v1118 = vpop.f32.mrb[0].mxu0
      %v1119 = vadd.f32 %v1078, %v1118
      %v1120 = vpop.f32.mrb[0].mxu0
      %1121 = vdwg.mxu0
      %v1186 = vunpack.c.l.b16 %v719
      %v1187 = vunpack.c.l.b16 %v720
      %v1188 = vunpack.c.l.b16 %v721
      %v1189 = vunpack.c.l.b16 %v722
      %v1190 = vunpack.c.l.b16 %v723
      %v1191 = vunpack.c.l.b16 %v724
      %v1192 = vunpack.c.l.b16 %v725
      %v1193 = vunpack.c.l.b16 %v726
      %v1194 = vunpack.c.l.b16 %v727
      %v1195 = vunpack.c.l.b16 %v728
      %v1196 = vunpack.c.l.b16 %v729
      %v1197 = vunpack.c.l.b16 %v730
      %v1198 = vunpack.c.l.b16 %v731
      %v1199 = vunpack.c.l.b16 %v732
      %v1200 = vunpack.c.l.b16 %v733
      %v1201 = vunpack.c.l.b16 %v734
      %v1202 = vunpack.c.l.b16 %v735
      %v1203 = vunpack.c.l.b16 %v736
      %v1204 = vunpack.c.l.b16 %v737
      %v1205 = vunpack.c.l.b16 %v738
      %v1206 = vunpack.c.l.b16 %v739
      %v1207 = vunpack.c.l.b16 %v740
      %v1208 = vunpack.c.l.b16 %v741
      %v1209 = vunpack.c.l.b16 %v742
      %v1210 = vunpack.c.l.b16 %v743
      %v1211 = vunpack.c.l.b16 %v744
      %v1212 = vunpack.c.l.b16 %v745
      %v1213 = vunpack.c.l.b16 %v746
      %v1214 = vunpack.c.l.b16 %v747
      %v1215 = vunpack.c.l.b16 %v748
      %v1216 = vunpack.c.l.b16 %v749
      %v1217 = vunpack.c.l.b16 %v750
      %v1218 = vunpack.c.l.b16 %v751
      %v1219 = vunpack.c.l.b16 %v752
      %v1220 = vunpack.c.l.b16 %v753
      %v1221 = vunpack.c.l.b16 %v754
      %v1222 = vunpack.c.l.b16 %v755
      %v1223 = vunpack.c.l.b16 %v756
      %v1224 = vunpack.c.l.b16 %v757
      %v1225 = vunpack.c.l.b16 %v758
      %v1226 = vunpack.c.l.b16 %v759
      %v1227 = vunpack.c.l.b16 %v760
      %v1228 = vunpack.c.l.b16 %v761
      %v1229 = vunpack.c.l.b16 %v762
      %v1230 = vunpack.c.l.b16 %v763
      %v1231 = vunpack.c.l.b16 %v764
      %v1232 = vunpack.c.l.b16 %v765
      %v1233 = vunpack.c.l.b16 %v766
      %v1234 = vunpack.c.l.b16 %v767
      %v1235 = vunpack.c.l.b16 %v768
      %v1236 = vunpack.c.l.b16 %v769
      %v1237 = vunpack.c.l.b16 %v770
      %v1238 = vunpack.c.l.b16 %v771
      %v1239 = vunpack.c.l.b16 %v772
      %v1240 = vunpack.c.l.b16 %v773
      %v1241 = vunpack.c.l.b16 %v774
      %v1242 = vunpack.c.l.b16 %v775
      %v1243 = vunpack.c.l.b16 %v776
      %v1244 = vunpack.c.l.b16 %v777
      %v1245 = vunpack.c.l.b16 %v778
      %v1246 = vunpack.c.l.b16 %v779
      %v1247 = vunpack.c.l.b16 %v780
      %v1248 = vunpack.c.l.b16 %v781
      %v1249 = vunpack.c.l.b16 %v782
      %v1250 = vpack.c.b16 %v1187, %v1186
      %v1251 = vpack.c.b16 %v1189, %v1188
      %v1252 = vpack.c.b16 %v1191, %v1190
      %v1253 = vpack.c.b16 %v1193, %v1192
      %v1254 = vpack.c.b16 %v1195, %v1194
      %v1255 = vpack.c.b16 %v1197, %v1196
      %v1256 = vpack.c.b16 %v1199, %v1198
      %v1257 = vpack.c.b16 %v1201, %v1200
      %v1258 = vpack.c.b16 %v1203, %v1202
      %v1259 = vpack.c.b16 %v1205, %v1204
      %v1260 = vpack.c.b16 %v1207, %v1206
      %v1261 = vpack.c.b16 %v1209, %v1208
      %v1262 = vpack.c.b16 %v1211, %v1210
      %v1263 = vpack.c.b16 %v1213, %v1212
      %v1264 = vpack.c.b16 %v1215, %v1214
      %v1265 = vpack.c.b16 %v1217, %v1216
      %v1266 = vpack.c.b16 %v1219, %v1218
      %v1267 = vpack.c.b16 %v1221, %v1220
      %v1268 = vpack.c.b16 %v1223, %v1222
      %v1269 = vpack.c.b16 %v1225, %v1224
      %v1270 = vpack.c.b16 %v1227, %v1226
      %v1271 = vpack.c.b16 %v1229, %v1228
      %v1272 = vpack.c.b16 %v1231, %v1230
      %v1273 = vpack.c.b16 %v1233, %v1232
      %v1274 = vpack.c.b16 %v1235, %v1234
      %v1275 = vpack.c.b16 %v1237, %v1236
      %v1276 = vpack.c.b16 %v1239, %v1238
      %v1277 = vpack.c.b16 %v1241, %v1240
      %v1278 = vpack.c.b16 %v1243, %v1242
      %v1279 = vpack.c.b16 %v1245, %v1244
      %v1280 = vpack.c.b16 %v1247, %v1246
      %v1281 = vpack.c.b16 %v1249, %v1248
      %1314 = vmatprep.subr.bf16.mxu0 0
      %1315 = vmatpush1.bf16.msra.mxu0 %v1250
      %1316 = vmatprep.subr.bf16.mxu0 0
      %1317 = vmatpush1.bf16.msra.mxu0 %v1251
      %1318 = vmatprep.subr.bf16.mxu0 0
      %1319 = vmatpush1.bf16.msra.mxu0 %v1252
      %1320 = vmatprep.subr.bf16.mxu0 0
      %1321 = vmatpush1.bf16.msra.mxu0 %v1253
      %1322 = vmatprep.subr.bf16.mxu0 0
      %1323 = vmatpush1.bf16.msra.mxu0 %v1254
      %1324 = vmatprep.subr.bf16.mxu0 0
      %1325 = vmatpush1.bf16.msra.mxu0 %v1255
      %1326 = vmatprep.subr.bf16.mxu0 0
      %1327 = vmatpush1.bf16.msra.mxu0 %v1256
      %1328 = vmatprep.subr.bf16.mxu0 0
      %1329 = vmatpush1.bf16.msra.mxu0 %v1257
      %1330 = vmatprep.subr.bf16.mxu0 0
      %1331 = vmatpush1.bf16.msra.mxu0 %v1258
      %1332 = vmatprep.subr.bf16.mxu0 0
      %1333 = vmatpush1.bf16.msra.mxu0 %v1259
      %1334 = vmatprep.subr.bf16.mxu0 0
      %1335 = vmatpush1.bf16.msra.mxu0 %v1260
      %1336 = vmatprep.subr.bf16.mxu0 0
      %1337 = vmatpush1.bf16.msra.mxu0 %v1261
      %1338 = vmatprep.subr.bf16.mxu0 0
      %1339 = vmatpush1.bf16.msra.mxu0 %v1262
      %1340 = vmatprep.subr.bf16.mxu0 0
      %1341 = vmatpush1.bf16.msra.mxu0 %v1263
      %1342 = vmatprep.subr.bf16.mxu0 0
      %1343 = vmatpush1.bf16.msra.mxu0 %v1264
      %1344 = vmatprep.subr.bf16.mxu0 0
      %1345 = vmatpush1.bf16.msra.mxu0 %v1265
      %1346 = vmatprep.mubr.bf16.mxu0 %v684
      %1347 = vmatmul.mubr.bf16.gmra.mrb[0].mxu0 %v683
      %v1348 = vpop.f32.mrb[0].mxu0
      %v1349 = vadd.f32 %v1116, %v1348
      %v1350 = vpop.f32.mrb[0].mxu0
      %v1351 = vpop.f32.mrb[0].mxu0
      %v1352 = vadd.f32 %v1119, %v1351
      %v1353 = vpop.f32.mrb[0].mxu0
      %1354 = vdwg.mxu0
      %1355 = vmatprep.subr.bf16.mxu0 0
      %1356 = vmatpush1.bf16.msra.mxu0 %v1266
      %1357 = vmatprep.subr.bf16.mxu0 0
      %1358 = vmatpush1.bf16.msra.mxu0 %v1267
      %1359 = vmatprep.subr.bf16.mxu0 0
      %1360 = vmatpush1.bf16.msra.mxu0 %v1268
      %1361 = vmatprep.subr.bf16.mxu0 0
      %1362 = vmatpush1.bf16.msra.mxu0 %v1269
      %1363 = vmatprep.subr.bf16.mxu0 0
      %1364 = vmatpush1.bf16.msra.mxu0 %v1270
      %1365 = vmatprep.subr.bf16.mxu0 0
      %1366 = vmatpush1.bf16.msra.mxu0 %v1271
      %1367 = vmatprep.subr.bf16.mxu0 0
      %1368 = vmatpush1.bf16.msra.mxu0 %v1272
      %1369 = vmatprep.subr.bf16.mxu0 0
      %1370 = vmatpush1.bf16.msra.mxu0 %v1273
      %1371 = vmatprep.subr.bf16.mxu0 0
      %1372 = vmatpush1.bf16.msra.mxu0 %v1274
      %1373 = vmatprep.subr.bf16.mxu0 0
      %1374 = vmatpush1.bf16.msra.mxu0 %v1275
      %1375 = vmatprep.subr.bf16.mxu0 0
      %1376 = vmatpush1.bf16.msra.mxu0 %v1276
      %1377 = vmatprep.subr.bf16.mxu0 0
      %1378 = vmatpush1.bf16.msra.mxu0 %v1277
      %1379 = vmatprep.subr.bf16.mxu0 0
      %1380 = vmatpush1.bf16.msra.mxu0 %v1278
      %1381 = vmatprep.subr.bf16.mxu0 0
      %1382 = vmatpush1.bf16.msra.mxu0 %v1279
      %1383 = vmatprep.subr.bf16.mxu0 0
      %1384 = vmatpush1.bf16.msra.mxu0 %v1280
      %1385 = vmatprep.subr.bf16.mxu0 0
      %1386 = vmatpush1.bf16.msra.mxu0 %v1281
      %1387 = vmatprep.mubr.bf16.mxu0 %v686
      %1388 = vmatmul.mubr.bf16.gmra.mrb[0].mxu0 %v685
      %v1389 = vpop.f32.mrb[0].mxu0
      %v1390 = vadd.f32 %v1349, %v1389
      %v1391 = vpop.f32.mrb[0].mxu0
      %v1392 = vpop.f32.mrb[0].mxu0
      %v1393 = vadd.f32 %v1352, %v1392
      %v1394 = vpop.f32.mrb[0].mxu0
      %1395 = vdwg.mxu0
      %s1396 = scalar_lea.vmem %s2, 512
      %v1397 = vld [vmem:[%s1396] sm:$0xf]
      %v1398 = vld [vmem:[%s1396 + $0x4] sm:$0xf]
      %v1399 = vld [vmem:[%s1396 + $0x8] sm:$0xf]
      %v1400 = vld [vmem:[%s1396 + $0xc] sm:$0xf]
      %v1401 = vld [vmem:[%s1396 + $0x10] sm:$0xf]
      %v1402 = vld [vmem:[%s1396 + $0x14] sm:$0xf]
      %v1403 = vld [vmem:[%s1396 + $0x18] sm:$0xf]
      %v1404 = vld [vmem:[%s1396 + $0x1c] sm:$0xf]
      %v1405 = vld [vmem:[%s1396 + $0x20] sm:$0xf]
      %v1406 = vld [vmem:[%s1396 + $0x24] sm:$0xf]
      %v1407 = vld [vmem:[%s1396 + $0x28] sm:$0xf]
      %v1408 = vld [vmem:[%s1396 + $0x2c] sm:$0xf]
      %v1409 = vld [vmem:[%s1396 + $0x30] sm:$0xf]
      %v1410 = vld [vmem:[%s1396 + $0x34] sm:$0xf]
      %v1411 = vld [vmem:[%s1396 + $0x38] sm:$0xf]
      %v1412 = vld [vmem:[%s1396 + $0x3c] sm:$0xf]
      %v1413 = vld [vmem:[%s1396 + $0x40] sm:$0xf]
      %v1414 = vld [vmem:[%s1396 + $0x44] sm:$0xf]
      %v1415 = vld [vmem:[%s1396 + $0x48] sm:$0xf]
      %v1416 = vld [vmem:[%s1396 + $0x4c] sm:$0xf]
      %v1417 = vld [vmem:[%s1396 + $0x50] sm:$0xf]
      %v1418 = vld [vmem:[%s1396 + $0x54] sm:$0xf]
      %v1419 = vld [vmem:[%s1396 + $0x58] sm:$0xf]
      %v1420 = vld [vmem:[%s1396 + $0x5c] sm:$0xf]
      %v1421 = vld [vmem:[%s1396 + $0x60] sm:$0xf]
      %v1422 = vld [vmem:[%s1396 + $0x64] sm:$0xf]
      %v1423 = vld [vmem:[%s1396 + $0x68] sm:$0xf]
      %v1424 = vld [vmem:[%s1396 + $0x6c] sm:$0xf]
      %v1425 = vld [vmem:[%s1396 + $0x70] sm:$0xf]
      %v1426 = vld [vmem:[%s1396 + $0x74] sm:$0xf]
      %v1427 = vld [vmem:[%s1396 + $0x78] sm:$0xf]
      %v1428 = vld [vmem:[%s1396 + $0x7c] sm:$0xf]
      %v1429 = vld [vmem:[%s1396 + $0x80] sm:$0xf]
      %v1430 = vld [vmem:[%s1396 + $0x84] sm:$0xf]
      %v1431 = vld [vmem:[%s1396 + $0x88] sm:$0xf]
      %v1432 = vld [vmem:[%s1396 + $0x8c] sm:$0xf]
      %v1433 = vld [vmem:[%s1396 + $0x90] sm:$0xf]
      %v1434 = vld [vmem:[%s1396 + $0x94] sm:$0xf]
      %v1435 = vld [vmem:[%s1396 + $0x98] sm:$0xf]
      %v1436 = vld [vmem:[%s1396 + $0x9c] sm:$0xf]
      %v1437 = vld [vmem:[%s1396 + $0xa0] sm:$0xf]
      %v1438 = vld [vmem:[%s1396 + $0xa4] sm:$0xf]
      %v1439 = vld [vmem:[%s1396 + $0xa8] sm:$0xf]
      %v1440 = vld [vmem:[%s1396 + $0xac] sm:$0xf]
      %v1441 = vld [vmem:[%s1396 + $0xb0] sm:$0xf]
      %v1442 = vld [vmem:[%s1396 + $0xb4] sm:$0xf]
      %v1443 = vld [vmem:[%s1396 + $0xb8] sm:$0xf]
      %v1444 = vld [vmem:[%s1396 + $0xbc] sm:$0xf]
      %v1445 = vld [vmem:[%s1396 + $0xc0] sm:$0xf]
      %v1446 = vld [vmem:[%s1396 + $0xc4] sm:$0xf]
      %v1447 = vld [vmem:[%s1396 + $0xc8] sm:$0xf]
      %v1448 = vld [vmem:[%s1396 + $0xcc] sm:$0xf]
      %v1449 = vld [vmem:[%s1396 + $0xd0] sm:$0xf]
      %v1450 = vld [vmem:[%s1396 + $0xd4] sm:$0xf]
      %v1451 = vld [vmem:[%s1396 + $0xd8] sm:$0xf]
      %v1452 = vld [vmem:[%s1396 + $0xdc] sm:$0xf]
      %v1453 = vld [vmem:[%s1396 + $0xe0] sm:$0xf]
      %v1454 = vld [vmem:[%s1396 + $0xe4] sm:$0xf]
      %v1455 = vld [vmem:[%s1396 + $0xe8] sm:$0xf]
      %v1456 = vld [vmem:[%s1396 + $0xec] sm:$0xf]
      %v1457 = vld [vmem:[%s1396 + $0xf0] sm:$0xf]
      %v1458 = vld [vmem:[%s1396 + $0xf4] sm:$0xf]
      %v1459 = vld [vmem:[%s1396 + $0xf8] sm:$0xf]
      %v1460 = vld [vmem:[%s1396 + $0xfc] sm:$0xf]
      %v1525 = vunpack.c.l.b16 %v1397
      %v1526 = vunpack.c.l.b16 %v1398
      %v1527 = vunpack.c.l.b16 %v1399
      %v1528 = vunpack.c.l.b16 %v1400
      %v1529 = vunpack.c.l.b16 %v1401
      %v1530 = vunpack.c.l.b16 %v1402
      %v1531 = vunpack.c.l.b16 %v1403
      %v1532 = vunpack.c.l.b16 %v1404
      %v1533 = vunpack.c.l.b16 %v1405
      %v1534 = vunpack.c.l.b16 %v1406
      %v1535 = vunpack.c.l.b16 %v1407
      %v1536 = vunpack.c.l.b16 %v1408
      %v1537 = vunpack.c.l.b16 %v1409
      %v1538 = vunpack.c.l.b16 %v1410
      %v1539 = vunpack.c.l.b16 %v1411
      %v1540 = vunpack.c.l.b16 %v1412
      %v1541 = vunpack.c.l.b16 %v1413
      %v1542 = vunpack.c.l.b16 %v1414
      %v1543 = vunpack.c.l.b16 %v1415
      %v1544 = vunpack.c.l.b16 %v1416
      %v1545 = vunpack.c.l.b16 %v1417
      %v1546 = vunpack.c.l.b16 %v1418
      %v1547 = vunpack.c.l.b16 %v1419
      %v1548 = vunpack.c.l.b16 %v1420
      %v1549 = vunpack.c.l.b16 %v1421
      %v1550 = vunpack.c.l.b16 %v1422
      %v1551 = vunpack.c.l.b16 %v1423
      %v1552 = vunpack.c.l.b16 %v1424
      %v1553 = vunpack.c.l.b16 %v1425
      %v1554 = vunpack.c.l.b16 %v1426
      %v1555 = vunpack.c.l.b16 %v1427
      %v1556 = vunpack.c.l.b16 %v1428
      %v1557 = vunpack.c.l.b16 %v1429
      %v1558 = vunpack.c.l.b16 %v1430
      %v1559 = vunpack.c.l.b16 %v1431
      %v1560 = vunpack.c.l.b16 %v1432
      %v1561 = vunpack.c.l.b16 %v1433
      %v1562 = vunpack.c.l.b16 %v1434
      %v1563 = vunpack.c.l.b16 %v1435
      %v1564 = vunpack.c.l.b16 %v1436
      %v1565 = vunpack.c.l.b16 %v1437
      %v1566 = vunpack.c.l.b16 %v1438
      %v1567 = vunpack.c.l.b16 %v1439
      %v1568 = vunpack.c.l.b16 %v1440
      %v1569 = vunpack.c.l.b16 %v1441
      %v1570 = vunpack.c.l.b16 %v1442
      %v1571 = vunpack.c.l.b16 %v1443
      %v1572 = vunpack.c.l.b16 %v1444
      %v1573 = vunpack.c.l.b16 %v1445
      %v1574 = vunpack.c.l.b16 %v1446
      %v1575 = vunpack.c.l.b16 %v1447
      %v1576 = vunpack.c.l.b16 %v1448
      %v1577 = vunpack.c.l.b16 %v1449
      %v1578 = vunpack.c.l.b16 %v1450
      %v1579 = vunpack.c.l.b16 %v1451
      %v1580 = vunpack.c.l.b16 %v1452
      %v1581 = vunpack.c.l.b16 %v1453
      %v1582 = vunpack.c.l.b16 %v1454
      %v1583 = vunpack.c.l.b16 %v1455
      %v1584 = vunpack.c.l.b16 %v1456
      %v1585 = vunpack.c.l.b16 %v1457
      %v1586 = vunpack.c.l.b16 %v1458
      %v1587 = vunpack.c.l.b16 %v1459
      %v1588 = vunpack.c.l.b16 %v1460
      %v1589 = vpack.c.b16 %v1526, %v1525
      %v1590 = vpack.c.b16 %v1528, %v1527
      %v1591 = vpack.c.b16 %v1530, %v1529
      %v1592 = vpack.c.b16 %v1532, %v1531
      %v1593 = vpack.c.b16 %v1534, %v1533
      %v1594 = vpack.c.b16 %v1536, %v1535
      %v1595 = vpack.c.b16 %v1538, %v1537
      %v1596 = vpack.c.b16 %v1540, %v1539
      %v1597 = vpack.c.b16 %v1542, %v1541
      %v1598 = vpack.c.b16 %v1544, %v1543
      %v1599 = vpack.c.b16 %v1546, %v1545
      %v1600 = vpack.c.b16 %v1548, %v1547
      %v1601 = vpack.c.b16 %v1550, %v1549
      %v1602 = vpack.c.b16 %v1552, %v1551
      %v1603 = vpack.c.b16 %v1554, %v1553
      %v1604 = vpack.c.b16 %v1556, %v1555
      %v1605 = vpack.c.b16 %v1558, %v1557
      %v1606 = vpack.c.b16 %v1560, %v1559
      %v1607 = vpack.c.b16 %v1562, %v1561
      %v1608 = vpack.c.b16 %v1564, %v1563
      %v1609 = vpack.c.b16 %v1566, %v1565
      %v1610 = vpack.c.b16 %v1568, %v1567
      %v1611 = vpack.c.b16 %v1570, %v1569
      %v1612 = vpack.c.b16 %v1572, %v1571
      %v1613 = vpack.c.b16 %v1574, %v1573
      %v1614 = vpack.c.b16 %v1576, %v1575
      %v1615 = vpack.c.b16 %v1578, %v1577
      %v1616 = vpack.c.b16 %v1580, %v1579
      %v1617 = vpack.c.b16 %v1582, %v1581
      %v1618 = vpack.c.b16 %v1584, %v1583
      %v1619 = vpack.c.b16 %v1586, %v1585
      %v1620 = vpack.c.b16 %v1588, %v1587
      %1653 = vmatprep.subr.bf16.mxu0 0
      %1654 = vmatpush1.bf16.msra.mxu0 %v1589
      %1655 = vmatprep.subr.bf16.mxu0 0
      %1656 = vmatpush1.bf16.msra.mxu0 %v1590
      %1657 = vmatprep.subr.bf16.mxu0 0
      %1658 = vmatpush1.bf16.msra.mxu0 %v1591
      %1659 = vmatprep.subr.bf16.mxu0 0
      %1660 = vmatpush1.bf16.msra.mxu0 %v1592
      %1661 = vmatprep.subr.bf16.mxu0 0
      %1662 = vmatpush1.bf16.msra.mxu0 %v1593
      %1663 = vmatprep.subr.bf16.mxu0 0
      %1664 = vmatpush1.bf16.msra.mxu0 %v1594
      %1665 = vmatprep.subr.bf16.mxu0 0
      %1666 = vmatpush1.bf16.msra.mxu0 %v1595
      %1667 = vmatprep.subr.bf16.mxu0 0
      %1668 = vmatpush1.bf16.msra.mxu0 %v1596
      %1669 = vmatprep.subr.bf16.mxu0 0
      %1670 = vmatpush1.bf16.msra.mxu0 %v1597
      %1671 = vmatprep.subr.bf16.mxu0 0
      %1672 = vmatpush1.bf16.msra.mxu0 %v1598
      %1673 = vmatprep.subr.bf16.mxu0 0
      %1674 = vmatpush1.bf16.msra.mxu0 %v1599
      %1675 = vmatprep.subr.bf16.mxu0 0
      %1676 = vmatpush1.bf16.msra.mxu0 %v1600
      %1677 = vmatprep.subr.bf16.mxu0 0
      %1678 = vmatpush1.bf16.msra.mxu0 %v1601
      %1679 = vmatprep.subr.bf16.mxu0 0
      %1680 = vmatpush1.bf16.msra.mxu0 %v1602
      %1681 = vmatprep.subr.bf16.mxu0 0
      %1682 = vmatpush1.bf16.msra.mxu0 %v1603
      %1683 = vmatprep.subr.bf16.mxu0 0
      %1684 = vmatpush1.bf16.msra.mxu0 %v1604
      %1685 = vmatprep.mubr.bf16.mxu0 %v692
      %1686 = vmatmul.mubr.bf16.gmra.mrb[0].mxu0 %v691
      %v1687 = vpop.f32.mrb[0].mxu0
      %v1688 = vadd.f32 0.0, %v1687
      %v1689 = vpop.f32.mrb[0].mxu0
      %v1690 = vpop.f32.mrb[0].mxu0
      %v1691 = vadd.f32 0.0, %v1690
      %v1692 = vpop.f32.mrb[0].mxu0
      %1693 = vdwg.mxu0
      %1694 = vmatprep.subr.bf16.mxu0 0
      %1695 = vmatpush1.bf16.msra.mxu0 %v1605
      %1696 = vmatprep.subr.bf16.mxu0 0
      %1697 = vmatpush1.bf16.msra.mxu0 %v1606
      %1698 = vmatprep.subr.bf16.mxu0 0
      %1699 = vmatpush1.bf16.msra.mxu0 %v1607
      %1700 = vmatprep.subr.bf16.mxu0 0
      %1701 = vmatpush1.bf16.msra.mxu0 %v1608
      %1702 = vmatprep.subr.bf16.mxu0 0
      %1703 = vmatpush1.bf16.msra.mxu0 %v1609
      %1704 = vmatprep.subr.bf16.mxu0 0
      %1705 = vmatpush1.bf16.msra.mxu0 %v1610
      %1706 = vmatprep.subr.bf16.mxu0 0
      %1707 = vmatpush1.bf16.msra.mxu0 %v1611
      %1708 = vmatprep.subr.bf16.mxu0 0
      %1709 = vmatpush1.bf16.msra.mxu0 %v1612
      %1710 = vmatprep.subr.bf16.mxu0 0
      %1711 = vmatpush1.bf16.msra.mxu0 %v1613
      %1712 = vmatprep.subr.bf16.mxu0 0
      %1713 = vmatpush1.bf16.msra.mxu0 %v1614
      %1714 = vmatprep.subr.bf16.mxu0 0
      %1715 = vmatpush1.bf16.msra.mxu0 %v1615
      %1716 = vmatprep.subr.bf16.mxu0 0
      %1717 = vmatpush1.bf16.msra.mxu0 %v1616
      %1718 = vmatprep.subr.bf16.mxu0 0
      %1719 = vmatpush1.bf16.msra.mxu0 %v1617
      %1720 = vmatprep.subr.bf16.mxu0 0
      %1721 = vmatpush1.bf16.msra.mxu0 %v1618
      %1722 = vmatprep.subr.bf16.mxu0 0
      %1723 = vmatpush1.bf16.msra.mxu0 %v1619
      %1724 = vmatprep.subr.bf16.mxu0 0
      %1725 = vmatpush1.bf16.msra.mxu0 %v1620
      %1726 = vmatprep.mubr.bf16.mxu0 %v694
      %1727 = vmatmul.mubr.bf16.gmra.mrb[0].mxu0 %v693
      %v1728 = vpop.f32.mrb[0].mxu0
      %v1729 = vadd.f32 %v1688, %v1728
      %v1730 = vpop.f32.mrb[0].mxu0
      %v1731 = vpop.f32.mrb[0].mxu0
      %v1732 = vadd.f32 %v1691, %v1731
      %v1733 = vpop.f32.mrb[0].mxu0
      %1734 = vdwg.mxu0
      %v1735 = vadd.f32 %v1390, %v1729
      %v1736 = vadd.f32 %v1393, %v1732
      %s1737 = scalar_lea.vmem %s2, 768
      %v1738 = vld [vmem:[%s1737] sm:$0xf]
      %v1739 = vld [vmem:[%s1737 + $0x4] sm:$0xf]
      %v1740 = vld [vmem:[%s1737 + $0x8] sm:$0xf]
      %v1741 = vld [vmem:[%s1737 + $0xc] sm:$0xf]
      %v1742 = vld [vmem:[%s1737 + $0x10] sm:$0xf]
      %v1743 = vld [vmem:[%s1737 + $0x14] sm:$0xf]
      %v1744 = vld [vmem:[%s1737 + $0x18] sm:$0xf]
      %v1745 = vld [vmem:[%s1737 + $0x1c] sm:$0xf]
      %v1746 = vld [vmem:[%s1737 + $0x20] sm:$0xf]
      %v1747 = vld [vmem:[%s1737 + $0x24] sm:$0xf]
      %v1748 = vld [vmem:[%s1737 + $0x28] sm:$0xf]
      %v1749 = vld [vmem:[%s1737 + $0x2c] sm:$0xf]
      %v1750 = vld [vmem:[%s1737 + $0x30] sm:$0xf]
      %v1751 = vld [vmem:[%s1737 + $0x34] sm:$0xf]
      %v1752 = vld [vmem:[%s1737 + $0x38] sm:$0xf]
      %v1753 = vld [vmem:[%s1737 + $0x3c] sm:$0xf]
      %v1754 = vld [vmem:[%s1737 + $0x40] sm:$0xf]
      %v1755 = vld [vmem:[%s1737 + $0x44] sm:$0xf]
      %v1756 = vld [vmem:[%s1737 + $0x48] sm:$0xf]
      %v1757 = vld [vmem:[%s1737 + $0x4c] sm:$0xf]
      %v1758 = vld [vmem:[%s1737 + $0x50] sm:$0xf]
      %v1759 = vld [vmem:[%s1737 + $0x54] sm:$0xf]
      %v1760 = vld [vmem:[%s1737 + $0x58] sm:$0xf]
      %v1761 = vld [vmem:[%s1737 + $0x5c] sm:$0xf]
      %v1762 = vld [vmem:[%s1737 + $0x60] sm:$0xf]
      %v1763 = vld [vmem:[%s1737 + $0x64] sm:$0xf]
      %v1764 = vld [vmem:[%s1737 + $0x68] sm:$0xf]
      %v1765 = vld [vmem:[%s1737 + $0x6c] sm:$0xf]
      %v1766 = vld [vmem:[%s1737 + $0x70] sm:$0xf]
      %v1767 = vld [vmem:[%s1737 + $0x74] sm:$0xf]
      %v1768 = vld [vmem:[%s1737 + $0x78] sm:$0xf]
      %v1769 = vld [vmem:[%s1737 + $0x7c] sm:$0xf]
      %v1770 = vld [vmem:[%s1737 + $0x80] sm:$0xf]
      %v1771 = vld [vmem:[%s1737 + $0x84] sm:$0xf]
      %v1772 = vld [vmem:[%s1737 + $0x88] sm:$0xf]
      %v1773 = vld [vmem:[%s1737 + $0x8c] sm:$0xf]
      %v1774 = vld [vmem:[%s1737 + $0x90] sm:$0xf]
      %v1775 = vld [vmem:[%s1737 + $0x94] sm:$0xf]
      %v1776 = vld [vmem:[%s1737 + $0x98] sm:$0xf]
      %v1777 = vld [vmem:[%s1737 + $0x9c] sm:$0xf]
      %v1778 = vld [vmem:[%s1737 + $0xa0] sm:$0xf]
      %v1779 = vld [vmem:[%s1737 + $0xa4] sm:$0xf]
      %v1780 = vld [vmem:[%s1737 + $0xa8] sm:$0xf]
      %v1781 = vld [vmem:[%s1737 + $0xac] sm:$0xf]
      %v1782 = vld [vmem:[%s1737 + $0xb0] sm:$0xf]
      %v1783 = vld [vmem:[%s1737 + $0xb4] sm:$0xf]
      %v1784 = vld [vmem:[%s1737 + $0xb8] sm:$0xf]
      %v1785 = vld [vmem:[%s1737 + $0xbc] sm:$0xf]
      %v1786 = vld [vmem:[%s1737 + $0xc0] sm:$0xf]
      %v1787 = vld [vmem:[%s1737 + $0xc4] sm:$0xf]
      %v1788 = vld [vmem:[%s1737 + $0xc8] sm:$0xf]
      %v1789 = vld [vmem:[%s1737 + $0xcc] sm:$0xf]
      %v1790 = vld [vmem:[%s1737 + $0xd0] sm:$0xf]
      %v1791 = vld [vmem:[%s1737 + $0xd4] sm:$0xf]
      %v1792 = vld [vmem:[%s1737 + $0xd8] sm:$0xf]
      %v1793 = vld [vmem:[%s1737 + $0xdc] sm:$0xf]
      %v1794 = vld [vmem:[%s1737 + $0xe0] sm:$0xf]
      %v1795 = vld [vmem:[%s1737 + $0xe4] sm:$0xf]
      %v1796 = vld [vmem:[%s1737 + $0xe8] sm:$0xf]
      %v1797 = vld [vmem:[%s1737 + $0xec] sm:$0xf]
      %v1798 = vld [vmem:[%s1737 + $0xf0] sm:$0xf]
      %v1799 = vld [vmem:[%s1737 + $0xf4] sm:$0xf]
      %v1800 = vld [vmem:[%s1737 + $0xf8] sm:$0xf]
      %v1801 = vld [vmem:[%s1737 + $0xfc] sm:$0xf]
      %v1866 = vunpack.c.l.b16 %v1738
      %v1867 = vunpack.c.l.b16 %v1739
      %v1868 = vunpack.c.l.b16 %v1740
      %v1869 = vunpack.c.l.b16 %v1741
      %v1870 = vunpack.c.l.b16 %v1742
      %v1871 = vunpack.c.l.b16 %v1743
      %v1872 = vunpack.c.l.b16 %v1744
      %v1873 = vunpack.c.l.b16 %v1745
      %v1874 = vunpack.c.l.b16 %v1746
      %v1875 = vunpack.c.l.b16 %v1747
      %v1876 = vunpack.c.l.b16 %v1748
      %v1877 = vunpack.c.l.b16 %v1749
      %v1878 = vunpack.c.l.b16 %v1750
      %v1879 = vunpack.c.l.b16 %v1751
      %v1880 = vunpack.c.l.b16 %v1752
      %v1881 = vunpack.c.l.b16 %v1753
      %v1882 = vunpack.c.l.b16 %v1754
      %v1883 = vunpack.c.l.b16 %v1755
      %v1884 = vunpack.c.l.b16 %v1756
      %v1885 = vunpack.c.l.b16 %v1757
      %v1886 = vunpack.c.l.b16 %v1758
      %v1887 = vunpack.c.l.b16 %v1759
      %v1888 = vunpack.c.l.b16 %v1760
      %v1889 = vunpack.c.l.b16 %v1761
      %v1890 = vunpack.c.l.b16 %v1762
      %v1891 = vunpack.c.l.b16 %v1763
      %v1892 = vunpack.c.l.b16 %v1764
      %v1893 = vunpack.c.l.b16 %v1765
      %v1894 = vunpack.c.l.b16 %v1766
      %v1895 = vunpack.c.l.b16 %v1767
      %v1896 = vunpack.c.l.b16 %v1768
      %v1897 = vunpack.c.l.b16 %v1769
      %v1898 = vunpack.c.l.b16 %v1770
      %v1899 = vunpack.c.l.b16 %v1771
      %v1900 = vunpack.c.l.b16 %v1772
      %v1901 = vunpack.c.l.b16 %v1773
      %v1902 = vunpack.c.l.b16 %v1774
      %v1903 = vunpack.c.l.b16 %v1775
      %v1904 = vunpack.c.l.b16 %v1776
      %v1905 = vunpack.c.l.b16 %v1777
      %v1906 = vunpack.c.l.b16 %v1778
      %v1907 = vunpack.c.l.b16 %v1779
      %v1908 = vunpack.c.l.b16 %v1780
      %v1909 = vunpack.c.l.b16 %v1781
      %v1910 = vunpack.c.l.b16 %v1782
      %v1911 = vunpack.c.l.b16 %v1783
      %v1912 = vunpack.c.l.b16 %v1784
      %v1913 = vunpack.c.l.b16 %v1785
      %v1914 = vunpack.c.l.b16 %v1786
      %v1915 = vunpack.c.l.b16 %v1787
      %v1916 = vunpack.c.l.b16 %v1788
      %v1917 = vunpack.c.l.b16 %v1789
      %v1918 = vunpack.c.l.b16 %v1790
      %v1919 = vunpack.c.l.b16 %v1791
      %v1920 = vunpack.c.l.b16 %v1792
      %v1921 = vunpack.c.l.b16 %v1793
      %v1922 = vunpack.c.l.b16 %v1794
      %v1923 = vunpack.c.l.b16 %v1795
      %v1924 = vunpack.c.l.b16 %v1796
      %v1925 = vunpack.c.l.b16 %v1797
      %v1926 = vunpack.c.l.b16 %v1798
      %v1927 = vunpack.c.l.b16 %v1799
      %v1928 = vunpack.c.l.b16 %v1800
      %v1929 = vunpack.c.l.b16 %v1801
      %v1930 = vpack.c.b16 %v1867, %v1866
      %v1931 = vpack.c.b16 %v1869, %v1868
      %v1932 = vpack.c.b16 %v1871, %v1870
      %v1933 = vpack.c.b16 %v1873, %v1872
      %v1934 = vpack.c.b16 %v1875, %v1874
      %v1935 = vpack.c.b16 %v1877, %v1876
      %v1936 = vpack.c.b16 %v1879, %v1878
      %v1937 = vpack.c.b16 %v1881, %v1880
      %v1938 = vpack.c.b16 %v1883, %v1882
      %v1939 = vpack.c.b16 %v1885, %v1884
      %v1940 = vpack.c.b16 %v1887, %v1886
      %v1941 = vpack.c.b16 %v1889, %v1888
      %v1942 = vpack.c.b16 %v1891, %v1890
      %v1943 = vpack.c.b16 %v1893, %v1892
      %v1944 = vpack.c.b16 %v1895, %v1894
      %v1945 = vpack.c.b16 %v1897, %v1896
      %v1946 = vpack.c.b16 %v1899, %v1898
      %v1947 = vpack.c.b16 %v1901, %v1900
      %v1948 = vpack.c.b16 %v1903, %v1902
      %v1949 = vpack.c.b16 %v1905, %v1904
      %v1950 = vpack.c.b16 %v1907, %v1906
      %v1951 = vpack.c.b16 %v1909, %v1908
      %v1952 = vpack.c.b16 %v1911, %v1910
      %v1953 = vpack.c.b16 %v1913, %v1912
      %v1954 = vpack.c.b16 %v1915, %v1914
      %v1955 = vpack.c.b16 %v1917, %v1916
      %v1956 = vpack.c.b16 %v1919, %v1918
      %v1957 = vpack.c.b16 %v1921, %v1920
      %v1958 = vpack.c.b16 %v1923, %v1922
      %v1959 = vpack.c.b16 %v1925, %v1924
      %v1960 = vpack.c.b16 %v1927, %v1926
      %v1961 = vpack.c.b16 %v1929, %v1928
      %1994 = vmatprep.subr.bf16.mxu0 0
      %1995 = vmatpush1.bf16.msra.mxu0 %v1930
      %1996 = vmatprep.subr.bf16.mxu0 0
      %1997 = vmatpush1.bf16.msra.mxu0 %v1931
      %1998 = vmatprep.subr.bf16.mxu0 0
      %1999 = vmatpush1.bf16.msra.mxu0 %v1932
      %2000 = vmatprep.subr.bf16.mxu0 0
      %2001 = vmatpush1.bf16.msra.mxu0 %v1933
      %2002 = vmatprep.subr.bf16.mxu0 0
      %2003 = vmatpush1.bf16.msra.mxu0 %v1934
      %2004 = vmatprep.subr.bf16.mxu0 0
      %2005 = vmatpush1.bf16.msra.mxu0 %v1935
      %2006 = vmatprep.subr.bf16.mxu0 0
      %2007 = vmatpush1.bf16.msra.mxu0 %v1936
      %2008 = vmatprep.subr.bf16.mxu0 0
      %2009 = vmatpush1.bf16.msra.mxu0 %v1937
      %2010 = vmatprep.subr.bf16.mxu0 0
      %2011 = vmatpush1.bf16.msra.mxu0 %v1938
      %2012 = vmatprep.subr.bf16.mxu0 0
      %2013 = vmatpush1.bf16.msra.mxu0 %v1939
      %2014 = vmatprep.subr.bf16.mxu0 0
      %2015 = vmatpush1.bf16.msra.mxu0 %v1940
      %2016 = vmatprep.subr.bf16.mxu0 0
      %2017 = vmatpush1.bf16.msra.mxu0 %v1941
      %2018 = vmatprep.subr.bf16.mxu0 0
      %2019 = vmatpush1.bf16.msra.mxu0 %v1942
      %2020 = vmatprep.subr.bf16.mxu0 0
      %2021 = vmatpush1.bf16.msra.mxu0 %v1943
      %2022 = vmatprep.subr.bf16.mxu0 0
      %2023 = vmatpush1.bf16.msra.mxu0 %v1944
      %2024 = vmatprep.subr.bf16.mxu0 0
      %2025 = vmatpush1.bf16.msra.mxu0 %v1945
      %2026 = vmatprep.mubr.bf16.mxu0 %v696
      %2027 = vmatmul.mubr.bf16.gmra.mrb[0].mxu0 %v695
      %v2028 = vpop.f32.mrb[0].mxu0
      %v2029 = vadd.f32 0.0, %v2028
      %v2030 = vpop.f32.mrb[0].mxu0
      %v2031 = vpop.f32.mrb[0].mxu0
      %v2032 = vadd.f32 0.0, %v2031
      %v2033 = vpop.f32.mrb[0].mxu0
      %2034 = vdwg.mxu0
      %2035 = vmatprep.subr.bf16.mxu0 0
      %2036 = vmatpush1.bf16.msra.mxu0 %v1946
      %2037 = vmatprep.subr.bf16.mxu0 0
      %2038 = vmatpush1.bf16.msra.mxu0 %v1947
      %2039 = vmatprep.subr.bf16.mxu0 0
      %2040 = vmatpush1.bf16.msra.mxu0 %v1948
      %2041 = vmatprep.subr.bf16.mxu0 0
      %2042 = vmatpush1.bf16.msra.mxu0 %v1949
      %2043 = vmatprep.subr.bf16.mxu0 0
      %2044 = vmatpush1.bf16.msra.mxu0 %v1950
      %2045 = vmatprep.subr.bf16.mxu0 0
      %2046 = vmatpush1.bf16.msra.mxu0 %v1951
      %2047 = vmatprep.subr.bf16.mxu0 0
      %2048 = vmatpush1.bf16.msra.mxu0 %v1952
      %2049 = vmatprep.subr.bf16.mxu0 0
      %2050 = vmatpush1.bf16.msra.mxu0 %v1953
      %2051 = vmatprep.subr.bf16.mxu0 0
      %2052 = vmatpush1.bf16.msra.mxu0 %v1954
      %2053 = vmatprep.subr.bf16.mxu0 0
      %2054 = vmatpush1.bf16.msra.mxu0 %v1955
      %2055 = vmatprep.subr.bf16.mxu0 0
      %2056 = vmatpush1.bf16.msra.mxu0 %v1956
      %2057 = vmatprep.subr.bf16.mxu0 0
      %2058 = vmatpush1.bf16.msra.mxu0 %v1957
      %2059 = vmatprep.subr.bf16.mxu0 0
      %2060 = vmatpush1.bf16.msra.mxu0 %v1958
      %2061 = vmatprep.subr.bf16.mxu0 0
      %2062 = vmatpush1.bf16.msra.mxu0 %v1959
      %2063 = vmatprep.subr.bf16.mxu0 0
      %2064 = vmatpush1.bf16.msra.mxu0 %v1960
      %2065 = vmatprep.subr.bf16.mxu0 0
      %2066 = vmatpush1.bf16.msra.mxu0 %v1961
      %2067 = vmatprep.mubr.bf16.mxu0 %v698
      %2068 = vmatmul.mubr.bf16.gmra.mrb[0].mxu0 %v697
      %v2069 = vpop.f32.mrb[0].mxu0
      %v2070 = vadd.f32 %v2029, %v2069
      %v2071 = vpop.f32.mrb[0].mxu0
      %v2072 = vpop.f32.mrb[0].mxu0
      %v2073 = vadd.f32 %v2032, %v2072
      %v2074 = vpop.f32.mrb[0].mxu0
      %2075 = vdwg.mxu0
      %v2076 = vadd.f32 %v1735, %v2070
      %v2077 = vadd.f32 %v1736, %v2073
      %s2078 = scalar_lea.vmem %s2, 1024
      %v2079 = vld [vmem:[%s2078] sm:$0xf]
      %v2080 = vld [vmem:[%s2078 + $0x4] sm:$0xf]
      %v2081 = vld [vmem:[%s2078 + $0x8] sm:$0xf]
      %v2082 = vld [vmem:[%s2078 + $0xc] sm:$0xf]
      %v2083 = vld [vmem:[%s2078 + $0x10] sm:$0xf]
      %v2084 = vld [vmem:[%s2078 + $0x14] sm:$0xf]
      %v2085 = vld [vmem:[%s2078 + $0x18] sm:$0xf]
      %v2086 = vld [vmem:[%s2078 + $0x1c] sm:$0xf]
      %v2087 = vld [vmem:[%s2078 + $0x20] sm:$0xf]
      %v2088 = vld [vmem:[%s2078 + $0x24] sm:$0xf]
      %v2089 = vld [vmem:[%s2078 + $0x28] sm:$0xf]
      %v2090 = vld [vmem:[%s2078 + $0x2c] sm:$0xf]
      %v2091 = vld [vmem:[%s2078 + $0x30] sm:$0xf]
      %v2092 = vld [vmem:[%s2078 + $0x34] sm:$0xf]
      %v2093 = vld [vmem:[%s2078 + $0x38] sm:$0xf]
      %v2094 = vld [vmem:[%s2078 + $0x3c] sm:$0xf]
      %v2095 = vld [vmem:[%s2078 + $0x40] sm:$0xf]
      %v2096 = vld [vmem:[%s2078 + $0x44] sm:$0xf]
      %v2097 = vld [vmem:[%s2078 + $0x48] sm:$0xf]
      %v2098 = vld [vmem:[%s2078 + $0x4c] sm:$0xf]
      %v2099 = vld [vmem:[%s2078 + $0x50] sm:$0xf]
      %v2100 = vld [vmem:[%s2078 + $0x54] sm:$0xf]
      %v2101 = vld [vmem:[%s2078 + $0x58] sm:$0xf]
      %v2102 = vld [vmem:[%s2078 + $0x5c] sm:$0xf]
      %v2103 = vld [vmem:[%s2078 + $0x60] sm:$0xf]
      %v2104 = vld [vmem:[%s2078 + $0x64] sm:$0xf]
      %v2105 = vld [vmem:[%s2078 + $0x68] sm:$0xf]
      %v2106 = vld [vmem:[%s2078 + $0x6c] sm:$0xf]
      %v2107 = vld [vmem:[%s2078 + $0x70] sm:$0xf]
      %v2108 = vld [vmem:[%s2078 + $0x74] sm:$0xf]
      %v2109 = vld [vmem:[%s2078 + $0x78] sm:$0xf]
      %v2110 = vld [vmem:[%s2078 + $0x7c] sm:$0xf]
      %v2111 = vld [vmem:[%s2078 + $0x80] sm:$0xf]
      %v2112 = vld [vmem:[%s2078 + $0x84] sm:$0xf]
      %v2113 = vld [vmem:[%s2078 + $0x88] sm:$0xf]
      %v2114 = vld [vmem:[%s2078 + $0x8c] sm:$0xf]
      %v2115 = vld [vmem:[%s2078 + $0x90] sm:$0xf]
      %v2116 = vld [vmem:[%s2078 + $0x94] sm:$0xf]
      %v2117 = vld [vmem:[%s2078 + $0x98] sm:$0xf]
      %v2118 = vld [vmem:[%s2078 + $0x9c] sm:$0xf]
      %v2119 = vld [vmem:[%s2078 + $0xa0] sm:$0xf]
      %v2120 = vld [vmem:[%s2078 + $0xa4] sm:$0xf]
      %v2121 = vld [vmem:[%s2078 + $0xa8] sm:$0xf]
      %v2122 = vld [vmem:[%s2078 + $0xac] sm:$0xf]
      %v2123 = vld [vmem:[%s2078 + $0xb0] sm:$0xf]
      %v2124 = vld [vmem:[%s2078 + $0xb4] sm:$0xf]
      %v2125 = vld [vmem:[%s2078 + $0xb8] sm:$0xf]
      %v2126 = vld [vmem:[%s2078 + $0xbc] sm:$0xf]
      %v2127 = vld [vmem:[%s2078 + $0xc0] sm:$0xf]
      %v2128 = vld [vmem:[%s2078 + $0xc4] sm:$0xf]
      %v2129 = vld [vmem:[%s2078 + $0xc8] sm:$0xf]
      %v2130 = vld [vmem:[%s2078 + $0xcc] sm:$0xf]
      %v2131 = vld [vmem:[%s2078 + $0xd0] sm:$0xf]
      %v2132 = vld [vmem:[%s2078 + $0xd4] sm:$0xf]
      %v2133 = vld [vmem:[%s2078 + $0xd8] sm:$0xf]
      %v2134 = vld [vmem:[%s2078 + $0xdc] sm:$0xf]
      %v2135 = vld [vmem:[%s2078 + $0xe0] sm:$0xf]
      %v2136 = vld [vmem:[%s2078 + $0xe4] sm:$0xf]
      %v2137 = vld [vmem:[%s2078 + $0xe8] sm:$0xf]
      %v2138 = vld [vmem:[%s2078 + $0xec] sm:$0xf]
      %v2139 = vld [vmem:[%s2078 + $0xf0] sm:$0xf]
      %v2140 = vld [vmem:[%s2078 + $0xf4] sm:$0xf]
      %v2141 = vld [vmem:[%s2078 + $0xf8] sm:$0xf]
      %v2142 = vld [vmem:[%s2078 + $0xfc] sm:$0xf]
      %v2207 = vunpack.c.l.b16 %v2079
      %v2208 = vunpack.c.l.b16 %v2080
      %v2209 = vunpack.c.l.b16 %v2081
      %v2210 = vunpack.c.l.b16 %v2082
      %v2211 = vunpack.c.l.b16 %v2083
      %v2212 = vunpack.c.l.b16 %v2084
      %v2213 = vunpack.c.l.b16 %v2085
      %v2214 = vunpack.c.l.b16 %v2086
      %v2215 = vunpack.c.l.b16 %v2087
      %v2216 = vunpack.c.l.b16 %v2088
      %v2217 = vunpack.c.l.b16 %v2089
      %v2218 = vunpack.c.l.b16 %v2090
      %v2219 = vunpack.c.l.b16 %v2091
      %v2220 = vunpack.c.l.b16 %v2092
      %v2221 = vunpack.c.l.b16 %v2093
      %v2222 = vunpack.c.l.b16 %v2094
      %v2223 = vunpack.c.l.b16 %v2095
      %v2224 = vunpack.c.l.b16 %v2096
      %v2225 = vunpack.c.l.b16 %v2097
      %v2226 = vunpack.c.l.b16 %v2098
      %v2227 = vunpack.c.l.b16 %v2099
      %v2228 = vunpack.c.l.b16 %v2100
      %v2229 = vunpack.c.l.b16 %v2101
      %v2230 = vunpack.c.l.b16 %v2102
      %v2231 = vunpack.c.l.b16 %v2103
      %v2232 = vunpack.c.l.b16 %v2104
      %v2233 = vunpack.c.l.b16 %v2105
      %v2234 = vunpack.c.l.b16 %v2106
      %v2235 = vunpack.c.l.b16 %v2107
      %v2236 = vunpack.c.l.b16 %v2108
      %v2237 = vunpack.c.l.b16 %v2109
      %v2238 = vunpack.c.l.b16 %v2110
      %v2239 = vunpack.c.l.b16 %v2111
      %v2240 = vunpack.c.l.b16 %v2112
      %v2241 = vunpack.c.l.b16 %v2113
      %v2242 = vunpack.c.l.b16 %v2114
      %v2243 = vunpack.c.l.b16 %v2115
      %v2244 = vunpack.c.l.b16 %v2116
      %v2245 = vunpack.c.l.b16 %v2117
      %v2246 = vunpack.c.l.b16 %v2118
      %v2247 = vunpack.c.l.b16 %v2119
      %v2248 = vunpack.c.l.b16 %v2120
      %v2249 = vunpack.c.l.b16 %v2121
      %v2250 = vunpack.c.l.b16 %v2122
      %v2251 = vunpack.c.l.b16 %v2123
      %v2252 = vunpack.c.l.b16 %v2124
      %v2253 = vunpack.c.l.b16 %v2125
      %v2254 = vunpack.c.l.b16 %v2126
      %v2255 = vunpack.c.l.b16 %v2127
      %v2256 = vunpack.c.l.b16 %v2128
      %v2257 = vunpack.c.l.b16 %v2129
      %v2258 = vunpack.c.l.b16 %v2130
      %v2259 = vunpack.c.l.b16 %v2131
      %v2260 = vunpack.c.l.b16 %v2132
      %v2261 = vunpack.c.l.b16 %v2133
      %v2262 = vunpack.c.l.b16 %v2134
      %v2263 = vunpack.c.l.b16 %v2135
      %v2264 = vunpack.c.l.b16 %v2136
      %v2265 = vunpack.c.l.b16 %v2137
      %v2266 = vunpack.c.l.b16 %v2138
      %v2267 = vunpack.c.l.b16 %v2139
      %v2268 = vunpack.c.l.b16 %v2140
      %v2269 = vunpack.c.l.b16 %v2141
      %v2270 = vunpack.c.l.b16 %v2142
      %v2271 = vpack.c.b16 %v2208, %v2207
      %v2272 = vpack.c.b16 %v2210, %v2209
      %v2273 = vpack.c.b16 %v2212, %v2211
      %v2274 = vpack.c.b16 %v2214, %v2213
      %v2275 = vpack.c.b16 %v2216, %v2215
      %v2276 = vpack.c.b16 %v2218, %v2217
      %v2277 = vpack.c.b16 %v2220, %v2219
      %v2278 = vpack.c.b16 %v2222, %v2221
      %v2279 = vpack.c.b16 %v2224, %v2223
      %v2280 = vpack.c.b16 %v2226, %v2225
      %v2281 = vpack.c.b16 %v2228, %v2227
      %v2282 = vpack.c.b16 %v2230, %v2229
      %v2283 = vpack.c.b16 %v2232, %v2231
      %v2284 = vpack.c.b16 %v2234, %v2233
      %v2285 = vpack.c.b16 %v2236, %v2235
      %v2286 = vpack.c.b16 %v2238, %v2237
      %v2287 = vpack.c.b16 %v2240, %v2239
      %v2288 = vpack.c.b16 %v2242, %v2241
      %v2289 = vpack.c.b16 %v2244, %v2243
      %v2290 = vpack.c.b16 %v2246, %v2245
      %v2291 = vpack.c.b16 %v2248, %v2247
      %v2292 = vpack.c.b16 %v2250, %v2249
      %v2293 = vpack.c.b16 %v2252, %v2251
      %v2294 = vpack.c.b16 %v2254, %v2253
      %v2295 = vpack.c.b16 %v2256, %v2255
      %v2296 = vpack.c.b16 %v2258, %v2257
      %v2297 = vpack.c.b16 %v2260, %v2259
      %v2298 = vpack.c.b16 %v2262, %v2261
      %v2299 = vpack.c.b16 %v2264, %v2263
      %v2300 = vpack.c.b16 %v2266, %v2265
      %v2301 = vpack.c.b16 %v2268, %v2267
      %v2302 = vpack.c.b16 %v2270, %v2269
      %2335 = vmatprep.subr.bf16.mxu0 0
      %2336 = vmatpush1.bf16.msra.mxu0 %v2271
      %2337 = vmatprep.subr.bf16.mxu0 0
      %2338 = vmatpush1.bf16.msra.mxu0 %v2272
      %2339 = vmatprep.subr.bf16.mxu0 0
      %2340 = vmatpush1.bf16.msra.mxu0 %v2273
      %2341 = vmatprep.subr.bf16.mxu0 0
      %2342 = vmatpush1.bf16.msra.mxu0 %v2274
      %2343 = vmatprep.subr.bf16.mxu0 0
      %2344 = vmatpush1.bf16.msra.mxu0 %v2275
      %2345 = vmatprep.subr.bf16.mxu0 0
      %2346 = vmatpush1.bf16.msra.mxu0 %v2276
      %2347 = vmatprep.subr.bf16.mxu0 0
      %2348 = vmatpush1.bf16.msra.mxu0 %v2277
      %2349 = vmatprep.subr.bf16.mxu0 0
      %2350 = vmatpush1.bf16.msra.mxu0 %v2278
      %2351 = vmatprep.subr.bf16.mxu0 0
      %2352 = vmatpush1.bf16.msra.mxu0 %v2279
      %2353 = vmatprep.subr.bf16.mxu0 0
      %2354 = vmatpush1.bf16.msra.mxu0 %v2280
      %2355 = vmatprep.subr.bf16.mxu0 0
      %2356 = vmatpush1.bf16.msra.mxu0 %v2281
      %2357 = vmatprep.subr.bf16.mxu0 0
      %2358 = vmatpush1.bf16.msra.mxu0 %v2282
      %2359 = vmatprep.subr.bf16.mxu0 0
      %2360 = vmatpush1.bf16.msra.mxu0 %v2283
      %2361 = vmatprep.subr.bf16.mxu0 0
      %2362 = vmatpush1.bf16.msra.mxu0 %v2284
      %2363 = vmatprep.subr.bf16.mxu0 0
      %2364 = vmatpush1.bf16.msra.mxu0 %v2285
      %2365 = vmatprep.subr.bf16.mxu0 0
      %2366 = vmatpush1.bf16.msra.mxu0 %v2286
      %2367 = vmatprep.mubr.bf16.mxu0 %v700
      %2368 = vmatmul.mubr.bf16.gmra.mrb[0].mxu0 %v699
      %v2369 = vpop.f32.mrb[0].mxu0
      %v2370 = vadd.f32 0.0, %v2369
      %v2371 = vpop.f32.mrb[0].mxu0
      %v2372 = vpop.f32.mrb[0].mxu0
      %v2373 = vadd.f32 0.0, %v2372
      %v2374 = vpop.f32.mrb[0].mxu0
      %2375 = vdwg.mxu0
      %2376 = vmatprep.subr.bf16.mxu0 0
      %2377 = vmatpush1.bf16.msra.mxu0 %v2287
      %2378 = vmatprep.subr.bf16.mxu0 0
      %2379 = vmatpush1.bf16.msra.mxu0 %v2288
      %2380 = vmatprep.subr.bf16.mxu0 0
      %2381 = vmatpush1.bf16.msra.mxu0 %v2289
      %2382 = vmatprep.subr.bf16.mxu0 0
      %2383 = vmatpush1.bf16.msra.mxu0 %v2290
      %2384 = vmatprep.subr.bf16.mxu0 0
      %2385 = vmatpush1.bf16.msra.mxu0 %v2291
      %2386 = vmatprep.subr.bf16.mxu0 0
      %2387 = vmatpush1.bf16.msra.mxu0 %v2292
      %2388 = vmatprep.subr.bf16.mxu0 0
      %2389 = vmatpush1.bf16.msra.mxu0 %v2293
      %2390 = vmatprep.subr.bf16.mxu0 0
      %2391 = vmatpush1.bf16.msra.mxu0 %v2294
      %2392 = vmatprep.subr.bf16.mxu0 0
      %2393 = vmatpush1.bf16.msra.mxu0 %v2295
      %2394 = vmatprep.subr.bf16.mxu0 0
      %2395 = vmatpush1.bf16.msra.mxu0 %v2296
      %2396 = vmatprep.subr.bf16.mxu0 0
      %2397 = vmatpush1.bf16.msra.mxu0 %v2297
      %2398 = vmatprep.subr.bf16.mxu0 0
      %2399 = vmatpush1.bf16.msra.mxu0 %v2298
      %2400 = vmatprep.subr.bf16.mxu0 0
      %2401 = vmatpush1.bf16.msra.mxu0 %v2299
      %2402 = vmatprep.subr.bf16.mxu0 0
      %2403 = vmatpush1.bf16.msra.mxu0 %v2300
      %2404 = vmatprep.subr.bf16.mxu0 0
      %2405 = vmatpush1.bf16.msra.mxu0 %v2301
      %2406 = vmatprep.subr.bf16.mxu0 0
      %2407 = vmatpush1.bf16.msra.mxu0 %v2302
      %2408 = vmatprep.mubr.bf16.mxu0 %v702
      %2409 = vmatmul.mubr.bf16.gmra.mrb[0].mxu0 %v701
      %v2410 = vpop.f32.mrb[0].mxu0
      %v2411 = vadd.f32 %v2370, %v2410
      %v2412 = vpop.f32.mrb[0].mxu0
      %v2413 = vpop.f32.mrb[0].mxu0
      %v2414 = vadd.f32 %v2373, %v2413
      %v2415 = vpop.f32.mrb[0].mxu0
      %2416 = vdwg.mxu0
      %v2417 = vadd.f32 %v2076, %v2411
      %v2418 = vadd.f32 %v2077, %v2414
      %s2419 = scalar_lea.vmem %s2, 1280
      %v2420 = vld [vmem:[%s2419] sm:$0xf]
      %v2421 = vld [vmem:[%s2419 + $0x4] sm:$0xf]
      %v2422 = vld [vmem:[%s2419 + $0x8] sm:$0xf]
      %v2423 = vld [vmem:[%s2419 + $0xc] sm:$0xf]
      %v2424 = vld [vmem:[%s2419 + $0x10] sm:$0xf]
      %v2425 = vld [vmem:[%s2419 + $0x14] sm:$0xf]
      %v2426 = vld [vmem:[%s2419 + $0x18] sm:$0xf]
      %v2427 = vld [vmem:[%s2419 + $0x1c] sm:$0xf]
      %v2428 = vld [vmem:[%s2419 + $0x20] sm:$0xf]
      %v2429 = vld [vmem:[%s2419 + $0x24] sm:$0xf]
      %v2430 = vld [vmem:[%s2419 + $0x28] sm:$0xf]
      %v2431 = vld [vmem:[%s2419 + $0x2c] sm:$0xf]
      %v2432 = vld [vmem:[%s2419 + $0x30] sm:$0xf]
      %v2433 = vld [vmem:[%s2419 + $0x34] sm:$0xf]
      %v2434 = vld [vmem:[%s2419 + $0x38] sm:$0xf]
      %v2435 = vld [vmem:[%s2419 + $0x3c] sm:$0xf]
      %v2436 = vld [vmem:[%s2419 + $0x40] sm:$0xf]
      %v2437 = vld [vmem:[%s2419 + $0x44] sm:$0xf]
      %v2438 = vld [vmem:[%s2419 + $0x48] sm:$0xf]
      %v2439 = vld [vmem:[%s2419 + $0x4c] sm:$0xf]
      %v2440 = vld [vmem:[%s2419 + $0x50] sm:$0xf]
      %v2441 = vld [vmem:[%s2419 + $0x54] sm:$0xf]
      %v2442 = vld [vmem:[%s2419 + $0x58] sm:$0xf]
      %v2443 = vld [vmem:[%s2419 + $0x5c] sm:$0xf]
      %v2444 = vld [vmem:[%s2419 + $0x60] sm:$0xf]
      %v2445 = vld [vmem:[%s2419 + $0x64] sm:$0xf]
      %v2446 = vld [vmem:[%s2419 + $0x68] sm:$0xf]
      %v2447 = vld [vmem:[%s2419 + $0x6c] sm:$0xf]
      %v2448 = vld [vmem:[%s2419 + $0x70] sm:$0xf]
      %v2449 = vld [vmem:[%s2419 + $0x74] sm:$0xf]
      %v2450 = vld [vmem:[%s2419 + $0x78] sm:$0xf]
      %v2451 = vld [vmem:[%s2419 + $0x7c] sm:$0xf]
      %v2452 = vld [vmem:[%s2419 + $0x80] sm:$0xf]
      %v2453 = vld [vmem:[%s2419 + $0x84] sm:$0xf]
      %v2454 = vld [vmem:[%s2419 + $0x88] sm:$0xf]
      %v2455 = vld [vmem:[%s2419 + $0x8c] sm:$0xf]
      %v2456 = vld [vmem:[%s2419 + $0x90] sm:$0xf]
      %v2457 = vld [vmem:[%s2419 + $0x94] sm:$0xf]
      %v2458 = vld [vmem:[%s2419 + $0x98] sm:$0xf]
      %v2459 = vld [vmem:[%s2419 + $0x9c] sm:$0xf]
      %v2460 = vld [vmem:[%s2419 + $0xa0] sm:$0xf]
      %v2461 = vld [vmem:[%s2419 + $0xa4] sm:$0xf]
      %v2462 = vld [vmem:[%s2419 + $0xa8] sm:$0xf]
      %v2463 = vld [vmem:[%s2419 + $0xac] sm:$0xf]
      %v2464 = vld [vmem:[%s2419 + $0xb0] sm:$0xf]
      %v2465 = vld [vmem:[%s2419 + $0xb4] sm:$0xf]
      %v2466 = vld [vmem:[%s2419 + $0xb8] sm:$0xf]
      %v2467 = vld [vmem:[%s2419 + $0xbc] sm:$0xf]
      %v2468 = vld [vmem:[%s2419 + $0xc0] sm:$0xf]
      %v2469 = vld [vmem:[%s2419 + $0xc4] sm:$0xf]
      %v2470 = vld [vmem:[%s2419 + $0xc8] sm:$0xf]
      %v2471 = vld [vmem:[%s2419 + $0xcc] sm:$0xf]
      %v2472 = vld [vmem:[%s2419 + $0xd0] sm:$0xf]
      %v2473 = vld [vmem:[%s2419 + $0xd4] sm:$0xf]
      %v2474 = vld [vmem:[%s2419 + $0xd8] sm:$0xf]
      %v2475 = vld [vmem:[%s2419 + $0xdc] sm:$0xf]
      %v2476 = vld [vmem:[%s2419 + $0xe0] sm:$0xf]
      %v2477 = vld [vmem:[%s2419 + $0xe4] sm:$0xf]
      %v2478 = vld [vmem:[%s2419 + $0xe8] sm:$0xf]
      %v2479 = vld [vmem:[%s2419 + $0xec] sm:$0xf]
      %v2480 = vld [vmem:[%s2419 + $0xf0] sm:$0xf]
      %v2481 = vld [vmem:[%s2419 + $0xf4] sm:$0xf]
      %v2482 = vld [vmem:[%s2419 + $0xf8] sm:$0xf]
      %v2483 = vld [vmem:[%s2419 + $0xfc] sm:$0xf]
      %v2548 = vunpack.c.l.b16 %v2420
      %v2549 = vunpack.c.l.b16 %v2421
      %v2550 = vunpack.c.l.b16 %v2422
      %v2551 = vunpack.c.l.b16 %v2423
      %v2552 = vunpack.c.l.b16 %v2424
      %v2553 = vunpack.c.l.b16 %v2425
      %v2554 = vunpack.c.l.b16 %v2426
      %v2555 = vunpack.c.l.b16 %v2427
      %v2556 = vunpack.c.l.b16 %v2428
      %v2557 = vunpack.c.l.b16 %v2429
      %v2558 = vunpack.c.l.b16 %v2430
      %v2559 = vunpack.c.l.b16 %v2431
      %v2560 = vunpack.c.l.b16 %v2432
      %v2561 = vunpack.c.l.b16 %v2433
      %v2562 = vunpack.c.l.b16 %v2434
      %v2563 = vunpack.c.l.b16 %v2435
      %v2564 = vunpack.c.l.b16 %v2436
      %v2565 = vunpack.c.l.b16 %v2437
      %v2566 = vunpack.c.l.b16 %v2438
      %v2567 = vunpack.c.l.b16 %v2439
      %v2568 = vunpack.c.l.b16 %v2440
      %v2569 = vunpack.c.l.b16 %v2441
      %v2570 = vunpack.c.l.b16 %v2442
      %v2571 = vunpack.c.l.b16 %v2443
      %v2572 = vunpack.c.l.b16 %v2444
      %v2573 = vunpack.c.l.b16 %v2445
      %v2574 = vunpack.c.l.b16 %v2446
      %v2575 = vunpack.c.l.b16 %v2447
      %v2576 = vunpack.c.l.b16 %v2448
      %v2577 = vunpack.c.l.b16 %v2449
      %v2578 = vunpack.c.l.b16 %v2450
      %v2579 = vunpack.c.l.b16 %v2451
      %v2580 = vunpack.c.l.b16 %v2452
      %v2581 = vunpack.c.l.b16 %v2453
      %v2582 = vunpack.c.l.b16 %v2454
      %v2583 = vunpack.c.l.b16 %v2455
      %v2584 = vunpack.c.l.b16 %v2456
      %v2585 = vunpack.c.l.b16 %v2457
      %v2586 = vunpack.c.l.b16 %v2458
      %v2587 = vunpack.c.l.b16 %v2459
      %v2588 = vunpack.c.l.b16 %v2460
      %v2589 = vunpack.c.l.b16 %v2461
      %v2590 = vunpack.c.l.b16 %v2462
      %v2591 = vunpack.c.l.b16 %v2463
      %v2592 = vunpack.c.l.b16 %v2464
      %v2593 = vunpack.c.l.b16 %v2465
      %v2594 = vunpack.c.l.b16 %v2466
      %v2595 = vunpack.c.l.b16 %v2467
      %v2596 = vunpack.c.l.b16 %v2468
      %v2597 = vunpack.c.l.b16 %v2469
      %v2598 = vunpack.c.l.b16 %v2470
      %v2599 = vunpack.c.l.b16 %v2471
      %v2600 = vunpack.c.l.b16 %v2472
      %v2601 = vunpack.c.l.b16 %v2473
      %v2602 = vunpack.c.l.b16 %v2474
      %v2603 = vunpack.c.l.b16 %v2475
      %v2604 = vunpack.c.l.b16 %v2476
      %v2605 = vunpack.c.l.b16 %v2477
      %v2606 = vunpack.c.l.b16 %v2478
      %v2607 = vunpack.c.l.b16 %v2479
      %v2608 = vunpack.c.l.b16 %v2480
      %v2609 = vunpack.c.l.b16 %v2481
      %v2610 = vunpack.c.l.b16 %v2482
      %v2611 = vunpack.c.l.b16 %v2483
      %v2612 = vpack.c.b16 %v2549, %v2548
      %v2613 = vpack.c.b16 %v2551, %v2550
      %v2614 = vpack.c.b16 %v2553, %v2552
      %v2615 = vpack.c.b16 %v2555, %v2554
      %v2616 = vpack.c.b16 %v2557, %v2556
      %v2617 = vpack.c.b16 %v2559, %v2558
      %v2618 = vpack.c.b16 %v2561, %v2560
      %v2619 = vpack.c.b16 %v2563, %v2562
      %v2620 = vpack.c.b16 %v2565, %v2564
      %v2621 = vpack.c.b16 %v2567, %v2566
      %v2622 = vpack.c.b16 %v2569, %v2568
      %v2623 = vpack.c.b16 %v2571, %v2570
      %v2624 = vpack.c.b16 %v2573, %v2572
      %v2625 = vpack.c.b16 %v2575, %v2574
      %v2626 = vpack.c.b16 %v2577, %v2576
      %v2627 = vpack.c.b16 %v2579, %v2578
      %v2628 = vpack.c.b16 %v2581, %v2580
      %v2629 = vpack.c.b16 %v2583, %v2582
      %v2630 = vpack.c.b16 %v2585, %v2584
      %v2631 = vpack.c.b16 %v2587, %v2586
      %v2632 = vpack.c.b16 %v2589, %v2588
      %v2633 = vpack.c.b16 %v2591, %v2590
      %v2634 = vpack.c.b16 %v2593, %v2592
      %v2635 = vpack.c.b16 %v2595, %v2594
      %v2636 = vpack.c.b16 %v2597, %v2596
      %v2637 = vpack.c.b16 %v2599, %v2598
      %v2638 = vpack.c.b16 %v2601, %v2600
      %v2639 = vpack.c.b16 %v2603, %v2602
      %v2640 = vpack.c.b16 %v2605, %v2604
      %v2641 = vpack.c.b16 %v2607, %v2606
      %v2642 = vpack.c.b16 %v2609, %v2608
      %v2643 = vpack.c.b16 %v2611, %v2610
      %2676 = vmatprep.subr.bf16.mxu0 0
      %2677 = vmatpush1.bf16.msra.mxu0 %v2612
      %2678 = vmatprep.subr.bf16.mxu0 0
      %2679 = vmatpush1.bf16.msra.mxu0 %v2613
      %2680 = vmatprep.subr.bf16.mxu0 0
      %2681 = vmatpush1.bf16.msra.mxu0 %v2614
      %2682 = vmatprep.subr.bf16.mxu0 0
      %2683 = vmatpush1.bf16.msra.mxu0 %v2615
      %2684 = vmatprep.subr.bf16.mxu0 0
      %2685 = vmatpush1.bf16.msra.mxu0 %v2616
      %2686 = vmatprep.subr.bf16.mxu0 0
      %2687 = vmatpush1.bf16.msra.mxu0 %v2617
      %2688 = vmatprep.subr.bf16.mxu0 0
      %2689 = vmatpush1.bf16.msra.mxu0 %v2618
      %2690 = vmatprep.subr.bf16.mxu0 0
      %2691 = vmatpush1.bf16.msra.mxu0 %v2619
      %2692 = vmatprep.subr.bf16.mxu0 0
      %2693 = vmatpush1.bf16.msra.mxu0 %v2620
      %2694 = vmatprep.subr.bf16.mxu0 0
      %2695 = vmatpush1.bf16.msra.mxu0 %v2621
      %2696 = vmatprep.subr.bf16.mxu0 0
      %2697 = vmatpush1.bf16.msra.mxu0 %v2622
      %2698 = vmatprep.subr.bf16.mxu0 0
      %2699 = vmatpush1.bf16.msra.mxu0 %v2623
      %2700 = vmatprep.subr.bf16.mxu0 0
      %2701 = vmatpush1.bf16.msra.mxu0 %v2624
      %2702 = vmatprep.subr.bf16.mxu0 0
      %2703 = vmatpush1.bf16.msra.mxu0 %v2625
      %2704 = vmatprep.subr.bf16.mxu0 0
      %2705 = vmatpush1.bf16.msra.mxu0 %v2626
      %2706 = vmatprep.subr.bf16.mxu0 0
      %2707 = vmatpush1.bf16.msra.mxu0 %v2627
      %2708 = vmatprep.mubr.bf16.mxu0 %v704
      %2709 = vmatmul.mubr.bf16.gmra.mrb[0].mxu0 %v703
      %v2710 = vpop.f32.mrb[0].mxu0
      %v2711 = vadd.f32 0.0, %v2710
      %v2712 = vpop.f32.mrb[0].mxu0
      %v2713 = vpop.f32.mrb[0].mxu0
      %v2714 = vadd.f32 0.0, %v2713
      %v2715 = vpop.f32.mrb[0].mxu0
      %2716 = vdwg.mxu0
      %2717 = vmatprep.subr.bf16.mxu0 0
      %2718 = vmatpush1.bf16.msra.mxu0 %v2628
      %2719 = vmatprep.subr.bf16.mxu0 0
      %2720 = vmatpush1.bf16.msra.mxu0 %v2629
      %2721 = vmatprep.subr.bf16.mxu0 0
      %2722 = vmatpush1.bf16.msra.mxu0 %v2630
      %2723 = vmatprep.subr.bf16.mxu0 0
      %2724 = vmatpush1.bf16.msra.mxu0 %v2631
      %2725 = vmatprep.subr.bf16.mxu0 0
      %2726 = vmatpush1.bf16.msra.mxu0 %v2632
      %2727 = vmatprep.subr.bf16.mxu0 0
      %2728 = vmatpush1.bf16.msra.mxu0 %v2633
      %2729 = vmatprep.subr.bf16.mxu0 0
      %2730 = vmatpush1.bf16.msra.mxu0 %v2634
      %2731 = vmatprep.subr.bf16.mxu0 0
      %2732 = vmatpush1.bf16.msra.mxu0 %v2635
      %2733 = vmatprep.subr.bf16.mxu0 0
      %2734 = vmatpush1.bf16.msra.mxu0 %v2636
      %2735 = vmatprep.subr.bf16.mxu0 0
      %2736 = vmatpush1.bf16.msra.mxu0 %v2637
      %2737 = vmatprep.subr.bf16.mxu0 0
      %2738 = vmatpush1.bf16.msra.mxu0 %v2638
      %2739 = vmatprep.subr.bf16.mxu0 0
      %2740 = vmatpush1.bf16.msra.mxu0 %v2639
      %2741 = vmatprep.subr.bf16.mxu0 0
      %2742 = vmatpush1.bf16.msra.mxu0 %v2640
      %2743 = vmatprep.subr.bf16.mxu0 0
      %2744 = vmatpush1.bf16.msra.mxu0 %v2641
      %2745 = vmatprep.subr.bf16.mxu0 0
      %2746 = vmatpush1.bf16.msra.mxu0 %v2642
      %2747 = vmatprep.subr.bf16.mxu0 0
      %2748 = vmatpush1.bf16.msra.mxu0 %v2643
      %2749 = vmatprep.mubr.bf16.mxu0 %v706
      %2750 = vmatmul.mubr.bf16.gmra.mrb[0].mxu0 %v705
      %v2751 = vpop.f32.mrb[0].mxu0
      %v2752 = vadd.f32 %v2711, %v2751
      %v2753 = vpop.f32.mrb[0].mxu0
      %v2754 = vpop.f32.mrb[0].mxu0
      %v2755 = vadd.f32 %v2714, %v2754
      %v2756 = vpop.f32.mrb[0].mxu0
      %2757 = vdwg.mxu0
      %v2758 = vadd.f32 %v2417, %v2752
      %v2759 = vadd.f32 %v2418, %v2755
      %s2760 = scalar_lea.vmem %s2, 1536
      %v2761 = vld [vmem:[%s2760] sm:$0xf]
      %v2762 = vld [vmem:[%s2760 + $0x4] sm:$0xf]
      %v2763 = vld [vmem:[%s2760 + $0x8] sm:$0xf]
      %v2764 = vld [vmem:[%s2760 + $0xc] sm:$0xf]
      %v2765 = vld [vmem:[%s2760 + $0x10] sm:$0xf]
      %v2766 = vld [vmem:[%s2760 + $0x14] sm:$0xf]
      %v2767 = vld [vmem:[%s2760 + $0x18] sm:$0xf]
      %v2768 = vld [vmem:[%s2760 + $0x1c] sm:$0xf]
      %v2769 = vld [vmem:[%s2760 + $0x20] sm:$0xf]
      %v2770 = vld [vmem:[%s2760 + $0x24] sm:$0xf]
      %v2771 = vld [vmem:[%s2760 + $0x28] sm:$0xf]
      %v2772 = vld [vmem:[%s2760 + $0x2c] sm:$0xf]
      %v2773 = vld [vmem:[%s2760 + $0x30] sm:$0xf]
      %v2774 = vld [vmem:[%s2760 + $0x34] sm:$0xf]
      %v2775 = vld [vmem:[%s2760 + $0x38] sm:$0xf]
      %v2776 = vld [vmem:[%s2760 + $0x3c] sm:$0xf]
      %v2777 = vld [vmem:[%s2760 + $0x40] sm:$0xf]
      %v2778 = vld [vmem:[%s2760 + $0x44] sm:$0xf]
      %v2779 = vld [vmem:[%s2760 + $0x48] sm:$0xf]
      %v2780 = vld [vmem:[%s2760 + $0x4c] sm:$0xf]
      %v2781 = vld [vmem:[%s2760 + $0x50] sm:$0xf]
      %v2782 = vld [vmem:[%s2760 + $0x54] sm:$0xf]
      %v2783 = vld [vmem:[%s2760 + $0x58] sm:$0xf]
      %v2784 = vld [vmem:[%s2760 + $0x5c] sm:$0xf]
      %v2785 = vld [vmem:[%s2760 + $0x60] sm:$0xf]
      %v2786 = vld [vmem:[%s2760 + $0x64] sm:$0xf]
      %v2787 = vld [vmem:[%s2760 + $0x68] sm:$0xf]
      %v2788 = vld [vmem:[%s2760 + $0x6c] sm:$0xf]
      %v2789 = vld [vmem:[%s2760 + $0x70] sm:$0xf]
      %v2790 = vld [vmem:[%s2760 + $0x74] sm:$0xf]
      %v2791 = vld [vmem:[%s2760 + $0x78] sm:$0xf]
      %v2792 = vld [vmem:[%s2760 + $0x7c] sm:$0xf]
      %v2793 = vld [vmem:[%s2760 + $0x80] sm:$0xf]
      %v2794 = vld [vmem:[%s2760 + $0x84] sm:$0xf]
      %v2795 = vld [vmem:[%s2760 + $0x88] sm:$0xf]
      %v2796 = vld [vmem:[%s2760 + $0x8c] sm:$0xf]
      %v2797 = vld [vmem:[%s2760 + $0x90] sm:$0xf]
      %v2798 = vld [vmem:[%s2760 + $0x94] sm:$0xf]
      %v2799 = vld [vmem:[%s2760 + $0x98] sm:$0xf]
      %v2800 = vld [vmem:[%s2760 + $0x9c] sm:$0xf]
      %v2801 = vld [vmem:[%s2760 + $0xa0] sm:$0xf]
      %v2802 = vld [vmem:[%s2760 + $0xa4] sm:$0xf]
      %v2803 = vld [vmem:[%s2760 + $0xa8] sm:$0xf]
      %v2804 = vld [vmem:[%s2760 + $0xac] sm:$0xf]
      %v2805 = vld [vmem:[%s2760 + $0xb0] sm:$0xf]
      %v2806 = vld [vmem:[%s2760 + $0xb4] sm:$0xf]
      %v2807 = vld [vmem:[%s2760 + $0xb8] sm:$0xf]
      %v2808 = vld [vmem:[%s2760 + $0xbc] sm:$0xf]
      %v2809 = vld [vmem:[%s2760 + $0xc0] sm:$0xf]
      %v2810 = vld [vmem:[%s2760 + $0xc4] sm:$0xf]
      %v2811 = vld [vmem:[%s2760 + $0xc8] sm:$0xf]
      %v2812 = vld [vmem:[%s2760 + $0xcc] sm:$0xf]
      %v2813 = vld [vmem:[%s2760 + $0xd0] sm:$0xf]
      %v2814 = vld [vmem:[%s2760 + $0xd4] sm:$0xf]
      %v2815 = vld [vmem:[%s2760 + $0xd8] sm:$0xf]
      %v2816 = vld [vmem:[%s2760 + $0xdc] sm:$0xf]
      %v2817 = vld [vmem:[%s2760 + $0xe0] sm:$0xf]
      %v2818 = vld [vmem:[%s2760 + $0xe4] sm:$0xf]
      %v2819 = vld [vmem:[%s2760 + $0xe8] sm:$0xf]
      %v2820 = vld [vmem:[%s2760 + $0xec] sm:$0xf]
      %v2821 = vld [vmem:[%s2760 + $0xf0] sm:$0xf]
      %v2822 = vld [vmem:[%s2760 + $0xf4] sm:$0xf]
      %v2823 = vld [vmem:[%s2760 + $0xf8] sm:$0xf]
      %v2824 = vld [vmem:[%s2760 + $0xfc] sm:$0xf]
      %v2889 = vunpack.c.l.b16 %v2761
      %v2890 = vunpack.c.l.b16 %v2762
      %v2891 = vunpack.c.l.b16 %v2763
      %v2892 = vunpack.c.l.b16 %v2764
      %v2893 = vunpack.c.l.b16 %v2765
      %v2894 = vunpack.c.l.b16 %v2766
      %v2895 = vunpack.c.l.b16 %v2767
      %v2896 = vunpack.c.l.b16 %v2768
      %v2897 = vunpack.c.l.b16 %v2769
      %v2898 = vunpack.c.l.b16 %v2770
      %v2899 = vunpack.c.l.b16 %v2771
      %v2900 = vunpack.c.l.b16 %v2772
      %v2901 = vunpack.c.l.b16 %v2773
      %v2902 = vunpack.c.l.b16 %v2774
      %v2903 = vunpack.c.l.b16 %v2775
      %v2904 = vunpack.c.l.b16 %v2776
      %v2905 = vunpack.c.l.b16 %v2777
      %v2906 = vunpack.c.l.b16 %v2778
      %v2907 = vunpack.c.l.b16 %v2779
      %v2908 = vunpack.c.l.b16 %v2780
      %v2909 = vunpack.c.l.b16 %v2781
      %v2910 = vunpack.c.l.b16 %v2782
      %v2911 = vunpack.c.l.b16 %v2783
      %v2912 = vunpack.c.l.b16 %v2784
      %v2913 = vunpack.c.l.b16 %v2785
      %v2914 = vunpack.c.l.b16 %v2786
      %v2915 = vunpack.c.l.b16 %v2787
      %v2916 = vunpack.c.l.b16 %v2788
      %v2917 = vunpack.c.l.b16 %v2789
      %v2918 = vunpack.c.l.b16 %v2790
      %v2919 = vunpack.c.l.b16 %v2791
      %v2920 = vunpack.c.l.b16 %v2792
      %v2921 = vunpack.c.l.b16 %v2793
      %v2922 = vunpack.c.l.b16 %v2794
      %v2923 = vunpack.c.l.b16 %v2795
      %v2924 = vunpack.c.l.b16 %v2796
      %v2925 = vunpack.c.l.b16 %v2797
      %v2926 = vunpack.c.l.b16 %v2798
      %v2927 = vunpack.c.l.b16 %v2799
      %v2928 = vunpack.c.l.b16 %v2800
      %v2929 = vunpack.c.l.b16 %v2801
      %v2930 = vunpack.c.l.b16 %v2802
      %v2931 = vunpack.c.l.b16 %v2803
      %v2932 = vunpack.c.l.b16 %v2804
      %v2933 = vunpack.c.l.b16 %v2805
      %v2934 = vunpack.c.l.b16 %v2806
      %v2935 = vunpack.c.l.b16 %v2807
      %v2936 = vunpack.c.l.b16 %v2808
      %v2937 = vunpack.c.l.b16 %v2809
      %v2938 = vunpack.c.l.b16 %v2810
      %v2939 = vunpack.c.l.b16 %v2811
      %v2940 = vunpack.c.l.b16 %v2812
      %v2941 = vunpack.c.l.b16 %v2813
      %v2942 = vunpack.c.l.b16 %v2814
      %v2943 = vunpack.c.l.b16 %v2815
      %v2944 = vunpack.c.l.b16 %v2816
      %v2945 = vunpack.c.l.b16 %v2817
      %v2946 = vunpack.c.l.b16 %v2818
      %v2947 = vunpack.c.l.b16 %v2819
      %v2948 = vunpack.c.l.b16 %v2820
      %v2949 = vunpack.c.l.b16 %v2821
      %v2950 = vunpack.c.l.b16 %v2822
      %v2951 = vunpack.c.l.b16 %v2823
      %v2952 = vunpack.c.l.b16 %v2824
      %v2953 = vpack.c.b16 %v2890, %v2889
      %v2954 = vpack.c.b16 %v2892, %v2891
      %v2955 = vpack.c.b16 %v2894, %v2893
      %v2956 = vpack.c.b16 %v2896, %v2895
      %v2957 = vpack.c.b16 %v2898, %v2897
      %v2958 = vpack.c.b16 %v2900, %v2899
      %v2959 = vpack.c.b16 %v2902, %v2901
      %v2960 = vpack.c.b16 %v2904, %v2903
      %v2961 = vpack.c.b16 %v2906, %v2905
      %v2962 = vpack.c.b16 %v2908, %v2907
      %v2963 = vpack.c.b16 %v2910, %v2909
      %v2964 = vpack.c.b16 %v2912, %v2911
      %v2965 = vpack.c.b16 %v2914, %v2913
      %v2966 = vpack.c.b16 %v2916, %v2915
      %v2967 = vpack.c.b16 %v2918, %v2917
      %v2968 = vpack.c.b16 %v2920, %v2919
      %v2969 = vpack.c.b16 %v2922, %v2921
      %v2970 = vpack.c.b16 %v2924, %v2923
      %v2971 = vpack.c.b16 %v2926, %v2925
      %v2972 = vpack.c.b16 %v2928, %v2927
      %v2973 = vpack.c.b16 %v2930, %v2929
      %v2974 = vpack.c.b16 %v2932, %v2931
      %v2975 = vpack.c.b16 %v2934, %v2933
      %v2976 = vpack.c.b16 %v2936, %v2935
      %v2977 = vpack.c.b16 %v2938, %v2937
      %v2978 = vpack.c.b16 %v2940, %v2939
      %v2979 = vpack.c.b16 %v2942, %v2941
      %v2980 = vpack.c.b16 %v2944, %v2943
      %v2981 = vpack.c.b16 %v2946, %v2945
      %v2982 = vpack.c.b16 %v2948, %v2947
      %v2983 = vpack.c.b16 %v2950, %v2949
      %v2984 = vpack.c.b16 %v2952, %v2951
      %3017 = vmatprep.subr.bf16.mxu0 0
      %3018 = vmatpush1.bf16.msra.mxu0 %v2953
      %3019 = vmatprep.subr.bf16.mxu0 0
      %3020 = vmatpush1.bf16.msra.mxu0 %v2954
      %3021 = vmatprep.subr.bf16.mxu0 0
      %3022 = vmatpush1.bf16.msra.mxu0 %v2955
      %3023 = vmatprep.subr.bf16.mxu0 0
      %3024 = vmatpush1.bf16.msra.mxu0 %v2956
      %3025 = vmatprep.subr.bf16.mxu0 0
      %3026 = vmatpush1.bf16.msra.mxu0 %v2957
      %3027 = vmatprep.subr.bf16.mxu0 0
      %3028 = vmatpush1.bf16.msra.mxu0 %v2958
      %3029 = vmatprep.subr.bf16.mxu0 0
      %3030 = vmatpush1.bf16.msra.mxu0 %v2959
      %3031 = vmatprep.subr.bf16.mxu0 0
      %3032 = vmatpush1.bf16.msra.mxu0 %v2960
      %3033 = vmatprep.subr.bf16.mxu0 0
      %3034 = vmatpush1.bf16.msra.mxu0 %v2961
      %3035 = vmatprep.subr.bf16.mxu0 0
      %3036 = vmatpush1.bf16.msra.mxu0 %v2962
      %3037 = vmatprep.subr.bf16.mxu0 0
      %3038 = vmatpush1.bf16.msra.mxu0 %v2963
      %3039 = vmatprep.subr.bf16.mxu0 0
      %3040 = vmatpush1.bf16.msra.mxu0 %v2964
      %3041 = vmatprep.subr.bf16.mxu0 0
      %3042 = vmatpush1.bf16.msra.mxu0 %v2965
      %3043 = vmatprep.subr.bf16.mxu0 0
      %3044 = vmatpush1.bf16.msra.mxu0 %v2966
      %3045 = vmatprep.subr.bf16.mxu0 0
      %3046 = vmatpush1.bf16.msra.mxu0 %v2967
      %3047 = vmatprep.subr.bf16.mxu0 0
      %3048 = vmatpush1.bf16.msra.mxu0 %v2968
      %3049 = vmatprep.mubr.bf16.mxu0 %v708
      %3050 = vmatmul.mubr.bf16.gmra.mrb[0].mxu0 %v707
      %v3051 = vpop.f32.mrb[0].mxu0
      %v3052 = vadd.f32 0.0, %v3051
      %v3053 = vpop.f32.mrb[0].mxu0
      %v3054 = vpop.f32.mrb[0].mxu0
      %v3055 = vadd.f32 0.0, %v3054
      %v3056 = vpop.f32.mrb[0].mxu0
      %3057 = vdwg.mxu0
      %3058 = vmatprep.subr.bf16.mxu0 0
      %3059 = vmatpush1.bf16.msra.mxu0 %v2969
      %3060 = vmatprep.subr.bf16.mxu0 0
      %3061 = vmatpush1.bf16.msra.mxu0 %v2970
      %3062 = vmatprep.subr.bf16.mxu0 0
      %3063 = vmatpush1.bf16.msra.mxu0 %v2971
      %3064 = vmatprep.subr.bf16.mxu0 0
      %3065 = vmatpush1.bf16.msra.mxu0 %v2972
      %3066 = vmatprep.subr.bf16.mxu0 0
      %3067 = vmatpush1.bf16.msra.mxu0 %v2973
      %3068 = vmatprep.subr.bf16.mxu0 0
      %3069 = vmatpush1.bf16.msra.mxu0 %v2974
      %3070 = vmatprep.subr.bf16.mxu0 0
      %3071 = vmatpush1.bf16.msra.mxu0 %v2975
      %3072 = vmatprep.subr.bf16.mxu0 0
      %3073 = vmatpush1.bf16.msra.mxu0 %v2976
      %3074 = vmatprep.subr.bf16.mxu0 0
      %3075 = vmatpush1.bf16.msra.mxu0 %v2977
      %3076 = vmatprep.subr.bf16.mxu0 0
      %3077 = vmatpush1.bf16.msra.mxu0 %v2978
      %3078 = vmatprep.subr.bf16.mxu0 0
      %3079 = vmatpush1.bf16.msra.mxu0 %v2979
      %3080 = vmatprep.subr.bf16.mxu0 0
      %3081 = vmatpush1.bf16.msra.mxu0 %v2980
      %3082 = vmatprep.subr.bf16.mxu0 0
      %3083 = vmatpush1.bf16.msra.mxu0 %v2981
      %3084 = vmatprep.subr.bf16.mxu0 0
      %3085 = vmatpush1.bf16.msra.mxu0 %v2982
      %3086 = vmatprep.subr.bf16.mxu0 0
      %3087 = vmatpush1.bf16.msra.mxu0 %v2983
      %3088 = vmatprep.subr.bf16.mxu0 0
      %3089 = vmatpush1.bf16.msra.mxu0 %v2984
      %3090 = vmatprep.mubr.bf16.mxu0 %v710
      %3091 = vmatmul.mubr.bf16.gmra.mrb[0].mxu0 %v709
      %v3092 = vpop.f32.mrb[0].mxu0
      %v3093 = vadd.f32 %v3052, %v3092
      %v3094 = vpop.f32.mrb[0].mxu0
      %v3095 = vpop.f32.mrb[0].mxu0
      %v3096 = vadd.f32 %v3055, %v3095
      %v3097 = vpop.f32.mrb[0].mxu0
      %3098 = vdwg.mxu0
      %v3099 = vadd.f32 %v2758, %v3093
      %v3100 = vadd.f32 %v2759, %v3096
      %s3101 = scalar_lea.vmem %s2, 1792
      %v3102 = vld [vmem:[%s3101] sm:$0xf]
      %v3103 = vld [vmem:[%s3101 + $0x4] sm:$0xf]
      %v3104 = vld [vmem:[%s3101 + $0x8] sm:$0xf]
      %v3105 = vld [vmem:[%s3101 + $0xc] sm:$0xf]
      %v3106 = vld [vmem:[%s3101 + $0x10] sm:$0xf]
      %v3107 = vld [vmem:[%s3101 + $0x14] sm:$0xf]
      %v3108 = vld [vmem:[%s3101 + $0x18] sm:$0xf]
      %v3109 = vld [vmem:[%s3101 + $0x1c] sm:$0xf]
      %v3110 = vld [vmem:[%s3101 + $0x20] sm:$0xf]
      %v3111 = vld [vmem:[%s3101 + $0x24] sm:$0xf]
      %v3112 = vld [vmem:[%s3101 + $0x28] sm:$0xf]
      %v3113 = vld [vmem:[%s3101 + $0x2c] sm:$0xf]
      %v3114 = vld [vmem:[%s3101 + $0x30] sm:$0xf]
      %v3115 = vld [vmem:[%s3101 + $0x34] sm:$0xf]
      %v3116 = vld [vmem:[%s3101 + $0x38] sm:$0xf]
      %v3117 = vld [vmem:[%s3101 + $0x3c] sm:$0xf]
      %v3118 = vld [vmem:[%s3101 + $0x40] sm:$0xf]
      %v3119 = vld [vmem:[%s3101 + $0x44] sm:$0xf]
      %v3120 = vld [vmem:[%s3101 + $0x48] sm:$0xf]
      %v3121 = vld [vmem:[%s3101 + $0x4c] sm:$0xf]
      %v3122 = vld [vmem:[%s3101 + $0x50] sm:$0xf]
      %v3123 = vld [vmem:[%s3101 + $0x54] sm:$0xf]
      %v3124 = vld [vmem:[%s3101 + $0x58] sm:$0xf]
      %v3125 = vld [vmem:[%s3101 + $0x5c] sm:$0xf]
      %v3126 = vld [vmem:[%s3101 + $0x60] sm:$0xf]
      %v3127 = vld [vmem:[%s3101 + $0x64] sm:$0xf]
      %v3128 = vld [vmem:[%s3101 + $0x68] sm:$0xf]
      %v3129 = vld [vmem:[%s3101 + $0x6c] sm:$0xf]
      %v3130 = vld [vmem:[%s3101 + $0x70] sm:$0xf]
      %v3131 = vld [vmem:[%s3101 + $0x74] sm:$0xf]
      %v3132 = vld [vmem:[%s3101 + $0x78] sm:$0xf]
      %v3133 = vld [vmem:[%s3101 + $0x7c] sm:$0xf]
      %v3134 = vld [vmem:[%s3101 + $0x80] sm:$0xf]
      %v3135 = vld [vmem:[%s3101 + $0x84] sm:$0xf]
      %v3136 = vld [vmem:[%s3101 + $0x88] sm:$0xf]
      %v3137 = vld [vmem:[%s3101 + $0x8c] sm:$0xf]
      %v3138 = vld [vmem:[%s3101 + $0x90] sm:$0xf]
      %v3139 = vld [vmem:[%s3101 + $0x94] sm:$0xf]
      %v3140 = vld [vmem:[%s3101 + $0x98] sm:$0xf]
      %v3141 = vld [vmem:[%s3101 + $0x9c] sm:$0xf]
      %v3142 = vld [vmem:[%s3101 + $0xa0] sm:$0xf]
      %v3143 = vld [vmem:[%s3101 + $0xa4] sm:$0xf]
      %v3144 = vld [vmem:[%s3101 + $0xa8] sm:$0xf]
      %v3145 = vld [vmem:[%s3101 + $0xac] sm:$0xf]
      %v3146 = vld [vmem:[%s3101 + $0xb0] sm:$0xf]
      %v3147 = vld [vmem:[%s3101 + $0xb4] sm:$0xf]
      %v3148 = vld [vmem:[%s3101 + $0xb8] sm:$0xf]
      %v3149 = vld [vmem:[%s3101 + $0xbc] sm:$0xf]
      %v3150 = vld [vmem:[%s3101 + $0xc0] sm:$0xf]
      %v3151 = vld [vmem:[%s3101 + $0xc4] sm:$0xf]
      %v3152 = vld [vmem:[%s3101 + $0xc8] sm:$0xf]
      %v3153 = vld [vmem:[%s3101 + $0xcc] sm:$0xf]
      %v3154 = vld [vmem:[%s3101 + $0xd0] sm:$0xf]
      %v3155 = vld [vmem:[%s3101 + $0xd4] sm:$0xf]
      %v3156 = vld [vmem:[%s3101 + $0xd8] sm:$0xf]
      %v3157 = vld [vmem:[%s3101 + $0xdc] sm:$0xf]
      %v3158 = vld [vmem:[%s3101 + $0xe0] sm:$0xf]
      %v3159 = vld [vmem:[%s3101 + $0xe4] sm:$0xf]
      %v3160 = vld [vmem:[%s3101 + $0xe8] sm:$0xf]
      %v3161 = vld [vmem:[%s3101 + $0xec] sm:$0xf]
      %v3162 = vld [vmem:[%s3101 + $0xf0] sm:$0xf]
      %v3163 = vld [vmem:[%s3101 + $0xf4] sm:$0xf]
      %v3164 = vld [vmem:[%s3101 + $0xf8] sm:$0xf]
      %v3165 = vld [vmem:[%s3101 + $0xfc] sm:$0xf]
      %v3230 = vunpack.c.l.b16 %v3102
      %v3231 = vunpack.c.l.b16 %v3103
      %v3232 = vunpack.c.l.b16 %v3104
      %v3233 = vunpack.c.l.b16 %v3105
      %v3234 = vunpack.c.l.b16 %v3106
      %v3235 = vunpack.c.l.b16 %v3107
      %v3236 = vunpack.c.l.b16 %v3108
      %v3237 = vunpack.c.l.b16 %v3109
      %v3238 = vunpack.c.l.b16 %v3110
      %v3239 = vunpack.c.l.b16 %v3111
      %v3240 = vunpack.c.l.b16 %v3112
      %v3241 = vunpack.c.l.b16 %v3113
      %v3242 = vunpack.c.l.b16 %v3114
      %v3243 = vunpack.c.l.b16 %v3115
      %v3244 = vunpack.c.l.b16 %v3116
      %v3245 = vunpack.c.l.b16 %v3117
      %v3246 = vunpack.c.l.b16 %v3118
      %v3247 = vunpack.c.l.b16 %v3119
      %v3248 = vunpack.c.l.b16 %v3120
      %v3249 = vunpack.c.l.b16 %v3121
      %v3250 = vunpack.c.l.b16 %v3122
      %v3251 = vunpack.c.l.b16 %v3123
      %v3252 = vunpack.c.l.b16 %v3124
      %v3253 = vunpack.c.l.b16 %v3125
      %v3254 = vunpack.c.l.b16 %v3126
      %v3255 = vunpack.c.l.b16 %v3127
      %v3256 = vunpack.c.l.b16 %v3128
      %v3257 = vunpack.c.l.b16 %v3129
      %v3258 = vunpack.c.l.b16 %v3130
      %v3259 = vunpack.c.l.b16 %v3131
      %v3260 = vunpack.c.l.b16 %v3132
      %v3261 = vunpack.c.l.b16 %v3133
      %v3262 = vunpack.c.l.b16 %v3134
      %v3263 = vunpack.c.l.b16 %v3135
      %v3264 = vunpack.c.l.b16 %v3136
      %v3265 = vunpack.c.l.b16 %v3137
      %v3266 = vunpack.c.l.b16 %v3138
      %v3267 = vunpack.c.l.b16 %v3139
      %v3268 = vunpack.c.l.b16 %v3140
      %v3269 = vunpack.c.l.b16 %v3141
      %v3270 = vunpack.c.l.b16 %v3142
      %v3271 = vunpack.c.l.b16 %v3143
      %v3272 = vunpack.c.l.b16 %v3144
      %v3273 = vunpack.c.l.b16 %v3145
      %v3274 = vunpack.c.l.b16 %v3146
      %v3275 = vunpack.c.l.b16 %v3147
      %v3276 = vunpack.c.l.b16 %v3148
      %v3277 = vunpack.c.l.b16 %v3149
      %v3278 = vunpack.c.l.b16 %v3150
      %v3279 = vunpack.c.l.b16 %v3151
      %v3280 = vunpack.c.l.b16 %v3152
      %v3281 = vunpack.c.l.b16 %v3153
      %v3282 = vunpack.c.l.b16 %v3154
      %v3283 = vunpack.c.l.b16 %v3155
      %v3284 = vunpack.c.l.b16 %v3156
      %v3285 = vunpack.c.l.b16 %v3157
      %v3286 = vunpack.c.l.b16 %v3158
      %v3287 = vunpack.c.l.b16 %v3159
      %v3288 = vunpack.c.l.b16 %v3160
      %v3289 = vunpack.c.l.b16 %v3161
      %v3290 = vunpack.c.l.b16 %v3162
      %v3291 = vunpack.c.l.b16 %v3163
      %v3292 = vunpack.c.l.b16 %v3164
      %v3293 = vunpack.c.l.b16 %v3165
      %v3294 = vpack.c.b16 %v3231, %v3230
      %v3295 = vpack.c.b16 %v3233, %v3232
      %v3296 = vpack.c.b16 %v3235, %v3234
      %v3297 = vpack.c.b16 %v3237, %v3236
      %v3298 = vpack.c.b16 %v3239, %v3238
      %v3299 = vpack.c.b16 %v3241, %v3240
      %v3300 = vpack.c.b16 %v3243, %v3242
      %v3301 = vpack.c.b16 %v3245, %v3244
      %v3302 = vpack.c.b16 %v3247, %v3246
      %v3303 = vpack.c.b16 %v3249, %v3248
      %v3304 = vpack.c.b16 %v3251, %v3250
      %v3305 = vpack.c.b16 %v3253, %v3252
      %v3306 = vpack.c.b16 %v3255, %v3254
      %v3307 = vpack.c.b16 %v3257, %v3256
      %v3308 = vpack.c.b16 %v3259, %v3258
      %v3309 = vpack.c.b16 %v3261, %v3260
      %v3310 = vpack.c.b16 %v3263, %v3262
      %v3311 = vpack.c.b16 %v3265, %v3264
      %v3312 = vpack.c.b16 %v3267, %v3266
      %v3313 = vpack.c.b16 %v3269, %v3268
      %v3314 = vpack.c.b16 %v3271, %v3270
      %v3315 = vpack.c.b16 %v3273, %v3272
      %v3316 = vpack.c.b16 %v3275, %v3274
      %v3317 = vpack.c.b16 %v3277, %v3276
      %v3318 = vpack.c.b16 %v3279, %v3278
      %v3319 = vpack.c.b16 %v3281, %v3280
      %v3320 = vpack.c.b16 %v3283, %v3282
      %v3321 = vpack.c.b16 %v3285, %v3284
      %v3322 = vpack.c.b16 %v3287, %v3286
      %v3323 = vpack.c.b16 %v3289, %v3288
      %v3324 = vpack.c.b16 %v3291, %v3290
      %v3325 = vpack.c.b16 %v3293, %v3292
      %3358 = vmatprep.subr.bf16.mxu0 0
      %3359 = vmatpush1.bf16.msra.mxu0 %v3294
      %3360 = vmatprep.subr.bf16.mxu0 0
      %3361 = vmatpush1.bf16.msra.mxu0 %v3295
      %3362 = vmatprep.subr.bf16.mxu0 0
      %3363 = vmatpush1.bf16.msra.mxu0 %v3296
      %3364 = vmatprep.subr.bf16.mxu0 0
      %3365 = vmatpush1.bf16.msra.mxu0 %v3297
      %3366 = vmatprep.subr.bf16.mxu0 0
      %3367 = vmatpush1.bf16.msra.mxu0 %v3298
      %3368 = vmatprep.subr.bf16.mxu0 0
      %3369 = vmatpush1.bf16.msra.mxu0 %v3299
      %3370 = vmatprep.subr.bf16.mxu0 0
      %3371 = vmatpush1.bf16.msra.mxu0 %v3300
      %3372 = vmatprep.subr.bf16.mxu0 0
      %3373 = vmatpush1.bf16.msra.mxu0 %v3301
      %3374 = vmatprep.subr.bf16.mxu0 0
      %3375 = vmatpush1.bf16.msra.mxu0 %v3302
      %3376 = vmatprep.subr.bf16.mxu0 0
      %3377 = vmatpush1.bf16.msra.mxu0 %v3303
      %3378 = vmatprep.subr.bf16.mxu0 0
      %3379 = vmatpush1.bf16.msra.mxu0 %v3304
      %3380 = vmatprep.subr.bf16.mxu0 0
      %3381 = vmatpush1.bf16.msra.mxu0 %v3305
      %3382 = vmatprep.subr.bf16.mxu0 0
      %3383 = vmatpush1.bf16.msra.mxu0 %v3306
      %3384 = vmatprep.subr.bf16.mxu0 0
      %3385 = vmatpush1.bf16.msra.mxu0 %v3307
      %3386 = vmatprep.subr.bf16.mxu0 0
      %3387 = vmatpush1.bf16.msra.mxu0 %v3308
      %3388 = vmatprep.subr.bf16.mxu0 0
      %3389 = vmatpush1.bf16.msra.mxu0 %v3309
      %3390 = vmatprep.mubr.bf16.mxu0 %v712
      %3391 = vmatmul.mubr.bf16.gmra.mrb[0].mxu0 %v711
      %v3392 = vpop.f32.mrb[0].mxu0
      %v3393 = vadd.f32 0.0, %v3392
      %v3394 = vpop.f32.mrb[0].mxu0
      %v3395 = vpop.f32.mrb[0].mxu0
      %v3396 = vadd.f32 0.0, %v3395
      %v3397 = vpop.f32.mrb[0].mxu0
      %3398 = vdwg.mxu0
      %3399 = vmatprep.subr.bf16.mxu0 0
      %3400 = vmatpush1.bf16.msra.mxu0 %v3310
      %3401 = vmatprep.subr.bf16.mxu0 0
      %3402 = vmatpush1.bf16.msra.mxu0 %v3311
      %3403 = vmatprep.subr.bf16.mxu0 0
      %3404 = vmatpush1.bf16.msra.mxu0 %v3312
      %3405 = vmatprep.subr.bf16.mxu0 0
      %3406 = vmatpush1.bf16.msra.mxu0 %v3313
      %3407 = vmatprep.subr.bf16.mxu0 0
      %3408 = vmatpush1.bf16.msra.mxu0 %v3314
      %3409 = vmatprep.subr.bf16.mxu0 0
      %3410 = vmatpush1.bf16.msra.mxu0 %v3315
      %3411 = vmatprep.subr.bf16.mxu0 0
      %3412 = vmatpush1.bf16.msra.mxu0 %v3316
      %3413 = vmatprep.subr.bf16.mxu0 0
      %3414 = vmatpush1.bf16.msra.mxu0 %v3317
      %3415 = vmatprep.subr.bf16.mxu0 0
      %3416 = vmatpush1.bf16.msra.mxu0 %v3318
      %3417 = vmatprep.subr.bf16.mxu0 0
      %3418 = vmatpush1.bf16.msra.mxu0 %v3319
      %3419 = vmatprep.subr.bf16.mxu0 0
      %3420 = vmatpush1.bf16.msra.mxu0 %v3320
      %3421 = vmatprep.subr.bf16.mxu0 0
      %3422 = vmatpush1.bf16.msra.mxu0 %v3321
      %3423 = vmatprep.subr.bf16.mxu0 0
      %3424 = vmatpush1.bf16.msra.mxu0 %v3322
      %3425 = vmatprep.subr.bf16.mxu0 0
      %3426 = vmatpush1.bf16.msra.mxu0 %v3323
      %3427 = vmatprep.subr.bf16.mxu0 0
      %3428 = vmatpush1.bf16.msra.mxu0 %v3324
      %3429 = vmatprep.subr.bf16.mxu0 0
      %3430 = vmatpush1.bf16.msra.mxu0 %v3325
      %3431 = vmatprep.mubr.bf16.mxu0 %v714
      %3432 = vmatmul.mubr.bf16.gmra.mrb[0].mxu0 %v713
      %v3433 = vpop.f32.mrb[0].mxu0
      %v3434 = vadd.f32 %v3393, %v3433
      %v3435 = vpop.f32.mrb[0].mxu0
      %v3436 = vpop.f32.mrb[0].mxu0
      %v3437 = vadd.f32 %v3396, %v3436
      %v3438 = vpop.f32.mrb[0].mxu0
      %3439 = vdwg.mxu0
      %v3440 = vadd.f32 %v3099, %v3434
      %v3441 = vadd.f32 %v3100, %v3437
      %s3442 = scalar_lea.vmem %s2, 2048
      %v3443 = vld [vmem:[%s3442] sm:$0xf]
      %v3444 = vld [vmem:[%s3442 + $0x4] sm:$0xf]
      %v3445 = vld [vmem:[%s3442 + $0x8] sm:$0xf]
      %v3446 = vld [vmem:[%s3442 + $0xc] sm:$0xf]
      %v3447 = vld [vmem:[%s3442 + $0x10] sm:$0xf]
      %v3448 = vld [vmem:[%s3442 + $0x14] sm:$0xf]
      %v3449 = vld [vmem:[%s3442 + $0x18] sm:$0xf]
      %v3450 = vld [vmem:[%s3442 + $0x1c] sm:$0xf]
      %v3451 = vld [vmem:[%s3442 + $0x20] sm:$0xf]
      %v3452 = vld [vmem:[%s3442 + $0x24] sm:$0xf]
      %v3453 = vld [vmem:[%s3442 + $0x28] sm:$0xf]
      %v3454 = vld [vmem:[%s3442 + $0x2c] sm:$0xf]
      %v3455 = vld [vmem:[%s3442 + $0x30] sm:$0xf]
      %v3456 = vld [vmem:[%s3442 + $0x34] sm:$0xf]
      %v3457 = vld [vmem:[%s3442 + $0x38] sm:$0xf]
      %v3458 = vld [vmem:[%s3442 + $0x3c] sm:$0xf]
      %v3459 = vld [vmem:[%s3442 + $0x40] sm:$0xf]
      %v3460 = vld [vmem:[%s3442 + $0x44] sm:$0xf]
      %v3461 = vld [vmem:[%s3442 + $0x48] sm:$0xf]
      %v3462 = vld [vmem:[%s3442 + $0x4c] sm:$0xf]
      %v3463 = vld [vmem:[%s3442 + $0x50] sm:$0xf]
      %v3464 = vld [vmem:[%s3442 + $0x54] sm:$0xf]
      %v3465 = vld [vmem:[%s3442 + $0x58] sm:$0xf]
      %v3466 = vld [vmem:[%s3442 + $0x5c] sm:$0xf]
      %v3467 = vld [vmem:[%s3442 + $0x60] sm:$0xf]
      %v3468 = vld [vmem:[%s3442 + $0x64] sm:$0xf]
      %v3469 = vld [vmem:[%s3442 + $0x68] sm:$0xf]
      %v3470 = vld [vmem:[%s3442 + $0x6c] sm:$0xf]
      %v3471 = vld [vmem:[%s3442 + $0x70] sm:$0xf]
      %v3472 = vld [vmem:[%s3442 + $0x74] sm:$0xf]
      %v3473 = vld [vmem:[%s3442 + $0x78] sm:$0xf]
      %v3474 = vld [vmem:[%s3442 + $0x7c] sm:$0xf]
      %v3475 = vld [vmem:[%s3442 + $0x80] sm:$0xf]
      %v3476 = vld [vmem:[%s3442 + $0x84] sm:$0xf]
      %v3477 = vld [vmem:[%s3442 + $0x88] sm:$0xf]
      %v3478 = vld [vmem:[%s3442 + $0x8c] sm:$0xf]
      %v3479 = vld [vmem:[%s3442 + $0x90] sm:$0xf]
      %v3480 = vld [vmem:[%s3442 + $0x94] sm:$0xf]
      %v3481 = vld [vmem:[%s3442 + $0x98] sm:$0xf]
      %v3482 = vld [vmem:[%s3442 + $0x9c] sm:$0xf]
      %v3483 = vld [vmem:[%s3442 + $0xa0] sm:$0xf]
      %v3484 = vld [vmem:[%s3442 + $0xa4] sm:$0xf]
      %v3485 = vld [vmem:[%s3442 + $0xa8] sm:$0xf]
      %v3486 = vld [vmem:[%s3442 + $0xac] sm:$0xf]
      %v3487 = vld [vmem:[%s3442 + $0xb0] sm:$0xf]
      %v3488 = vld [vmem:[%s3442 + $0xb4] sm:$0xf]
      %v3489 = vld [vmem:[%s3442 + $0xb8] sm:$0xf]
      %v3490 = vld [vmem:[%s3442 + $0xbc] sm:$0xf]
      %v3491 = vld [vmem:[%s3442 + $0xc0] sm:$0xf]
      %v3492 = vld [vmem:[%s3442 + $0xc4] sm:$0xf]
      %v3493 = vld [vmem:[%s3442 + $0xc8] sm:$0xf]
      %v3494 = vld [vmem:[%s3442 + $0xcc] sm:$0xf]
      %v3495 = vld [vmem:[%s3442 + $0xd0] sm:$0xf]
      %v3496 = vld [vmem:[%s3442 + $0xd4] sm:$0xf]
      %v3497 = vld [vmem:[%s3442 + $0xd8] sm:$0xf]
      %v3498 = vld [vmem:[%s3442 + $0xdc] sm:$0xf]
      %v3499 = vld [vmem:[%s3442 + $0xe0] sm:$0xf]
      %v3500 = vld [vmem:[%s3442 + $0xe4] sm:$0xf]
      %v3501 = vld [vmem:[%s3442 + $0xe8] sm:$0xf]
      %v3502 = vld [vmem:[%s3442 + $0xec] sm:$0xf]
      %v3503 = vld [vmem:[%s3442 + $0xf0] sm:$0xf]
      %v3504 = vld [vmem:[%s3442 + $0xf4] sm:$0xf]
      %v3505 = vld [vmem:[%s3442 + $0xf8] sm:$0xf]
      %v3506 = vld [vmem:[%s3442 + $0xfc] sm:$0xf]
      %v3571 = vunpack.c.l.b16 %v3443
      %v3572 = vunpack.c.l.b16 %v3444
      %v3573 = vunpack.c.l.b16 %v3445
      %v3574 = vunpack.c.l.b16 %v3446
      %v3575 = vunpack.c.l.b16 %v3447
      %v3576 = vunpack.c.l.b16 %v3448
      %v3577 = vunpack.c.l.b16 %v3449
      %v3578 = vunpack.c.l.b16 %v3450
      %v3579 = vunpack.c.l.b16 %v3451
      %v3580 = vunpack.c.l.b16 %v3452
      %v3581 = vunpack.c.l.b16 %v3453
      %v3582 = vunpack.c.l.b16 %v3454
      %v3583 = vunpack.c.l.b16 %v3455
      %v3584 = vunpack.c.l.b16 %v3456
      %v3585 = vunpack.c.l.b16 %v3457
      %v3586 = vunpack.c.l.b16 %v3458
      %v3587 = vunpack.c.l.b16 %v3459
      %v3588 = vunpack.c.l.b16 %v3460
      %v3589 = vunpack.c.l.b16 %v3461
      %v3590 = vunpack.c.l.b16 %v3462
      %v3591 = vunpack.c.l.b16 %v3463
      %v3592 = vunpack.c.l.b16 %v3464
      %v3593 = vunpack.c.l.b16 %v3465
      %v3594 = vunpack.c.l.b16 %v3466
      %v3595 = vunpack.c.l.b16 %v3467
      %v3596 = vunpack.c.l.b16 %v3468
      %v3597 = vunpack.c.l.b16 %v3469
      %v3598 = vunpack.c.l.b16 %v3470
      %v3599 = vunpack.c.l.b16 %v3471
      %v3600 = vunpack.c.l.b16 %v3472
      %v3601 = vunpack.c.l.b16 %v3473
      %v3602 = vunpack.c.l.b16 %v3474
      %v3603 = vunpack.c.l.b16 %v3475
      %v3604 = vunpack.c.l.b16 %v3476
      %v3605 = vunpack.c.l.b16 %v3477
      %v3606 = vunpack.c.l.b16 %v3478
      %v3607 = vunpack.c.l.b16 %v3479
      %v3608 = vunpack.c.l.b16 %v3480
      %v3609 = vunpack.c.l.b16 %v3481
      %v3610 = vunpack.c.l.b16 %v3482
      %v3611 = vunpack.c.l.b16 %v3483
      %v3612 = vunpack.c.l.b16 %v3484
      %v3613 = vunpack.c.l.b16 %v3485
      %v3614 = vunpack.c.l.b16 %v3486
      %v3615 = vunpack.c.l.b16 %v3487
      %v3616 = vunpack.c.l.b16 %v3488
      %v3617 = vunpack.c.l.b16 %v3489
      %v3618 = vunpack.c.l.b16 %v3490
      %v3619 = vunpack.c.l.b16 %v3491
      %v3620 = vunpack.c.l.b16 %v3492
      %v3621 = vunpack.c.l.b16 %v3493
      %v3622 = vunpack.c.l.b16 %v3494
      %v3623 = vunpack.c.l.b16 %v3495
      %v3624 = vunpack.c.l.b16 %v3496
      %v3625 = vunpack.c.l.b16 %v3497
      %v3626 = vunpack.c.l.b16 %v3498
      %v3627 = vunpack.c.l.b16 %v3499
      %v3628 = vunpack.c.l.b16 %v3500
      %v3629 = vunpack.c.l.b16 %v3501
      %v3630 = vunpack.c.l.b16 %v3502
      %v3631 = vunpack.c.l.b16 %v3503
      %v3632 = vunpack.c.l.b16 %v3504
      %v3633 = vunpack.c.l.b16 %v3505
      %v3634 = vunpack.c.l.b16 %v3506
      %v3635 = vpack.c.b16 %v3572, %v3571
      %v3636 = vpack.c.b16 %v3574, %v3573
      %v3637 = vpack.c.b16 %v3576, %v3575
      %v3638 = vpack.c.b16 %v3578, %v3577
      %v3639 = vpack.c.b16 %v3580, %v3579
      %v3640 = vpack.c.b16 %v3582, %v3581
      %v3641 = vpack.c.b16 %v3584, %v3583
      %v3642 = vpack.c.b16 %v3586, %v3585
      %v3643 = vpack.c.b16 %v3588, %v3587
      %v3644 = vpack.c.b16 %v3590, %v3589
      %v3645 = vpack.c.b16 %v3592, %v3591
      %v3646 = vpack.c.b16 %v3594, %v3593
      %v3647 = vpack.c.b16 %v3596, %v3595
      %v3648 = vpack.c.b16 %v3598, %v3597
      %v3649 = vpack.c.b16 %v3600, %v3599
      %v3650 = vpack.c.b16 %v3602, %v3601
      %v3651 = vpack.c.b16 %v3604, %v3603
      %v3652 = vpack.c.b16 %v3606, %v3605
      %v3653 = vpack.c.b16 %v3608, %v3607
      %v3654 = vpack.c.b16 %v3610, %v3609
      %v3655 = vpack.c.b16 %v3612, %v3611
      %v3656 = vpack.c.b16 %v3614, %v3613
      %v3657 = vpack.c.b16 %v3616, %v3615
      %v3658 = vpack.c.b16 %v3618, %v3617
      %v3659 = vpack.c.b16 %v3620, %v3619
      %v3660 = vpack.c.b16 %v3622, %v3621
      %v3661 = vpack.c.b16 %v3624, %v3623
      %v3662 = vpack.c.b16 %v3626, %v3625
      %v3663 = vpack.c.b16 %v3628, %v3627
      %v3664 = vpack.c.b16 %v3630, %v3629
      %v3665 = vpack.c.b16 %v3632, %v3631
      %v3666 = vpack.c.b16 %v3634, %v3633
      %3699 = vmatprep.subr.bf16.mxu0 0
      %3700 = vmatpush1.bf16.msra.mxu0 %v3635
      %3701 = vmatprep.subr.bf16.mxu0 0
      %3702 = vmatpush1.bf16.msra.mxu0 %v3636
      %3703 = vmatprep.subr.bf16.mxu0 0
      %3704 = vmatpush1.bf16.msra.mxu0 %v3637
      %3705 = vmatprep.subr.bf16.mxu0 0
      %3706 = vmatpush1.bf16.msra.mxu0 %v3638
      %3707 = vmatprep.subr.bf16.mxu0 0
      %3708 = vmatpush1.bf16.msra.mxu0 %v3639
      %3709 = vmatprep.subr.bf16.mxu0 0
      %3710 = vmatpush1.bf16.msra.mxu0 %v3640
      %3711 = vmatprep.subr.bf16.mxu0 0
      %3712 = vmatpush1.bf16.msra.mxu0 %v3641
      %3713 = vmatprep.subr.bf16.mxu0 0
      %3714 = vmatpush1.bf16.msra.mxu0 %v3642
      %3715 = vmatprep.subr.bf16.mxu0 0
      %3716 = vmatpush1.bf16.msra.mxu0 %v3643
      %3717 = vmatprep.subr.bf16.mxu0 0
      %3718 = vmatpush1.bf16.msra.mxu0 %v3644
      %3719 = vmatprep.subr.bf16.mxu0 0
      %3720 = vmatpush1.bf16.msra.mxu0 %v3645
      %3721 = vmatprep.subr.bf16.mxu0 0
      %3722 = vmatpush1.bf16.msra.mxu0 %v3646
      %3723 = vmatprep.subr.bf16.mxu0 0
      %3724 = vmatpush1.bf16.msra.mxu0 %v3647
      %3725 = vmatprep.subr.bf16.mxu0 0
      %3726 = vmatpush1.bf16.msra.mxu0 %v3648
      %3727 = vmatprep.subr.bf16.mxu0 0
      %3728 = vmatpush1.bf16.msra.mxu0 %v3649
      %3729 = vmatprep.subr.bf16.mxu0 0
      %3730 = vmatpush1.bf16.msra.mxu0 %v3650
      %3731 = vmatprep.mubr.bf16.mxu0 %v716
      %3732 = vmatmul.mubr.bf16.gmra.mrb[0].mxu0 %v715
      %v3733 = vpop.f32.mrb[0].mxu0
      %v3734 = vadd.f32 0.0, %v3733
      %v3735 = vpop.f32.mrb[0].mxu0
      %v3736 = vpop.f32.mrb[0].mxu0
      %v3737 = vadd.f32 0.0, %v3736
      %v3738 = vpop.f32.mrb[0].mxu0
      %3739 = vdwg.mxu0
      %3740 = vmatprep.subr.bf16.mxu0 0
      %3741 = vmatpush1.bf16.msra.mxu0 %v3651
      %3742 = vmatprep.subr.bf16.mxu0 0
      %3743 = vmatpush1.bf16.msra.mxu0 %v3652
      %3744 = vmatprep.subr.bf16.mxu0 0
      %3745 = vmatpush1.bf16.msra.mxu0 %v3653
      %3746 = vmatprep.subr.bf16.mxu0 0
      %3747 = vmatpush1.bf16.msra.mxu0 %v3654
      %3748 = vmatprep.subr.bf16.mxu0 0
      %3749 = vmatpush1.bf16.msra.mxu0 %v3655
      %3750 = vmatprep.subr.bf16.mxu0 0
      %3751 = vmatpush1.bf16.msra.mxu0 %v3656
      %3752 = vmatprep.subr.bf16.mxu0 0
      %3753 = vmatpush1.bf16.msra.mxu0 %v3657
      %3754 = vmatprep.subr.bf16.mxu0 0
      %3755 = vmatpush1.bf16.msra.mxu0 %v3658
      %3756 = vmatprep.subr.bf16.mxu0 0
      %3757 = vmatpush1.bf16.msra.mxu0 %v3659
      %3758 = vmatprep.subr.bf16.mxu0 0
      %3759 = vmatpush1.bf16.msra.mxu0 %v3660
      %3760 = vmatprep.subr.bf16.mxu0 0
      %3761 = vmatpush1.bf16.msra.mxu0 %v3661
      %3762 = vmatprep.subr.bf16.mxu0 0
      %3763 = vmatpush1.bf16.msra.mxu0 %v3662
      %3764 = vmatprep.subr.bf16.mxu0 0
      %3765 = vmatpush1.bf16.msra.mxu0 %v3663
      %3766 = vmatprep.subr.bf16.mxu0 0
      %3767 = vmatpush1.bf16.msra.mxu0 %v3664
      %3768 = vmatprep.subr.bf16.mxu0 0
      %3769 = vmatpush1.bf16.msra.mxu0 %v3665
      %3770 = vmatprep.subr.bf16.mxu0 0
      %3771 = vmatpush1.bf16.msra.mxu0 %v3666
      %3772 = vmatprep.mubr.bf16.mxu0 %v718
      %3773 = vmatmul.mubr.bf16.gmra.mrb[0].mxu0 %v717
      %v3774 = vpop.f32.mrb[0].mxu0
      %v3775 = vadd.f32 %v3734, %v3774
      %v3776 = vpop.f32.mrb[0].mxu0
      %v3777 = vpop.f32.mrb[0].mxu0
      %v3778 = vadd.f32 %v3737, %v3777
      %v3779 = vpop.f32.mrb[0].mxu0
      %3780 = vdwg.mxu0
      %v3781 = vadd.f32 %v3440, %v3775
      %v3782 = vadd.f32 %v3441, %v3778
      %v3783 = vld [vmem:[%s3] sm:$0x1]
      %v3785 = vlaneseq
      %v3786 = vshrl.u32 %v3785, 7
      %v3787 = vsub.s32 0, %v3786
      %v3788 = vrot.slane %v3783, %v3787
      %v3790 = vadd.f32 %v3781, %v3788
      %v3791 = vadd.f32 %v3782, %v3788
      %v3792 = vmax.f32 %v3790, 0.0
      %v3793 = vmax.f32 %v3791, 0.0
      %v3794 = vld [vmem:[%s4] sm:$0xff]
      %v3795 = vld [vmem:[%s4 + $0x8] sm:$0xff]
      %v3796 = vmul.f32 %v3792, %v3794
      %v3797 = vmul.f32 %v3793, %v3795
      %v3798 = vsel %vm409, %v3796, 0.0
      %3799 = vadd.xlane.f32.xlu0 %v3798
      %v3800 = vpop.xlane.xlu0 %3799
      %v3801 = vsel %vm409, %v3797, 0.0
      %3802 = vadd.xlane.f32.xlu0 %v3801
      %v3803 = vpop.xlane.xlu0 %3802
      %v3804 = vadd.f32 %v3800, %v3803
      %v3805 = vrot.slane %v3804, 4
      %v3806 = vadd.f32 %v3804, %v3805
      %v3807 = vrot.slane %v3806, 2
      %v3808 = vadd.f32 %v3806, %v3807
      %v3809 = vrot.slane %v3808, 1
      %v3810 = vadd.f32 %v3808, %v3809
      %s3811 = sld [smem:[#allocation2]]
      %v3812 = vstv %s3811
      %v3813 = vadd.f32 %v3810, %v3812
      %v3814 = vxor.u32 %v3813, 2147483648
      %v3815 = vmul.f32 %v3814, 1.442695
      %v3816 = vpow.pop %v3815
      %v3817 = vadd.f32 %v3816, 1.0
      %v3818 = vrcp.pop %v3817
      %v3819 = vmul.f32 1.0, %v3818
      %3820 = vst [vmem:[%s248] sm:$0x1] %v3819
      %p3821 = scmp.lt.s32.totalorder %s18, 1
      %s3822 = scalar_select %p3821, %s18, 1
      %s3823 = scalar_lea.vmem %s6, %s3822
      // Predicated region
      $region45: #{res18crop_head.1} parent=43 // pred_check
        %p3824 = pneg %p167
      $region46: #{res18crop_head.1} parent=43 // pred_check_branch
        %3826 = sbr.rel (%p3824) target = $region48
      $region47: #{res18crop_head.1} parent=43 // pred_region
        _
      $region48: #{res18crop_head.1} parent=43 // pred_fallthru
        _
    $region44: #{res18crop_head.1} parent=5 // pred_fallthru
      _
    %p3827 = scmp.le.s32.totalorder 2, %s13
    // Predicated region
    $region49: #{res18crop_head.1} parent=5 // pred_check
      %p3828 = pneg %p3827
    $region50: #{res18crop_head.1} parent=5 // pred_check_branch
      %3830 = sbr.rel (%p3828) target = $region52
    $region51: #{res18crop_head.1} parent=5 // pred_region
      %s3831 = ssub.s32 %s13, 2
      // Predicated region
      $region53: #{res18crop_head.1} parent=51 // pred_check
        %p3832 = pneg %p173
      $region54: #{res18crop_head.1} parent=51 // pred_check_branch
        %3834 = sbr.rel (%p3832) target = $region56
      $region55: #{res18crop_head.1} parent=51 // pred_region
        %p3835 = scmp.lt.s32.totalorder %s19, 1
        %s3836 = scalar_select %p3835, %s19, 1
        %s3837 = scalar_lea.vmem %s6, %s3836
      $region56: #{res18crop_head.1} parent=51 // pred_fallthru
        _
    $region52: #{res18crop_head.1} parent=5 // pred_fallthru
      _
  $region6: #{res18crop_head.1} parent=0 // loop_footer
    %s17 = sadd.s32 1, %s13
  $region7: #{res18crop_head.1} parent=0 // loop_footer_branch
    %12 = sbr.rel target = $region3
  $region8: #{res18crop_head.1} parent=0 // loop_exit
    _

</llo_original>
